<compile_context>
chip_gen: v6e
topology: v6e:2x2x1
jax: 0.10.0
libtpu: 0.0.40
codegen_flags: <defaults>
</compile_context>

<pallas_src>
import numpy as np
import jax
import jax.numpy as jnp
from jax.experimental import pallas as pl
from jax.experimental.pallas import tpu as pltpu

# ----------------------------- static dimensions -----------------------------
TB = 32           # images per grid step (multiple of 8 sublanes)
KS = 5            # conv kernel size
H0 = W0 = 32      # input spatial size
H1 = W1 = 28      # conv1 output
P1 = 14           # pool1 output
C1 = 6
H2 = W2 = 10      # conv2 output
P2 = 5            # pool2 output
C2 = 16
NCLS = 10
LANES = 128
EPS = 1e-5


# ---------------------- static (numpy) structure tensors ----------------------
def _band_structure(w_in, half_out):
    """T[w, g, t, dj] = 1 iff w == 2*t + g + dj  (even/odd pooled columns)."""
    t = np.zeros((w_in, 2, half_out, KS), np.float32)
    for g in range(2):
        for tt in range(half_out):
            for dj in range(KS):
                w = 2 * tt + g + dj
                if w < w_in:
                    t[w, g, tt, dj] = 1.0
    return t


_T1 = _band_structure(W0, P1)   # (32, 2, 14, 5)
_T2 = _band_structure(P1, P2)   # (14, 2, 5, 5)


# --------------------------------- the kernel ---------------------------------
def _ann_forward_kernel(
    x_ref,                         # (H0*TB, W0) bf16, rows = (h, b) of this tile
    w1_ref, b1_ref,                # (KS*W0, 256) bf16, (1, 256) f32
    w2_ref, b2_ref,                # (KS*128, 256) bf16, (1, 256) f32
    wf1_ref, bf1_ref,              # (P2*128, 128) bf16, (1, 128) f32
    wf2_ref, bf2_ref,              # (128, 128) bf16, (1, 128) f32
    wf3_ref, bf3_ref,              # (128, 128) bf16, (1, 128) f32
    out_ref,                       # (TB, 128) f32
):
    f32, bf16 = jnp.float32, jnp.bfloat16
    x = x_ref[...]                                                  # (H0*TB, 32)

    # ---- layer 1: conv1 + BN + ReLU + 2x2 maxpool as one banded GEMM ----------
    # h-major rows: a shift by di conv rows is a contiguous, sublane-aligned slice.
    lhs1 = jnp.concatenate(
        [x[di * TB:(di + H1) * TB, :] for di in range(KS)], axis=1)  # (H1*TB,160)
    z1 = jnp.dot(lhs1, w1_ref[...], preferred_element_type=f32)      # (H1*TB,256)
    z1 = jnp.maximum(z1 + b1_ref[...], 0.0)
    pw1 = jnp.maximum(z1[:, :LANES], z1[:, LANES:])        # width pool (H1*TB,128)
    a1 = jnp.concatenate(                                  # height pool (P1*TB,128)
        [jnp.maximum(pw1[(2 * t) * TB:(2 * t + 1) * TB, :],
                     pw1[(2 * t + 1) * TB:(2 * t + 2) * TB, :])
         for t in range(P1)], axis=0).astype(bf16)

    # ---- layer 2 ---------------------------------------------------------------
    lhs2 = jnp.concatenate(
        [a1[di * TB:(di + H2) * TB, :] for di in range(KS)], axis=1)  # (H2*TB,640)
    z2 = jnp.dot(lhs2, w2_ref[...], preferred_element_type=f32)       # (H2*TB,256)
    z2 = jnp.maximum(z2 + b2_ref[...], 0.0)
    pw2 = jnp.maximum(z2[:, :LANES], z2[:, LANES:])
    a2 = jnp.concatenate(
        [jnp.maximum(pw2[(2 * t) * TB:(2 * t + 1) * TB, :],
                     pw2[(2 * t + 1) * TB:(2 * t + 2) * TB, :])
         for t in range(P2)], axis=0).astype(bf16)                    # (P2*TB,128)

    # ---- FC head: 400 -> 120 -> 84 -> 10 (flatten folded into wf1 rows) --------
    fcin = jnp.concatenate(
        [a2[h * TB:(h + 1) * TB, :] for h in range(P2)], axis=1)      # (TB, 640)
    h1 = jnp.dot(fcin, wf1_ref[...], preferred_element_type=f32)
    h1 = jnp.maximum(h1 + bf1_ref[...], 0.0).astype(bf16)
    h2 = jnp.dot(h1, wf2_ref[...], preferred_element_type=f32)
    h2 = jnp.maximum(h2 + bf2_ref[...], 0.0).astype(bf16)
    out_ref[...] = (jnp.dot(h2, wf3_ref[...], preferred_element_type=f32)
                    + bf3_ref[...])


# --------------------------------- wrapper ------------------------------------
def _fold_bn(bias, gamma, beta, mean, var):
    scale = gamma * jax.lax.rsqrt(var + EPS)
    shift = beta + (bias - mean) * scale
    return scale, shift


def _pad_last(a, n):
    pad = [(0, 0)] * (a.ndim - 1) + [(0, n - a.shape[-1])]
    return jnp.pad(a, pad)


@jax.jit
def ann_classifier_forward(x_nchw, p):
    """Forward pass of ANNClassifier. x_nchw: (N, 1, 32, 32) float32 -> (N, 10)."""
    n = x_nchw.shape[0]
    n_pad = ((n + TB - 1) // TB) * TB
    n_tiles = n_pad // TB

    # ---- input: h-major (image-row major) layout per batch tile -----------------
    x = x_nchw[:, 0, :, :].astype(jnp.float32)
    x = jnp.pad(x, ((0, n_pad - n), (0, 0), (0, 0)))
    x = x.reshape(n_tiles, TB, H0, W0).transpose(0, 2, 1, 3)      # (tiles,H0,TB,W0)
    x2d = x.reshape(n_tiles * H0 * TB, W0).astype(jnp.bfloat16)

    # ---- conv1 (+BN folded) as banded GEMM, even/odd pool columns pre-permuted --
    s1, sh1 = _fold_bn(p["b_conv1"], p["bn1_gamma"], p["bn1_beta"],
                       p["bn1_mean"], p["bn1_var"])
    w1_eff = p["w_conv1"][:, 0, :, :] * s1[:, None, None]                 # (6,5,5)
    band1 = jnp.einsum("wgtj,cij->iwgct", _T1, w1_eff)          # (5,32,2,6,14)
    band1 = band1.reshape(KS, W0, 2, C1 * P1)
    w1 = _pad_last(band1, LANES).reshape(KS * W0, 2 * LANES).astype(jnp.bfloat16)
    b1 = _pad_last(jnp.broadcast_to(sh1[None, :, None],
                                    (2, C1, P1)).reshape(2, C1 * P1),
                   LANES).reshape(1, 2 * LANES)

    # ---- conv2 -------------------------------------------------------------------
    s2, sh2 = _fold_bn(p["b_conv2"], p["bn2_gamma"], p["bn2_beta"],
                       p["bn2_mean"], p["bn2_var"])
    w2_eff = p["w_conv2"] * s2[:, None, None, None]                       # (16,6,5,5)
    band2 = jnp.einsum("wgtj,kcij->icwgkt", _T2, w2_eff)        # (5,6,14,2,16,5)
    band2 = band2.reshape(KS, C1 * P1, 2, C2 * P2)
    band2 = _pad_last(band2, LANES)                              # pad cols 80 -> 128
    band2 = jnp.pad(band2, ((0, 0), (0, LANES - C1 * P1), (0, 0), (0, 0)))
    w2 = band2.reshape(KS * LANES, 2 * LANES).astype(jnp.bfloat16)
    b2 = _pad_last(jnp.broadcast_to(sh2[None, :, None],
                                    (2, C2, P2)).reshape(2, C2 * P2),
                   LANES).reshape(1, 2 * LANES)

    # ---- FC weights: fold PyTorch (c,h,w) flatten order into wf1's row layout ----
    wf1 = p["w_fc"].reshape(120, C2, P2, P2).transpose(2, 1, 3, 0)  # (h,c2,pw,k)
    wf1 = wf1.reshape(P2, C2 * P2, 120)
    wf1 = jnp.pad(wf1, ((0, 0), (0, LANES - C2 * P2), (0, LANES - 120)))
    wf1 = wf1.reshape(P2 * LANES, LANES).astype(jnp.bfloat16)       # (640, 128)
    bf1 = _pad_last(p["b_fc"].reshape(1, -1), LANES)
    wf2 = jnp.pad(p["w_fc1"].T,
                  ((0, LANES - 120), (0, LANES - 84))).astype(jnp.bfloat16)
    bf2 = _pad_last(p["b_fc1"].reshape(1, -1), LANES)
    wf3 = jnp.pad(p["w_fc2"].T,
                  ((0, LANES - 84), (0, LANES - NCLS))).astype(jnp.bfloat16)
    bf3 = _pad_last(p["b_fc2"].reshape(1, -1), LANES)

    operands = (x2d, w1, b1, w2, b2, wf1, bf1, wf2, bf2, wf3, bf3)

    def _const(arr):
        return pl.BlockSpec(arr.shape, lambda i: (0, 0))

    in_specs = ([pl.BlockSpec((H0 * TB, W0), lambda i: (i, 0))]
                + [_const(a) for a in operands[1:]])

    flops = 2 * n_tiles * (
        H1 * TB * (KS * W0) * (2 * LANES)
        + H2 * TB * (KS * LANES) * (2 * LANES)
        + TB * (P2 * LANES * LANES + LANES * LANES + LANES * LANES))
    bytes_accessed = int(
        n_pad * H0 * W0 * 2 + n_pad * LANES * 4
        + sum(int(np.prod(o.shape)) * o.dtype.itemsize for o in operands[1:]))

    out = pl.pallas_call(
        _ann_forward_kernel,
        out_shape=jax.ShapeDtypeStruct((n_pad, LANES), jnp.float32),
        grid=(n_tiles,),
        in_specs=in_specs,
        out_specs=pl.BlockSpec((TB, LANES), lambda i: (i, 0)),
        compiler_params=pltpu.CompilerParams(
            dimension_semantics=("parallel",)),
        cost_estimate=pl.CostEstimate(flops=int(flops), transcendentals=0,
                                      bytes_accessed=bytes_accessed),
    )(*operands)
    return out[:n, :NCLS]


# ------------------------------ params & reference ----------------------------
def init_params(key):
    ks = jax.random.split(key, 12)
    p = {}
    p["w_conv1"] = jax.random.normal(ks[0], (6, 1, 5, 5), jnp.float32) * 0.1
    p["b_conv1"] = jax.random.normal(ks[1], (6,), jnp.float32) * 0.1
    p["bn1_gamma"] = 1.0 + 0.1 * jax.random.normal(ks[2], (6,), jnp.float32)
    p["bn1_beta"] = 0.1 * jax.random.normal(ks[3], (6,), jnp.float32)
    p["bn1_mean"] = 0.1 * jax.random.normal(ks[4], (6,), jnp.float32)
    p["bn1_var"] = jnp.abs(1.0 + 0.1 * jax.random.normal(ks[5], (6,), jnp.float32))
    p["w_conv2"] = jax.random.normal(ks[6], (16, 6, 5, 5), jnp.float32) * 0.1
    p["b_conv2"] = jax.random.normal(ks[7], (16,), jnp.float32) * 0.1
    p["bn2_gamma"] = 1.0 + 0.1 * jax.random.normal(ks[8], (16,), jnp.float32)
    p["bn2_beta"] = 0.1 * jax.random.normal(ks[9], (16,), jnp.float32)
    p["bn2_mean"] = 0.1 * jax.random.normal(ks[10], (16,), jnp.float32)
    p["bn2_var"] = jnp.abs(1.0 + 0.1 * jax.random.normal(ks[11], (16,), jnp.float32))
    kf = jax.random.split(jax.random.fold_in(key, 777), 6)
    p["w_fc"] = jax.random.normal(kf[0], (120, 400), jnp.float32) * 0.05
    p["b_fc"] = jax.random.normal(kf[1], (120,), jnp.float32) * 0.05
    p["w_fc1"] = jax.random.normal(kf[2], (84, 120), jnp.float32) * 0.05
    p["b_fc1"] = jax.random.normal(kf[3], (84,), jnp.float32) * 0.05
    p["w_fc2"] = jax.random.normal(kf[4], (10, 84), jnp.float32) * 0.05
    p["b_fc2"] = jax.random.normal(kf[5], (10,), jnp.float32) * 0.05
    return p


def _reference_forward(x, p):
    """Pure-JAX (f32) reference matching the PyTorch forward (eval-mode BN)."""
    def conv(t, w, b):
        y = jax.lax.conv_general_dilated(
            t, w, window_strides=(1, 1), padding="VALID",
            dimension_numbers=("NCHW", "OIHW", "NCHW"))
        return y + b[None, :, None, None]

    def bn(t, g, bta, m, v):
        inv = g / jnp.sqrt(v + EPS)
        return (t - m[None, :, None, None]) * inv[None, :, None, None] \
            + bta[None, :, None, None]

    def pool(t):
        n_, c_, h_, w_ = t.shape
        return t.reshape(n_, c_, h_ // 2, 2, w_ // 2, 2).max(axis=(3, 5))

    y = pool(jnp.maximum(bn(conv(x, p["w_conv1"], p["b_conv1"]), p["bn1_gamma"],
                            p["bn1_beta"], p["bn1_mean"], p["bn1_var"]), 0.0))
    y = pool(jnp.maximum(bn(conv(y, p["w_conv2"], p["b_conv2"]), p["bn2_gamma"],
                            p["bn2_beta"], p["bn2_mean"], p["bn2_var"]), 0.0))
    flat = y.reshape(y.shape[0], -1)
    h = jnp.maximum(flat @ p["w_fc"].T + p["b_fc"], 0.0)
    h = jnp.maximum(h @ p["w_fc1"].T + p["b_fc1"], 0.0)
    return h @ p["w_fc2"].T + p["b_fc2"]


# TODO(synk): training utilities of the module (CrossEntropyLoss, Adam, data
# loaders, plotting) are not part of forward() and are not implemented here.

if __name__ == "__main__":
    key = jax.random.PRNGKey(0)
    k_x, k_p = jax.random.split(key)
    # MNIST resized to 32x32, single channel, batch of 2 — NCHW like PyTorch.
    x = jax.random.normal(k_x, (2, 1, 32, 32), jnp.float32)
    params = init_params(k_p)

    out = jax.block_until_ready(ann_classifier_forward(x, params))
    assert out.shape == (2, 10) and out.dtype == jnp.float32

    # Self-check against a pure-JAX f32 reference (tolerance covers bf16 matmuls).
    ref = _reference_forward(x, params)
    err = float(jnp.max(jnp.abs(out - ref)))
    assert err < 5e-2, f"max abs err {err}"

    print("KERNEL_OK")
</pallas_src>

<mosaic_0001>
module attributes {stable_mosaic.version = 11 : i64} {
  func.func @_ann_forward_kernel(%arg0: i32, %arg1: memref<1024x32xbf16, #tpu.memory_space<vmem>>, %arg2: memref<160x256xbf16, #tpu.memory_space<vmem>>, %arg3: memref<1x256xf32, #tpu.memory_space<vmem>>, %arg4: memref<640x256xbf16, #tpu.memory_space<vmem>>, %arg5: memref<1x256xf32, #tpu.memory_space<vmem>>, %arg6: memref<640x128xbf16, #tpu.memory_space<vmem>>, %arg7: memref<1x128xf32, #tpu.memory_space<vmem>>, %arg8: memref<128x128xbf16, #tpu.memory_space<vmem>>, %arg9: memref<1x128xf32, #tpu.memory_space<vmem>>, %arg10: memref<128x128xbf16, #tpu.memory_space<vmem>>, %arg11: memref<1x128xf32, #tpu.memory_space<vmem>>, %arg12: memref<32x128xf32, #tpu.memory_space<vmem>>) attributes {dimension_semantics = [#tpu.dimension_semantics<parallel>], iteration_bounds = array<i64: 1>, scalar_prefetch = 0 : i64, scratch_operands = 0 : i64, tpu.core_type = #tpu.core_type<tc>, window_params = [{transform_indices = @transform_0, window_bounds = array<i64: 1024, 32>}, {pipeline_mode = #tpu.pipeline_mode<synchronous>, transform_indices = @transform_1, window_bounds = array<i64: 160, 256>}, {pipeline_mode = #tpu.pipeline_mode<synchronous>, transform_indices = @transform_2, window_bounds = array<i64: 1, 256>}, {pipeline_mode = #tpu.pipeline_mode<synchronous>, transform_indices = @transform_3, window_bounds = array<i64: 640, 256>}, {pipeline_mode = #tpu.pipeline_mode<synchronous>, transform_indices = @transform_4, window_bounds = array<i64: 1, 256>}, {pipeline_mode = #tpu.pipeline_mode<synchronous>, transform_indices = @transform_5, window_bounds = array<i64: 640, 128>}, {pipeline_mode = #tpu.pipeline_mode<synchronous>, transform_indices = @transform_6, window_bounds = array<i64: 1, 128>}, {pipeline_mode = #tpu.pipeline_mode<synchronous>, transform_indices = @transform_7, window_bounds = array<i64: 128, 128>}, {pipeline_mode = #tpu.pipeline_mode<synchronous>, transform_indices = @transform_8, window_bounds = array<i64: 1, 128>}, {pipeline_mode = #tpu.pipeline_mode<synchronous>, transform_indices = @transform_9, window_bounds = array<i64: 128, 128>}, {pipeline_mode = #tpu.pipeline_mode<synchronous>, transform_indices = @transform_10, window_bounds = array<i64: 1, 128>}, {transform_indices = @transform_11, window_bounds = array<i64: 32, 128>}]} {
    %c0 = arith.constant 0 : index
    %c0_0 = arith.constant 0 : index
    %0 = vector.load %arg1[%c0, %c0_0] : memref<1024x32xbf16, #tpu.memory_space<vmem>>, vector<1024x32xbf16>
    %1 = vector.extract_strided_slice %0 {offsets = [0, 0], sizes = [896, 32], strides = [1, 1]} : vector<1024x32xbf16> to vector<896x32xbf16>
    %2 = vector.extract_strided_slice %0 {offsets = [32, 0], sizes = [896, 32], strides = [1, 1]} : vector<1024x32xbf16> to vector<896x32xbf16>
    %3 = vector.extract_strided_slice %0 {offsets = [64, 0], sizes = [896, 32], strides = [1, 1]} : vector<1024x32xbf16> to vector<896x32xbf16>
    %4 = vector.extract_strided_slice %0 {offsets = [96, 0], sizes = [896, 32], strides = [1, 1]} : vector<1024x32xbf16> to vector<896x32xbf16>
    %5 = vector.extract_strided_slice %0 {offsets = [128, 0], sizes = [896, 32], strides = [1, 1]} : vector<1024x32xbf16> to vector<896x32xbf16>
    %6 = tpu.concatenate %1, %2, %3, %4, %5 in 1 : vector<896x32xbf16>, vector<896x32xbf16>, vector<896x32xbf16>, vector<896x32xbf16>, vector<896x32xbf16> -> vector<896x160xbf16>
    %c0_1 = arith.constant 0 : index
    %c0_2 = arith.constant 0 : index
    %7 = vector.load %arg2[%c0_1, %c0_2] : memref<160x256xbf16, #tpu.memory_space<vmem>>, vector<160x256xbf16>
    %cst = arith.constant dense<0.000000e+00> : vector<896x256xf32>
    %8 = tpu.matmul %6, %7, %cst {dimension_numbers = #tpu.dot_dimension_numbers<[1], [0], [0], [1], [0, 0, 1, 1], [], []>} : vector<896x160xbf16>, vector<160x256xbf16>, vector<896x256xf32> -> vector<896x256xf32>
    %c0_3 = arith.constant 0 : index
    %c0_4 = arith.constant 0 : index
    %9 = vector.load %arg3[%c0_3, %c0_4] : memref<1x256xf32, #tpu.memory_space<vmem>>, vector<1x256xf32>
    %10 = vector.broadcast %9 : vector<1x256xf32> to vector<896x256xf32>
    %11 = arith.addf %8, %10 : vector<896x256xf32>
    %cst_5 = arith.constant 0.000000e+00 : f32
    %12 = vector.broadcast %cst_5 : f32 to vector<896x256xf32>
    %13 = arith.maximumf %11, %12 : vector<896x256xf32>
    %14 = vector.extract_strided_slice %13 {offsets = [0, 0], sizes = [896, 128], strides = [1, 1]} : vector<896x256xf32> to vector<896x128xf32>
    %15 = vector.extract_strided_slice %13 {offsets = [0, 128], sizes = [896, 128], strides = [1, 1]} : vector<896x256xf32> to vector<896x128xf32>
    %16 = arith.maximumf %14, %15 : vector<896x128xf32>
    %17 = vector.extract_strided_slice %16 {offsets = [0, 0], sizes = [32, 128], strides = [1, 1]} : vector<896x128xf32> to vector<32x128xf32>
    %18 = vector.extract_strided_slice %16 {offsets = [32, 0], sizes = [32, 128], strides = [1, 1]} : vector<896x128xf32> to vector<32x128xf32>
    %19 = arith.maximumf %17, %18 : vector<32x128xf32>
    %20 = vector.extract_strided_slice %16 {offsets = [64, 0], sizes = [32, 128], strides = [1, 1]} : vector<896x128xf32> to vector<32x128xf32>
    %21 = vector.extract_strided_slice %16 {offsets = [96, 0], sizes = [32, 128], strides = [1, 1]} : vector<896x128xf32> to vector<32x128xf32>
    %22 = arith.maximumf %20, %21 : vector<32x128xf32>
    %23 = vector.extract_strided_slice %16 {offsets = [128, 0], sizes = [32, 128], strides = [1, 1]} : vector<896x128xf32> to vector<32x128xf32>
    %24 = vector.extract_strided_slice %16 {offsets = [160, 0], sizes = [32, 128], strides = [1, 1]} : vector<896x128xf32> to vector<32x128xf32>
    %25 = arith.maximumf %23, %24 : vector<32x128xf32>
    %26 = vector.extract_strided_slice %16 {offsets = [192, 0], sizes = [32, 128], strides = [1, 1]} : vector<896x128xf32> to vector<32x128xf32>
    %27 = vector.extract_strided_slice %16 {offsets = [224, 0], sizes = [32, 128], strides = [1, 1]} : vector<896x128xf32> to vector<32x128xf32>
    %28 = arith.maximumf %26, %27 : vector<32x128xf32>
    %29 = vector.extract_strided_slice %16 {offsets = [256, 0], sizes = [32, 128], strides = [1, 1]} : vector<896x128xf32> to vector<32x128xf32>
    %30 = vector.extract_strided_slice %16 {offsets = [288, 0], sizes = [32, 128], strides = [1, 1]} : vector<896x128xf32> to vector<32x128xf32>
    %31 = arith.maximumf %29, %30 : vector<32x128xf32>
    %32 = vector.extract_strided_slice %16 {offsets = [320, 0], sizes = [32, 128], strides = [1, 1]} : vector<896x128xf32> to vector<32x128xf32>
    %33 = vector.extract_strided_slice %16 {offsets = [352, 0], sizes = [32, 128], strides = [1, 1]} : vector<896x128xf32> to vector<32x128xf32>
    %34 = arith.maximumf %32, %33 : vector<32x128xf32>
    %35 = vector.extract_strided_slice %16 {offsets = [384, 0], sizes = [32, 128], strides = [1, 1]} : vector<896x128xf32> to vector<32x128xf32>
    %36 = vector.extract_strided_slice %16 {offsets = [416, 0], sizes = [32, 128], strides = [1, 1]} : vector<896x128xf32> to vector<32x128xf32>
    %37 = arith.maximumf %35, %36 : vector<32x128xf32>
    %38 = vector.extract_strided_slice %16 {offsets = [448, 0], sizes = [32, 128], strides = [1, 1]} : vector<896x128xf32> to vector<32x128xf32>
    %39 = vector.extract_strided_slice %16 {offsets = [480, 0], sizes = [32, 128], strides = [1, 1]} : vector<896x128xf32> to vector<32x128xf32>
    %40 = arith.maximumf %38, %39 : vector<32x128xf32>
    %41 = vector.extract_strided_slice %16 {offsets = [512, 0], sizes = [32, 128], strides = [1, 1]} : vector<896x128xf32> to vector<32x128xf32>
    %42 = vector.extract_strided_slice %16 {offsets = [544, 0], sizes = [32, 128], strides = [1, 1]} : vector<896x128xf32> to vector<32x128xf32>
    %43 = arith.maximumf %41, %42 : vector<32x128xf32>
    %44 = vector.extract_strided_slice %16 {offsets = [576, 0], sizes = [32, 128], strides = [1, 1]} : vector<896x128xf32> to vector<32x128xf32>
    %45 = vector.extract_strided_slice %16 {offsets = [608, 0], sizes = [32, 128], strides = [1, 1]} : vector<896x128xf32> to vector<32x128xf32>
    %46 = arith.maximumf %44, %45 : vector<32x128xf32>
    %47 = vector.extract_strided_slice %16 {offsets = [640, 0], sizes = [32, 128], strides = [1, 1]} : vector<896x128xf32> to vector<32x128xf32>
    %48 = vector.extract_strided_slice %16 {offsets = [672, 0], sizes = [32, 128], strides = [1, 1]} : vector<896x128xf32> to vector<32x128xf32>
    %49 = arith.maximumf %47, %48 : vector<32x128xf32>
    %50 = vector.extract_strided_slice %16 {offsets = [704, 0], sizes = [32, 128], strides = [1, 1]} : vector<896x128xf32> to vector<32x128xf32>
    %51 = vector.extract_strided_slice %16 {offsets = [736, 0], sizes = [32, 128], strides = [1, 1]} : vector<896x128xf32> to vector<32x128xf32>
    %52 = arith.maximumf %50, %51 : vector<32x128xf32>
    %53 = vector.extract_strided_slice %16 {offsets = [768, 0], sizes = [32, 128], strides = [1, 1]} : vector<896x128xf32> to vector<32x128xf32>
    %54 = vector.extract_strided_slice %16 {offsets = [800, 0], sizes = [32, 128], strides = [1, 1]} : vector<896x128xf32> to vector<32x128xf32>
    %55 = arith.maximumf %53, %54 : vector<32x128xf32>
    %56 = vector.extract_strided_slice %16 {offsets = [832, 0], sizes = [32, 128], strides = [1, 1]} : vector<896x128xf32> to vector<32x128xf32>
    %57 = vector.extract_strided_slice %16 {offsets = [864, 0], sizes = [32, 128], strides = [1, 1]} : vector<896x128xf32> to vector<32x128xf32>
    %58 = arith.maximumf %56, %57 : vector<32x128xf32>
    %59 = tpu.concatenate %19, %22, %25, %28, %31, %34, %37, %40, %43, %46, %49, %52, %55, %58 in 0 : vector<32x128xf32>, vector<32x128xf32>, vector<32x128xf32>, vector<32x128xf32>, vector<32x128xf32>, vector<32x128xf32>, vector<32x128xf32>, vector<32x128xf32>, vector<32x128xf32>, vector<32x128xf32>, vector<32x128xf32>, vector<32x128xf32>, vector<32x128xf32>, vector<32x128xf32> -> vector<448x128xf32>
    %60 = arith.truncf %59 : vector<448x128xf32> to vector<448x128xbf16>
    %61 = vector.extract_strided_slice %60 {offsets = [0, 0], sizes = [320, 128], strides = [1, 1]} : vector<448x128xbf16> to vector<320x128xbf16>
    %62 = vector.extract_strided_slice %60 {offsets = [32, 0], sizes = [320, 128], strides = [1, 1]} : vector<448x128xbf16> to vector<320x128xbf16>
    %63 = vector.extract_strided_slice %60 {offsets = [64, 0], sizes = [320, 128], strides = [1, 1]} : vector<448x128xbf16> to vector<320x128xbf16>
    %64 = vector.extract_strided_slice %60 {offsets = [96, 0], sizes = [320, 128], strides = [1, 1]} : vector<448x128xbf16> to vector<320x128xbf16>
    %65 = vector.extract_strided_slice %60 {offsets = [128, 0], sizes = [320, 128], strides = [1, 1]} : vector<448x128xbf16> to vector<320x128xbf16>
    %66 = tpu.concatenate %61, %62, %63, %64, %65 in 1 : vector<320x128xbf16>, vector<320x128xbf16>, vector<320x128xbf16>, vector<320x128xbf16>, vector<320x128xbf16> -> vector<320x640xbf16>
    %c0_6 = arith.constant 0 : index
    %c0_7 = arith.constant 0 : index
    %67 = vector.load %arg4[%c0_6, %c0_7] : memref<640x256xbf16, #tpu.memory_space<vmem>>, vector<640x256xbf16>
    %cst_8 = arith.constant dense<0.000000e+00> : vector<320x256xf32>
    %68 = tpu.matmul %66, %67, %cst_8 {dimension_numbers = #tpu.dot_dimension_numbers<[1], [0], [0], [1], [0, 0, 1, 1], [], []>} : vector<320x640xbf16>, vector<640x256xbf16>, vector<320x256xf32> -> vector<320x256xf32>
    %c0_9 = arith.constant 0 : index
    %c0_10 = arith.constant 0 : index
    %69 = vector.load %arg5[%c0_9, %c0_10] : memref<1x256xf32, #tpu.memory_space<vmem>>, vector<1x256xf32>
    %70 = vector.broadcast %69 : vector<1x256xf32> to vector<320x256xf32>
    %71 = arith.addf %68, %70 : vector<320x256xf32>
    %cst_11 = arith.constant 0.000000e+00 : f32
    %72 = vector.broadcast %cst_11 : f32 to vector<320x256xf32>
    %73 = arith.maximumf %71, %72 : vector<320x256xf32>
    %74 = vector.extract_strided_slice %73 {offsets = [0, 0], sizes = [320, 128], strides = [1, 1]} : vector<320x256xf32> to vector<320x128xf32>
    %75 = vector.extract_strided_slice %73 {offsets = [0, 128], sizes = [320, 128], strides = [1, 1]} : vector<320x256xf32> to vector<320x128xf32>
    %76 = arith.maximumf %74, %75 : vector<320x128xf32>
    %77 = vector.extract_strided_slice %76 {offsets = [0, 0], sizes = [32, 128], strides = [1, 1]} : vector<320x128xf32> to vector<32x128xf32>
    %78 = vector.extract_strided_slice %76 {offsets = [32, 0], sizes = [32, 128], strides = [1, 1]} : vector<320x128xf32> to vector<32x128xf32>
    %79 = arith.maximumf %77, %78 : vector<32x128xf32>
    %80 = vector.extract_strided_slice %76 {offsets = [64, 0], sizes = [32, 128], strides = [1, 1]} : vector<320x128xf32> to vector<32x128xf32>
    %81 = vector.extract_strided_slice %76 {offsets = [96, 0], sizes = [32, 128], strides = [1, 1]} : vector<320x128xf32> to vector<32x128xf32>
    %82 = arith.maximumf %80, %81 : vector<32x128xf32>
    %83 = vector.extract_strided_slice %76 {offsets = [128, 0], sizes = [32, 128], strides = [1, 1]} : vector<320x128xf32> to vector<32x128xf32>
    %84 = vector.extract_strided_slice %76 {offsets = [160, 0], sizes = [32, 128], strides = [1, 1]} : vector<320x128xf32> to vector<32x128xf32>
    %85 = arith.maximumf %83, %84 : vector<32x128xf32>
    %86 = vector.extract_strided_slice %76 {offsets = [192, 0], sizes = [32, 128], strides = [1, 1]} : vector<320x128xf32> to vector<32x128xf32>
    %87 = vector.extract_strided_slice %76 {offsets = [224, 0], sizes = [32, 128], strides = [1, 1]} : vector<320x128xf32> to vector<32x128xf32>
    %88 = arith.maximumf %86, %87 : vector<32x128xf32>
    %89 = vector.extract_strided_slice %76 {offsets = [256, 0], sizes = [32, 128], strides = [1, 1]} : vector<320x128xf32> to vector<32x128xf32>
    %90 = vector.extract_strided_slice %76 {offsets = [288, 0], sizes = [32, 128], strides = [1, 1]} : vector<320x128xf32> to vector<32x128xf32>
    %91 = arith.maximumf %89, %90 : vector<32x128xf32>
    %92 = tpu.concatenate %79, %82, %85, %88, %91 in 0 : vector<32x128xf32>, vector<32x128xf32>, vector<32x128xf32>, vector<32x128xf32>, vector<32x128xf32> -> vector<160x128xf32>
    %93 = arith.truncf %92 : vector<160x128xf32> to vector<160x128xbf16>
    %94 = vector.extract_strided_slice %93 {offsets = [0, 0], sizes = [32, 128], strides = [1, 1]} : vector<160x128xbf16> to vector<32x128xbf16>
    %95 = vector.extract_strided_slice %93 {offsets = [32, 0], sizes = [32, 128], strides = [1, 1]} : vector<160x128xbf16> to vector<32x128xbf16>
    %96 = vector.extract_strided_slice %93 {offsets = [64, 0], sizes = [32, 128], strides = [1, 1]} : vector<160x128xbf16> to vector<32x128xbf16>
    %97 = vector.extract_strided_slice %93 {offsets = [96, 0], sizes = [32, 128], strides = [1, 1]} : vector<160x128xbf16> to vector<32x128xbf16>
    %98 = vector.extract_strided_slice %93 {offsets = [128, 0], sizes = [32, 128], strides = [1, 1]} : vector<160x128xbf16> to vector<32x128xbf16>
    %99 = tpu.concatenate %94, %95, %96, %97, %98 in 1 : vector<32x128xbf16>, vector<32x128xbf16>, vector<32x128xbf16>, vector<32x128xbf16>, vector<32x128xbf16> -> vector<32x640xbf16>
    %c0_12 = arith.constant 0 : index
    %c0_13 = arith.constant 0 : index
    %100 = vector.load %arg6[%c0_12, %c0_13] : memref<640x128xbf16, #tpu.memory_space<vmem>>, vector<640x128xbf16>
    %cst_14 = arith.constant dense<0.000000e+00> : vector<32x128xf32>
    %101 = tpu.matmul %99, %100, %cst_14 {dimension_numbers = #tpu.dot_dimension_numbers<[1], [0], [0], [1], [0, 0, 1, 1], [], []>} : vector<32x640xbf16>, vector<640x128xbf16>, vector<32x128xf32> -> vector<32x128xf32>
    %c0_15 = arith.constant 0 : index
    %c0_16 = arith.constant 0 : index
    %102 = vector.load %arg7[%c0_15, %c0_16] : memref<1x128xf32, #tpu.memory_space<vmem>>, vector<1x128xf32>
    %103 = vector.broadcast %102 : vector<1x128xf32> to vector<32x128xf32>
    %104 = arith.addf %101, %103 : vector<32x128xf32>
    %cst_17 = arith.constant 0.000000e+00 : f32
    %105 = vector.broadcast %cst_17 : f32 to vector<32x128xf32>
    %106 = arith.maximumf %104, %105 : vector<32x128xf32>
    %107 = arith.truncf %106 : vector<32x128xf32> to vector<32x128xbf16>
    %c0_18 = arith.constant 0 : index
    %c0_19 = arith.constant 0 : index
    %108 = vector.load %arg8[%c0_18, %c0_19] : memref<128x128xbf16, #tpu.memory_space<vmem>>, vector<128x128xbf16>
    %cst_20 = arith.constant dense<0.000000e+00> : vector<32x128xf32>
    %109 = tpu.matmul %107, %108, %cst_20 {dimension_numbers = #tpu.dot_dimension_numbers<[1], [0], [0], [1], [0, 0, 1, 1], [], []>} : vector<32x128xbf16>, vector<128x128xbf16>, vector<32x128xf32> -> vector<32x128xf32>
    %c0_21 = arith.constant 0 : index
    %c0_22 = arith.constant 0 : index
    %110 = vector.load %arg9[%c0_21, %c0_22] : memref<1x128xf32, #tpu.memory_space<vmem>>, vector<1x128xf32>
    %111 = vector.broadcast %110 : vector<1x128xf32> to vector<32x128xf32>
    %112 = arith.addf %109, %111 : vector<32x128xf32>
    %cst_23 = arith.constant 0.000000e+00 : f32
    %113 = vector.broadcast %cst_23 : f32 to vector<32x128xf32>
    %114 = arith.maximumf %112, %113 : vector<32x128xf32>
    %115 = arith.truncf %114 : vector<32x128xf32> to vector<32x128xbf16>
    %c0_24 = arith.constant 0 : index
    %c0_25 = arith.constant 0 : index
    %116 = vector.load %arg10[%c0_24, %c0_25] : memref<128x128xbf16, #tpu.memory_space<vmem>>, vector<128x128xbf16>
    %cst_26 = arith.constant dense<0.000000e+00> : vector<32x128xf32>
    %117 = tpu.matmul %115, %116, %cst_26 {dimension_numbers = #tpu.dot_dimension_numbers<[1], [0], [0], [1], [0, 0, 1, 1], [], []>} : vector<32x128xbf16>, vector<128x128xbf16>, vector<32x128xf32> -> vector<32x128xf32>
    %c0_27 = arith.constant 0 : index
    %c0_28 = arith.constant 0 : index
    %118 = vector.load %arg11[%c0_27, %c0_28] : memref<1x128xf32, #tpu.memory_space<vmem>>, vector<1x128xf32>
    %119 = vector.broadcast %118 : vector<1x128xf32> to vector<32x128xf32>
    %120 = arith.addf %117, %119 : vector<32x128xf32>
    %c0_29 = arith.constant 0 : index
    %c0_30 = arith.constant 0 : index
    %121 = vector.load %arg12[%c0_29, %c0_30] : memref<32x128xf32, #tpu.memory_space<vmem>>, vector<32x128xf32>
    tpu.vector_store %arg12[%c0_29, %c0_30], %120 {strides = array<i32>} : memref<32x128xf32, #tpu.memory_space<vmem>>, vector<32x128xf32>,
    return
  }
  func.func @transform_0(%arg0: i32) -> (i32, i32) {
    %c0_i32 = arith.constant 0 : i32
    %c0_i32_0 = arith.constant 0 : i32
    return %arg0, %c0_i32 : i32, i32
  }
  func.func @transform_1(%arg0: i32) -> (i32, i32) {
    %c0_i32 = arith.constant 0 : i32
    %c0_i32_0 = arith.constant 0 : i32
    %c0_i32_1 = arith.constant 0 : i32
    return %c0_i32, %c0_i32_0 : i32, i32
  }
  func.func @transform_2(%arg0: i32) -> (i32, i32) {
    %c0_i32 = arith.constant 0 : i32
    %c0_i32_0 = arith.constant 0 : i32
    %c0_i32_1 = arith.constant 0 : i32
    return %c0_i32, %c0_i32_0 : i32, i32
  }
  func.func @transform_3(%arg0: i32) -> (i32, i32) {
    %c0_i32 = arith.constant 0 : i32
    %c0_i32_0 = arith.constant 0 : i32
    %c0_i32_1 = arith.constant 0 : i32
    return %c0_i32, %c0_i32_0 : i32, i32
  }
  func.func @transform_4(%arg0: i32) -> (i32, i32) {
    %c0_i32 = arith.constant 0 : i32
    %c0_i32_0 = arith.constant 0 : i32
    %c0_i32_1 = arith.constant 0 : i32
    return %c0_i32, %c0_i32_0 : i32, i32
  }
  func.func @transform_5(%arg0: i32) -> (i32, i32) {
    %c0_i32 = arith.constant 0 : i32
    %c0_i32_0 = arith.constant 0 : i32
    %c0_i32_1 = arith.constant 0 : i32
    return %c0_i32, %c0_i32_0 : i32, i32
  }
  func.func @transform_6(%arg0: i32) -> (i32, i32) {
    %c0_i32 = arith.constant 0 : i32
    %c0_i32_0 = arith.constant 0 : i32
    %c0_i32_1 = arith.constant 0 : i32
    return %c0_i32, %c0_i32_0 : i32, i32
  }
  func.func @transform_7(%arg0: i32) -> (i32, i32) {
    %c0_i32 = arith.constant 0 : i32
    %c0_i32_0 = arith.constant 0 : i32
    %c0_i32_1 = arith.constant 0 : i32
    return %c0_i32, %c0_i32_0 : i32, i32
  }
  func.func @transform_8(%arg0: i32) -> (i32, i32) {
    %c0_i32 = arith.constant 0 : i32
    %c0_i32_0 = arith.constant 0 : i32
    %c0_i32_1 = arith.constant 0 : i32
    return %c0_i32, %c0_i32_0 : i32, i32
  }
  func.func @transform_9(%arg0: i32) -> (i32, i32) {
    %c0_i32 = arith.constant 0 : i32
    %c0_i32_0 = arith.constant 0 : i32
    %c0_i32_1 = arith.constant 0 : i32
    return %c0_i32, %c0_i32_0 : i32, i32
  }
  func.func @transform_10(%arg0: i32) -> (i32, i32) {
    %c0_i32 = arith.constant 0 : i32
    %c0_i32_0 = arith.constant 0 : i32
    %c0_i32_1 = arith.constant 0 : i32
    return %c0_i32, %c0_i32_0 : i32, i32
  }
  func.func @transform_11(%arg0: i32) -> (i32, i32) {
    %c0_i32 = arith.constant 0 : i32
    %c0_i32_0 = arith.constant 0 : i32
    return %arg0, %c0_i32 : i32, i32
  }
}

</mosaic_0001>

<llo_original>
// kernel: ann_classifier_forward.1
$region0: #{ann_classifier_forward.1}
  #allocation0 [shape = 'u32[]', space=smem, size = 0x4, offset = 0x4, fixed_abs, tag = 'smem constant byte address 0x4 - core index']
  #allocation1 [shape = 'u32[144,128]{1,0:T(1,128)}', space=vmem, size = 0x12000, scoped, tag = 'internal scratch']
  %s0 = inlined_call_operand.vmem [shape: bf16[1024,32], index: 0, kind: input, shape index: {}]
  %s1 = inlined_call_operand.vmem [shape: bf16[160,256], index: 1, kind: input, shape index: {}]
  %s2 = inlined_call_operand.vmem [shape: f32[1,256], index: 2, kind: input, shape index: {}]
  %s3 = inlined_call_operand.vmem [shape: bf16[640,256], index: 3, kind: input, shape index: {}]
  %s4 = inlined_call_operand.vmem [shape: f32[1,256], index: 4, kind: input, shape index: {}]
  %s5 = inlined_call_operand.vmem [shape: bf16[640,128], index: 5, kind: input, shape index: {}]
  %s6 = inlined_call_operand.vmem [shape: f32[1,128], index: 6, kind: input, shape index: {}]
  %s7 = inlined_call_operand.vmem [shape: bf16[128,128], index: 7, kind: input, shape index: {}]
  %s8 = inlined_call_operand.vmem [shape: f32[1,128], index: 8, kind: input, shape index: {}]
  %s9 = inlined_call_operand.vmem [shape: bf16[128,128], index: 9, kind: input, shape index: {}]
  %s10 = inlined_call_operand.vmem [shape: f32[1,128], index: 10, kind: input, shape index: {}]
  %s11 = inlined_call_operand.vmem [shape: f32[32,128], index: 11, kind: output, shape index: {}]
  %s12 = sld [smem:[#allocation0]]
  $region54: #{ann_classifier_forward.1} parent=0
    _
  %s14 = ssub.s32 1, %s12
  %s15 = scalar_select 0, %s14, %s12
  // Predicated region
  $region2: #{ann_classifier_forward.1} parent=0 // pred_check
    _
  $region3: #{ann_classifier_forward.1} parent=0 // pred_check_branch
    %17 = sbr.rel (0) target = $region5
  $region4: #{ann_classifier_forward.1} parent=0 // pred_region
    _
  $region5: #{ann_classifier_forward.1} parent=0 // pred_fallthru
    _
  // Predicated region
  $region6: #{ann_classifier_forward.1} parent=0 // pred_check
    _
  $region7: #{ann_classifier_forward.1} parent=0 // pred_check_branch
    %19 = sbr.rel (0) target = $region9
  $region8: #{ann_classifier_forward.1} parent=0 // pred_region
    _
  $region9: #{ann_classifier_forward.1} parent=0 // pred_fallthru
    _
  // Predicated region
  $region10: #{ann_classifier_forward.1} parent=0 // pred_check
    _
  $region11: #{ann_classifier_forward.1} parent=0 // pred_check_branch
    %21 = sbr.rel (0) target = $region13
  $region12: #{ann_classifier_forward.1} parent=0 // pred_region
    _
  $region13: #{ann_classifier_forward.1} parent=0 // pred_fallthru
    _
  // Predicated region
  $region14: #{ann_classifier_forward.1} parent=0 // pred_check
    _
  $region15: #{ann_classifier_forward.1} parent=0 // pred_check_branch
    %23 = sbr.rel (0) target = $region17
  $region16: #{ann_classifier_forward.1} parent=0 // pred_region
    _
  $region17: #{ann_classifier_forward.1} parent=0 // pred_fallthru
    _
  // Predicated region
  $region18: #{ann_classifier_forward.1} parent=0 // pred_check
    _
  $region19: #{ann_classifier_forward.1} parent=0 // pred_check_branch
    %25 = sbr.rel (0) target = $region21
  $region20: #{ann_classifier_forward.1} parent=0 // pred_region
    _
  $region21: #{ann_classifier_forward.1} parent=0 // pred_fallthru
    _
  // Predicated region
  $region22: #{ann_classifier_forward.1} parent=0 // pred_check
    _
  $region23: #{ann_classifier_forward.1} parent=0 // pred_check_branch
    %27 = sbr.rel (0) target = $region25
  $region24: #{ann_classifier_forward.1} parent=0 // pred_region
    _
  $region25: #{ann_classifier_forward.1} parent=0 // pred_fallthru
    _
  // Predicated region
  $region26: #{ann_classifier_forward.1} parent=0 // pred_check
    _
  $region27: #{ann_classifier_forward.1} parent=0 // pred_check_branch
    %29 = sbr.rel (0) target = $region29
  $region28: #{ann_classifier_forward.1} parent=0 // pred_region
    _
  $region29: #{ann_classifier_forward.1} parent=0 // pred_fallthru
    _
  // Predicated region
  $region30: #{ann_classifier_forward.1} parent=0 // pred_check
    _
  $region31: #{ann_classifier_forward.1} parent=0 // pred_check_branch
    %31 = sbr.rel (0) target = $region33
  $region32: #{ann_classifier_forward.1} parent=0 // pred_region
    _
  $region33: #{ann_classifier_forward.1} parent=0 // pred_fallthru
    _
  // Predicated region
  $region34: #{ann_classifier_forward.1} parent=0 // pred_check
    _
  $region35: #{ann_classifier_forward.1} parent=0 // pred_check_branch
    %33 = sbr.rel (0) target = $region37
  $region36: #{ann_classifier_forward.1} parent=0 // pred_region
    _
  $region37: #{ann_classifier_forward.1} parent=0 // pred_fallthru
    _
  // Predicated region
  $region38: #{ann_classifier_forward.1} parent=0 // pred_check
    _
  $region39: #{ann_classifier_forward.1} parent=0 // pred_check_branch
    %35 = sbr.rel (0) target = $region41
  $region40: #{ann_classifier_forward.1} parent=0 // pred_region
    _
  $region41: #{ann_classifier_forward.1} parent=0 // pred_fallthru
    _
  // Predicated region
  $region42: #{ann_classifier_forward.1} parent=0 // pred_check
    _
  $region43: #{ann_classifier_forward.1} parent=0 // pred_check_branch
    %37 = sbr.rel (0) target = $region45
  $region44: #{ann_classifier_forward.1} parent=0 // pred_region
    _
  $region45: #{ann_classifier_forward.1} parent=0 // pred_fallthru
    _
  %v39 = vld [vmem:[%s0] sm:$0xf]
  %v40 = vld [vmem:[%s0 + $0x4] sm:$0xf]
  %v41 = vld [vmem:[%s0 + $0x8] sm:$0xf]
  %v42 = vld [vmem:[%s0 + $0xc] sm:$0xf]
  %v43 = vld [vmem:[%s0 + $0x10] sm:$0xf]
  %v44 = vld [vmem:[%s0 + $0x14] sm:$0xf]
  %v45 = vld [vmem:[%s0 + $0x18] sm:$0xf]
  %v46 = vld [vmem:[%s0 + $0x1c] sm:$0xf]
  %v47 = vld [vmem:[%s0 + $0x20] sm:$0xf]
  %v48 = vld [vmem:[%s0 + $0x24] sm:$0xf]
  %v49 = vld [vmem:[%s0 + $0x28] sm:$0xf]
  %v50 = vld [vmem:[%s0 + $0x2c] sm:$0xf]
  %v51 = vld [vmem:[%s0 + $0x30] sm:$0xf]
  %v52 = vld [vmem:[%s0 + $0x34] sm:$0xf]
  %v53 = vld [vmem:[%s0 + $0x38] sm:$0xf]
  %v54 = vld [vmem:[%s0 + $0x3c] sm:$0xf]
  %v55 = vld [vmem:[%s0 + $0x40] sm:$0xf]
  %v56 = vld [vmem:[%s0 + $0x44] sm:$0xf]
  %v57 = vld [vmem:[%s0 + $0x48] sm:$0xf]
  %v58 = vld [vmem:[%s0 + $0x4c] sm:$0xf]
  %v59 = vld [vmem:[%s0 + $0x50] sm:$0xf]
  %v60 = vld [vmem:[%s0 + $0x54] sm:$0xf]
  %v61 = vld [vmem:[%s0 + $0x58] sm:$0xf]
  %v62 = vld [vmem:[%s0 + $0x5c] sm:$0xf]
  %v63 = vld [vmem:[%s0 + $0x60] sm:$0xf]
  %v64 = vld [vmem:[%s0 + $0x64] sm:$0xf]
  %v65 = vld [vmem:[%s0 + $0x68] sm:$0xf]
  %v66 = vld [vmem:[%s0 + $0x6c] sm:$0xf]
  %v67 = vld [vmem:[%s0 + $0x70] sm:$0xf]
  %v68 = vld [vmem:[%s0 + $0x74] sm:$0xf]
  %v69 = vld [vmem:[%s0 + $0x78] sm:$0xf]
  %v70 = vld [vmem:[%s0 + $0x7c] sm:$0xf]
  %v71 = vld [vmem:[%s0 + $0x80] sm:$0xf]
  %v72 = vld [vmem:[%s0 + $0x84] sm:$0xf]
  %v73 = vld [vmem:[%s0 + $0x88] sm:$0xf]
  %v74 = vld [vmem:[%s0 + $0x8c] sm:$0xf]
  %v75 = vld [vmem:[%s0 + $0x90] sm:$0xf]
  %v76 = vld [vmem:[%s0 + $0x94] sm:$0xf]
  %v77 = vld [vmem:[%s0 + $0x98] sm:$0xf]
  %v78 = vld [vmem:[%s0 + $0x9c] sm:$0xf]
  %v79 = vld [vmem:[%s0 + $0xa0] sm:$0xf]
  %v80 = vld [vmem:[%s0 + $0xa4] sm:$0xf]
  %v81 = vld [vmem:[%s0 + $0xa8] sm:$0xf]
  %v82 = vld [vmem:[%s0 + $0xac] sm:$0xf]
  %v83 = vld [vmem:[%s0 + $0xb0] sm:$0xf]
  %v84 = vld [vmem:[%s0 + $0xb4] sm:$0xf]
  %v85 = vld [vmem:[%s0 + $0xb8] sm:$0xf]
  %v86 = vld [vmem:[%s0 + $0xbc] sm:$0xf]
  %v87 = vld [vmem:[%s0 + $0xc0] sm:$0xf]
  %v88 = vld [vmem:[%s0 + $0xc4] sm:$0xf]
  %v89 = vld [vmem:[%s0 + $0xc8] sm:$0xf]
  %v90 = vld [vmem:[%s0 + $0xcc] sm:$0xf]
  %v91 = vld [vmem:[%s0 + $0xd0] sm:$0xf]
  %v92 = vld [vmem:[%s0 + $0xd4] sm:$0xf]
  %v93 = vld [vmem:[%s0 + $0xd8] sm:$0xf]
  %v94 = vld [vmem:[%s0 + $0xdc] sm:$0xf]
  %v95 = vld [vmem:[%s0 + $0xe0] sm:$0xf]
  %v96 = vld [vmem:[%s0 + $0xe4] sm:$0xf]
  %v97 = vld [vmem:[%s0 + $0xe8] sm:$0xf]
  %v98 = vld [vmem:[%s0 + $0xec] sm:$0xf]
  %v99 = vld [vmem:[%s0 + $0xf0] sm:$0xf]
  %v100 = vld [vmem:[%s0 + $0xf4] sm:$0xf]
  %v101 = vld [vmem:[%s0 + $0xf8] sm:$0xf]
  %v102 = vld [vmem:[%s0 + $0xfc] sm:$0xf]
  %v103 = vld [vmem:[%s0 + $0x100] sm:$0xf]
  %v104 = vld [vmem:[%s0 + $0x104] sm:$0xf]
  %v105 = vld [vmem:[%s0 + $0x108] sm:$0xf]
  %v106 = vld [vmem:[%s0 + $0x10c] sm:$0xf]
  %v107 = vld [vmem:[%s0 + $0x110] sm:$0xf]
  %v108 = vld [vmem:[%s0 + $0x114] sm:$0xf]
  %v109 = vld [vmem:[%s0 + $0x118] sm:$0xf]
  %v110 = vld [vmem:[%s0 + $0x11c] sm:$0xf]
  %v111 = vld [vmem:[%s0 + $0x120] sm:$0xf]
  %v112 = vld [vmem:[%s0 + $0x124] sm:$0xf]
  %v113 = vld [vmem:[%s0 + $0x128] sm:$0xf]
  %v114 = vld [vmem:[%s0 + $0x12c] sm:$0xf]
  %v115 = vld [vmem:[%s0 + $0x130] sm:$0xf]
  %v116 = vld [vmem:[%s0 + $0x134] sm:$0xf]
  %v117 = vld [vmem:[%s0 + $0x138] sm:$0xf]
  %v118 = vld [vmem:[%s0 + $0x13c] sm:$0xf]
  %v119 = vld [vmem:[%s0 + $0x140] sm:$0xf]
  %v120 = vld [vmem:[%s0 + $0x144] sm:$0xf]
  %v121 = vld [vmem:[%s0 + $0x148] sm:$0xf]
  %v122 = vld [vmem:[%s0 + $0x14c] sm:$0xf]
  %v123 = vld [vmem:[%s0 + $0x150] sm:$0xf]
  %v124 = vld [vmem:[%s0 + $0x154] sm:$0xf]
  %v125 = vld [vmem:[%s0 + $0x158] sm:$0xf]
  %v126 = vld [vmem:[%s0 + $0x15c] sm:$0xf]
  %v127 = vld [vmem:[%s0 + $0x160] sm:$0xf]
  %v128 = vld [vmem:[%s0 + $0x164] sm:$0xf]
  %v129 = vld [vmem:[%s0 + $0x168] sm:$0xf]
  %v130 = vld [vmem:[%s0 + $0x16c] sm:$0xf]
  %v131 = vld [vmem:[%s0 + $0x170] sm:$0xf]
  %v132 = vld [vmem:[%s0 + $0x174] sm:$0xf]
  %v133 = vld [vmem:[%s0 + $0x178] sm:$0xf]
  %v134 = vld [vmem:[%s0 + $0x17c] sm:$0xf]
  %v135 = vld [vmem:[%s0 + $0x180] sm:$0xf]
  %v136 = vld [vmem:[%s0 + $0x184] sm:$0xf]
  %v137 = vld [vmem:[%s0 + $0x188] sm:$0xf]
  %v138 = vld [vmem:[%s0 + $0x18c] sm:$0xf]
  %v139 = vld [vmem:[%s0 + $0x190] sm:$0xf]
  %v140 = vld [vmem:[%s0 + $0x194] sm:$0xf]
  %v141 = vld [vmem:[%s0 + $0x198] sm:$0xf]
  %v142 = vld [vmem:[%s0 + $0x19c] sm:$0xf]
  %v143 = vld [vmem:[%s0 + $0x1a0] sm:$0xf]
  %v144 = vld [vmem:[%s0 + $0x1a4] sm:$0xf]
  %v145 = vld [vmem:[%s0 + $0x1a8] sm:$0xf]
  %v146 = vld [vmem:[%s0 + $0x1ac] sm:$0xf]
  %v147 = vld [vmem:[%s0 + $0x1b0] sm:$0xf]
  %v148 = vld [vmem:[%s0 + $0x1b4] sm:$0xf]
  %v149 = vld [vmem:[%s0 + $0x1b8] sm:$0xf]
  %v150 = vld [vmem:[%s0 + $0x1bc] sm:$0xf]
  %v151 = vld [vmem:[%s0 + $0x1c0] sm:$0xf]
  %v152 = vld [vmem:[%s0 + $0x1c4] sm:$0xf]
  %v153 = vld [vmem:[%s0 + $0x1c8] sm:$0xf]
  %v154 = vld [vmem:[%s0 + $0x1cc] sm:$0xf]
  %v155 = vld [vmem:[%s0 + $0x1d0] sm:$0xf]
  %v156 = vld [vmem:[%s0 + $0x1d4] sm:$0xf]
  %v157 = vld [vmem:[%s0 + $0x1d8] sm:$0xf]
  %v158 = vld [vmem:[%s0 + $0x1dc] sm:$0xf]
  %v159 = vld [vmem:[%s0 + $0x1e0] sm:$0xf]
  %v160 = vld [vmem:[%s0 + $0x1e4] sm:$0xf]
  %v161 = vld [vmem:[%s0 + $0x1e8] sm:$0xf]
  %v162 = vld [vmem:[%s0 + $0x1ec] sm:$0xf]
  %v163 = vld [vmem:[%s0 + $0x1f0] sm:$0xf]
  %v164 = vld [vmem:[%s0 + $0x1f4] sm:$0xf]
  %v165 = vld [vmem:[%s0 + $0x1f8] sm:$0xf]
  %v166 = vld [vmem:[%s0 + $0x1fc] sm:$0xf]
  %v279 = vunpack.c.l.b16 %v39
  %v280 = vunpack.c.l.b16 %v40
  %v281 = vunpack.c.l.b16 %v41
  %v282 = vunpack.c.l.b16 %v42
  %v283 = vunpack.c.l.b16 %v43
  %v284 = vunpack.c.l.b16 %v44
  %v285 = vunpack.c.l.b16 %v45
  %v286 = vunpack.c.l.b16 %v46
  %v287 = vunpack.c.l.b16 %v47
  %v288 = vunpack.c.l.b16 %v48
  %v289 = vunpack.c.l.b16 %v49
  %v290 = vunpack.c.l.b16 %v50
  %v291 = vunpack.c.l.b16 %v51
  %v292 = vunpack.c.l.b16 %v52
  %v293 = vunpack.c.l.b16 %v53
  %v294 = vunpack.c.l.b16 %v54
  %v295 = vunpack.c.l.b16 %v55
  %v296 = vunpack.c.l.b16 %v56
  %v297 = vunpack.c.l.b16 %v57
  %v298 = vunpack.c.l.b16 %v58
  %v299 = vunpack.c.l.b16 %v59
  %v300 = vunpack.c.l.b16 %v60
  %v301 = vunpack.c.l.b16 %v61
  %v302 = vunpack.c.l.b16 %v62
  %v303 = vunpack.c.l.b16 %v63
  %v304 = vunpack.c.l.b16 %v64
  %v305 = vunpack.c.l.b16 %v65
  %v306 = vunpack.c.l.b16 %v66
  %v307 = vunpack.c.l.b16 %v67
  %v308 = vunpack.c.l.b16 %v68
  %v309 = vunpack.c.l.b16 %v69
  %v310 = vunpack.c.l.b16 %v70
  %v311 = vunpack.c.l.b16 %v71
  %v312 = vunpack.c.l.b16 %v72
  %v313 = vunpack.c.l.b16 %v73
  %v314 = vunpack.c.l.b16 %v74
  %v315 = vunpack.c.l.b16 %v75
  %v316 = vunpack.c.l.b16 %v76
  %v317 = vunpack.c.l.b16 %v77
  %v318 = vunpack.c.l.b16 %v78
  %v319 = vunpack.c.l.b16 %v79
  %v320 = vunpack.c.l.b16 %v80
  %v321 = vunpack.c.l.b16 %v81
  %v322 = vunpack.c.l.b16 %v82
  %v323 = vunpack.c.l.b16 %v83
  %v324 = vunpack.c.l.b16 %v84
  %v325 = vunpack.c.l.b16 %v85
  %v326 = vunpack.c.l.b16 %v86
  %v327 = vunpack.c.l.b16 %v87
  %v328 = vunpack.c.l.b16 %v88
  %v329 = vunpack.c.l.b16 %v89
  %v330 = vunpack.c.l.b16 %v90
  %v331 = vunpack.c.l.b16 %v91
  %v332 = vunpack.c.l.b16 %v92
  %v333 = vunpack.c.l.b16 %v93
  %v334 = vunpack.c.l.b16 %v94
  %v335 = vunpack.c.l.b16 %v95
  %v336 = vunpack.c.l.b16 %v96
  %v337 = vunpack.c.l.b16 %v97
  %v338 = vunpack.c.l.b16 %v98
  %v339 = vunpack.c.l.b16 %v99
  %v340 = vunpack.c.l.b16 %v100
  %v341 = vunpack.c.l.b16 %v101
  %v342 = vunpack.c.l.b16 %v102
  %v343 = vunpack.c.l.b16 %v103
  %v344 = vunpack.c.l.b16 %v104
  %v345 = vunpack.c.l.b16 %v105
  %v346 = vunpack.c.l.b16 %v106
  %v347 = vunpack.c.l.b16 %v107
  %v348 = vunpack.c.l.b16 %v108
  %v349 = vunpack.c.l.b16 %v109
  %v350 = vunpack.c.l.b16 %v110
  %v351 = vunpack.c.l.b16 %v111
  %v352 = vunpack.c.l.b16 %v112
  %v353 = vunpack.c.l.b16 %v113
  %v354 = vunpack.c.l.b16 %v114
  %v355 = vunpack.c.l.b16 %v115
  %v356 = vunpack.c.l.b16 %v116
  %v357 = vunpack.c.l.b16 %v117
  %v358 = vunpack.c.l.b16 %v118
  %v359 = vunpack.c.l.b16 %v119
  %v360 = vunpack.c.l.b16 %v120
  %v361 = vunpack.c.l.b16 %v121
  %v362 = vunpack.c.l.b16 %v122
  %v363 = vunpack.c.l.b16 %v123
  %v364 = vunpack.c.l.b16 %v124
  %v365 = vunpack.c.l.b16 %v125
  %v366 = vunpack.c.l.b16 %v126
  %v367 = vunpack.c.l.b16 %v127
  %v368 = vunpack.c.l.b16 %v128
  %v369 = vunpack.c.l.b16 %v129
  %v370 = vunpack.c.l.b16 %v130
  %v371 = vunpack.c.l.b16 %v131
  %v372 = vunpack.c.l.b16 %v132
  %v373 = vunpack.c.l.b16 %v133
  %v374 = vunpack.c.l.b16 %v134
  %v375 = vunpack.c.l.b16 %v135
  %v376 = vunpack.c.l.b16 %v136
  %v377 = vunpack.c.l.b16 %v137
  %v378 = vunpack.c.l.b16 %v138
  %v379 = vunpack.c.l.b16 %v139
  %v380 = vunpack.c.l.b16 %v140
  %v381 = vunpack.c.l.b16 %v141
  %v382 = vunpack.c.l.b16 %v142
  %v383 = vunpack.c.l.b16 %v143
  %v384 = vunpack.c.l.b16 %v144
  %v385 = vunpack.c.l.b16 %v145
  %v386 = vunpack.c.l.b16 %v146
  %v387 = vunpack.c.l.b16 %v147
  %v388 = vunpack.c.l.b16 %v148
  %v389 = vunpack.c.l.b16 %v149
  %v390 = vunpack.c.l.b16 %v150
  %v391 = vpack.c.b16 %v280, %v279
  %v392 = vpack.c.b16 %v282, %v281
  %v393 = vpack.c.b16 %v284, %v283
  %v394 = vpack.c.b16 %v286, %v285
  %v395 = vpack.c.b16 %v288, %v287
  %v396 = vpack.c.b16 %v290, %v289
  %v397 = vpack.c.b16 %v292, %v291
  %v398 = vpack.c.b16 %v294, %v293
  %v399 = vpack.c.b16 %v296, %v295
  %v400 = vpack.c.b16 %v298, %v297
  %v401 = vpack.c.b16 %v300, %v299
  %v402 = vpack.c.b16 %v302, %v301
  %v403 = vpack.c.b16 %v304, %v303
  %v404 = vpack.c.b16 %v306, %v305
  %v405 = vpack.c.b16 %v308, %v307
  %v406 = vpack.c.b16 %v310, %v309
  %v407 = vpack.c.b16 %v312, %v311
  %v408 = vpack.c.b16 %v314, %v313
  %v409 = vpack.c.b16 %v316, %v315
  %v410 = vpack.c.b16 %v318, %v317
  %v411 = vpack.c.b16 %v320, %v319
  %v412 = vpack.c.b16 %v322, %v321
  %v413 = vpack.c.b16 %v324, %v323
  %v414 = vpack.c.b16 %v326, %v325
  %v415 = vpack.c.b16 %v328, %v327
  %v416 = vpack.c.b16 %v330, %v329
  %v417 = vpack.c.b16 %v332, %v331
  %v418 = vpack.c.b16 %v334, %v333
  %v419 = vpack.c.b16 %v336, %v335
  %v420 = vpack.c.b16 %v338, %v337
  %v421 = vpack.c.b16 %v340, %v339
  %v422 = vpack.c.b16 %v342, %v341
  %v423 = vpack.c.b16 %v344, %v343
  %v424 = vpack.c.b16 %v346, %v345
  %v425 = vpack.c.b16 %v348, %v347
  %v426 = vpack.c.b16 %v350, %v349
  %v427 = vpack.c.b16 %v352, %v351
  %v428 = vpack.c.b16 %v354, %v353
  %v429 = vpack.c.b16 %v356, %v355
  %v430 = vpack.c.b16 %v358, %v357
  %v431 = vpack.c.b16 %v360, %v359
  %v432 = vpack.c.b16 %v362, %v361
  %v433 = vpack.c.b16 %v364, %v363
  %v434 = vpack.c.b16 %v366, %v365
  %v435 = vpack.c.b16 %v368, %v367
  %v436 = vpack.c.b16 %v370, %v369
  %v437 = vpack.c.b16 %v372, %v371
  %v438 = vpack.c.b16 %v374, %v373
  %v439 = vpack.c.b16 %v376, %v375
  %v440 = vpack.c.b16 %v378, %v377
  %v441 = vpack.c.b16 %v380, %v379
  %v442 = vpack.c.b16 %v382, %v381
  %v443 = vpack.c.b16 %v384, %v383
  %v444 = vpack.c.b16 %v386, %v385
  %v445 = vpack.c.b16 %v388, %v387
  %v446 = vpack.c.b16 %v390, %v389
  %v451 = vunpack.c.l.b16 %v151
  %v452 = vunpack.c.l.b16 %v152
  %v453 = vunpack.c.l.b16 %v153
  %v454 = vunpack.c.l.b16 %v154
  %v455 = vpack.c.b16 %v452, %v451
  %v456 = vpack.c.b16 %v454, %v453
  %457 = vrot.lane.b32.xlu0 %v393, 32
  %v458 = vpop.permute.xlu0 %457
  %459 = vrot.lane.b32.xlu0 %v394, 32
  %v460 = vpop.permute.xlu0 %459
  %461 = vrot.lane.b32.xlu0 %v395, 32
  %v462 = vpop.permute.xlu0 %461
  %463 = vrot.lane.b32.xlu0 %v396, 32
  %v464 = vpop.permute.xlu0 %463
  %465 = vrot.lane.b32.xlu0 %v397, 32
  %v466 = vpop.permute.xlu0 %465
  %467 = vrot.lane.b32.xlu0 %v398, 32
  %v468 = vpop.permute.xlu0 %467
  %469 = vrot.lane.b32.xlu0 %v399, 32
  %v470 = vpop.permute.xlu0 %469
  %471 = vrot.lane.b32.xlu0 %v400, 32
  %v472 = vpop.permute.xlu0 %471
  %473 = vrot.lane.b32.xlu0 %v401, 32
  %v474 = vpop.permute.xlu0 %473
  %475 = vrot.lane.b32.xlu0 %v402, 32
  %v476 = vpop.permute.xlu0 %475
  %477 = vrot.lane.b32.xlu0 %v403, 32
  %v478 = vpop.permute.xlu0 %477
  %479 = vrot.lane.b32.xlu0 %v404, 32
  %v480 = vpop.permute.xlu0 %479
  %481 = vrot.lane.b32.xlu0 %v405, 32
  %v482 = vpop.permute.xlu0 %481
  %483 = vrot.lane.b32.xlu0 %v406, 32
  %v484 = vpop.permute.xlu0 %483
  %485 = vrot.lane.b32.xlu0 %v407, 32
  %v486 = vpop.permute.xlu0 %485
  %487 = vrot.lane.b32.xlu0 %v408, 32
  %v488 = vpop.permute.xlu0 %487
  %489 = vrot.lane.b32.xlu0 %v409, 32
  %v490 = vpop.permute.xlu0 %489
  %491 = vrot.lane.b32.xlu0 %v410, 32
  %v492 = vpop.permute.xlu0 %491
  %493 = vrot.lane.b32.xlu0 %v411, 32
  %v494 = vpop.permute.xlu0 %493
  %495 = vrot.lane.b32.xlu0 %v412, 32
  %v496 = vpop.permute.xlu0 %495
  %497 = vrot.lane.b32.xlu0 %v413, 32
  %v498 = vpop.permute.xlu0 %497
  %499 = vrot.lane.b32.xlu0 %v414, 32
  %v500 = vpop.permute.xlu0 %499
  %501 = vrot.lane.b32.xlu0 %v415, 32
  %v502 = vpop.permute.xlu0 %501
  %503 = vrot.lane.b32.xlu0 %v416, 32
  %v504 = vpop.permute.xlu0 %503
  %505 = vrot.lane.b32.xlu0 %v417, 32
  %v506 = vpop.permute.xlu0 %505
  %507 = vrot.lane.b32.xlu0 %v418, 32
  %v508 = vpop.permute.xlu0 %507
  %509 = vrot.lane.b32.xlu0 %v419, 32
  %v510 = vpop.permute.xlu0 %509
  %511 = vrot.lane.b32.xlu0 %v420, 32
  %v512 = vpop.permute.xlu0 %511
  %513 = vrot.lane.b32.xlu0 %v421, 32
  %v514 = vpop.permute.xlu0 %513
  %515 = vrot.lane.b32.xlu0 %v422, 32
  %v516 = vpop.permute.xlu0 %515
  %517 = vrot.lane.b32.xlu0 %v423, 32
  %v518 = vpop.permute.xlu0 %517
  %519 = vrot.lane.b32.xlu0 %v424, 32
  %v520 = vpop.permute.xlu0 %519
  %521 = vrot.lane.b32.xlu0 %v425, 32
  %v522 = vpop.permute.xlu0 %521
  %523 = vrot.lane.b32.xlu0 %v426, 32
  %v524 = vpop.permute.xlu0 %523
  %525 = vrot.lane.b32.xlu0 %v427, 32
  %v526 = vpop.permute.xlu0 %525
  %527 = vrot.lane.b32.xlu0 %v428, 32
  %v528 = vpop.permute.xlu0 %527
  %529 = vrot.lane.b32.xlu0 %v429, 32
  %v530 = vpop.permute.xlu0 %529
  %531 = vrot.lane.b32.xlu0 %v430, 32
  %v532 = vpop.permute.xlu0 %531
  %533 = vrot.lane.b32.xlu0 %v431, 32
  %v534 = vpop.permute.xlu0 %533
  %535 = vrot.lane.b32.xlu0 %v432, 32
  %v536 = vpop.permute.xlu0 %535
  %537 = vrot.lane.b32.xlu0 %v433, 32
  %v538 = vpop.permute.xlu0 %537
  %539 = vrot.lane.b32.xlu0 %v434, 32
  %v540 = vpop.permute.xlu0 %539
  %541 = vrot.lane.b32.xlu0 %v435, 32
  %v542 = vpop.permute.xlu0 %541
  %543 = vrot.lane.b32.xlu0 %v436, 32
  %v544 = vpop.permute.xlu0 %543
  %545 = vrot.lane.b32.xlu0 %v437, 32
  %v546 = vpop.permute.xlu0 %545
  %547 = vrot.lane.b32.xlu0 %v438, 32
  %v548 = vpop.permute.xlu0 %547
  %549 = vrot.lane.b32.xlu0 %v439, 32
  %v550 = vpop.permute.xlu0 %549
  %551 = vrot.lane.b32.xlu0 %v440, 32
  %v552 = vpop.permute.xlu0 %551
  %553 = vrot.lane.b32.xlu0 %v441, 32
  %v554 = vpop.permute.xlu0 %553
  %555 = vrot.lane.b32.xlu0 %v442, 32
  %v556 = vpop.permute.xlu0 %555
  %557 = vrot.lane.b32.xlu0 %v443, 32
  %v558 = vpop.permute.xlu0 %557
  %559 = vrot.lane.b32.xlu0 %v444, 32
  %v560 = vpop.permute.xlu0 %559
  %561 = vrot.lane.b32.xlu0 %v445, 32
  %v562 = vpop.permute.xlu0 %561
  %563 = vrot.lane.b32.xlu0 %v446, 32
  %v564 = vpop.permute.xlu0 %563
  %565 = vrot.lane.b32.xlu0 %v455, 32
  %v566 = vpop.permute.xlu0 %565
  %567 = vrot.lane.b32.xlu0 %v456, 32
  %v568 = vpop.permute.xlu0 %567
  %v573 = vunpack.c.l.b16 %v155
  %v574 = vunpack.c.l.b16 %v156
  %v575 = vunpack.c.l.b16 %v157
  %v576 = vunpack.c.l.b16 %v158
  %v577 = vpack.c.b16 %v574, %v573
  %v578 = vpack.c.b16 %v576, %v575
  %579 = vrot.lane.b32.xlu0 %v395, 64
  %v580 = vpop.permute.xlu0 %579
  %581 = vrot.lane.b32.xlu0 %v396, 64
  %v582 = vpop.permute.xlu0 %581
  %583 = vrot.lane.b32.xlu0 %v397, 64
  %v584 = vpop.permute.xlu0 %583
  %585 = vrot.lane.b32.xlu0 %v398, 64
  %v586 = vpop.permute.xlu0 %585
  %587 = vrot.lane.b32.xlu0 %v399, 64
  %v588 = vpop.permute.xlu0 %587
  %589 = vrot.lane.b32.xlu0 %v400, 64
  %v590 = vpop.permute.xlu0 %589
  %591 = vrot.lane.b32.xlu0 %v401, 64
  %v592 = vpop.permute.xlu0 %591
  %593 = vrot.lane.b32.xlu0 %v402, 64
  %v594 = vpop.permute.xlu0 %593
  %595 = vrot.lane.b32.xlu0 %v403, 64
  %v596 = vpop.permute.xlu0 %595
  %597 = vrot.lane.b32.xlu0 %v404, 64
  %v598 = vpop.permute.xlu0 %597
  %599 = vrot.lane.b32.xlu0 %v405, 64
  %v600 = vpop.permute.xlu0 %599
  %601 = vrot.lane.b32.xlu0 %v406, 64
  %v602 = vpop.permute.xlu0 %601
  %603 = vrot.lane.b32.xlu0 %v407, 64
  %v604 = vpop.permute.xlu0 %603
  %605 = vrot.lane.b32.xlu0 %v408, 64
  %v606 = vpop.permute.xlu0 %605
  %607 = vrot.lane.b32.xlu0 %v409, 64
  %v608 = vpop.permute.xlu0 %607
  %609 = vrot.lane.b32.xlu0 %v410, 64
  %v610 = vpop.permute.xlu0 %609
  %611 = vrot.lane.b32.xlu0 %v411, 64
  %v612 = vpop.permute.xlu0 %611
  %613 = vrot.lane.b32.xlu0 %v412, 64
  %v614 = vpop.permute.xlu0 %613
  %615 = vrot.lane.b32.xlu0 %v413, 64
  %v616 = vpop.permute.xlu0 %615
  %617 = vrot.lane.b32.xlu0 %v414, 64
  %v618 = vpop.permute.xlu0 %617
  %619 = vrot.lane.b32.xlu0 %v415, 64
  %v620 = vpop.permute.xlu0 %619
  %621 = vrot.lane.b32.xlu0 %v416, 64
  %v622 = vpop.permute.xlu0 %621
  %623 = vrot.lane.b32.xlu0 %v417, 64
  %v624 = vpop.permute.xlu0 %623
  %625 = vrot.lane.b32.xlu0 %v418, 64
  %v626 = vpop.permute.xlu0 %625
  %627 = vrot.lane.b32.xlu0 %v419, 64
  %v628 = vpop.permute.xlu0 %627
  %629 = vrot.lane.b32.xlu0 %v420, 64
  %v630 = vpop.permute.xlu0 %629
  %631 = vrot.lane.b32.xlu0 %v421, 64
  %v632 = vpop.permute.xlu0 %631
  %633 = vrot.lane.b32.xlu0 %v422, 64
  %v634 = vpop.permute.xlu0 %633
  %635 = vrot.lane.b32.xlu0 %v423, 64
  %v636 = vpop.permute.xlu0 %635
  %637 = vrot.lane.b32.xlu0 %v424, 64
  %v638 = vpop.permute.xlu0 %637
  %639 = vrot.lane.b32.xlu0 %v425, 64
  %v640 = vpop.permute.xlu0 %639
  %641 = vrot.lane.b32.xlu0 %v426, 64
  %v642 = vpop.permute.xlu0 %641
  %643 = vrot.lane.b32.xlu0 %v427, 64
  %v644 = vpop.permute.xlu0 %643
  %645 = vrot.lane.b32.xlu0 %v428, 64
  %v646 = vpop.permute.xlu0 %645
  %647 = vrot.lane.b32.xlu0 %v429, 64
  %v648 = vpop.permute.xlu0 %647
  %649 = vrot.lane.b32.xlu0 %v430, 64
  %v650 = vpop.permute.xlu0 %649
  %651 = vrot.lane.b32.xlu0 %v431, 64
  %v652 = vpop.permute.xlu0 %651
  %653 = vrot.lane.b32.xlu0 %v432, 64
  %v654 = vpop.permute.xlu0 %653
  %655 = vrot.lane.b32.xlu0 %v433, 64
  %v656 = vpop.permute.xlu0 %655
  %657 = vrot.lane.b32.xlu0 %v434, 64
  %v658 = vpop.permute.xlu0 %657
  %659 = vrot.lane.b32.xlu0 %v435, 64
  %v660 = vpop.permute.xlu0 %659
  %661 = vrot.lane.b32.xlu0 %v436, 64
  %v662 = vpop.permute.xlu0 %661
  %663 = vrot.lane.b32.xlu0 %v437, 64
  %v664 = vpop.permute.xlu0 %663
  %665 = vrot.lane.b32.xlu0 %v438, 64
  %v666 = vpop.permute.xlu0 %665
  %667 = vrot.lane.b32.xlu0 %v439, 64
  %v668 = vpop.permute.xlu0 %667
  %669 = vrot.lane.b32.xlu0 %v440, 64
  %v670 = vpop.permute.xlu0 %669
  %671 = vrot.lane.b32.xlu0 %v441, 64
  %v672 = vpop.permute.xlu0 %671
  %673 = vrot.lane.b32.xlu0 %v442, 64
  %v674 = vpop.permute.xlu0 %673
  %675 = vrot.lane.b32.xlu0 %v443, 64
  %v676 = vpop.permute.xlu0 %675
  %677 = vrot.lane.b32.xlu0 %v444, 64
  %v678 = vpop.permute.xlu0 %677
  %679 = vrot.lane.b32.xlu0 %v445, 64
  %v680 = vpop.permute.xlu0 %679
  %681 = vrot.lane.b32.xlu0 %v446, 64
  %v682 = vpop.permute.xlu0 %681
  %683 = vrot.lane.b32.xlu0 %v455, 64
  %v684 = vpop.permute.xlu0 %683
  %685 = vrot.lane.b32.xlu0 %v456, 64
  %v686 = vpop.permute.xlu0 %685
  %687 = vrot.lane.b32.xlu0 %v577, 64
  %v688 = vpop.permute.xlu0 %687
  %689 = vrot.lane.b32.xlu0 %v578, 64
  %v690 = vpop.permute.xlu0 %689
  %v695 = vunpack.c.l.b16 %v159
  %v696 = vunpack.c.l.b16 %v160
  %v697 = vunpack.c.l.b16 %v161
  %v698 = vunpack.c.l.b16 %v162
  %v699 = vpack.c.b16 %v696, %v695
  %v700 = vpack.c.b16 %v698, %v697
  %701 = vrot.lane.b32.xlu0 %v397, 96
  %v702 = vpop.permute.xlu0 %701
  %703 = vrot.lane.b32.xlu0 %v398, 96
  %v704 = vpop.permute.xlu0 %703
  %705 = vrot.lane.b32.xlu0 %v399, 96
  %v706 = vpop.permute.xlu0 %705
  %707 = vrot.lane.b32.xlu0 %v400, 96
  %v708 = vpop.permute.xlu0 %707
  %709 = vrot.lane.b32.xlu0 %v401, 96
  %v710 = vpop.permute.xlu0 %709
  %711 = vrot.lane.b32.xlu0 %v402, 96
  %v712 = vpop.permute.xlu0 %711
  %713 = vrot.lane.b32.xlu0 %v403, 96
  %v714 = vpop.permute.xlu0 %713
  %715 = vrot.lane.b32.xlu0 %v404, 96
  %v716 = vpop.permute.xlu0 %715
  %717 = vrot.lane.b32.xlu0 %v405, 96
  %v718 = vpop.permute.xlu0 %717
  %719 = vrot.lane.b32.xlu0 %v406, 96
  %v720 = vpop.permute.xlu0 %719
  %721 = vrot.lane.b32.xlu0 %v407, 96
  %v722 = vpop.permute.xlu0 %721
  %723 = vrot.lane.b32.xlu0 %v408, 96
  %v724 = vpop.permute.xlu0 %723
  %725 = vrot.lane.b32.xlu0 %v409, 96
  %v726 = vpop.permute.xlu0 %725
  %727 = vrot.lane.b32.xlu0 %v410, 96
  %v728 = vpop.permute.xlu0 %727
  %729 = vrot.lane.b32.xlu0 %v411, 96
  %v730 = vpop.permute.xlu0 %729
  %731 = vrot.lane.b32.xlu0 %v412, 96
  %v732 = vpop.permute.xlu0 %731
  %733 = vrot.lane.b32.xlu0 %v413, 96
  %v734 = vpop.permute.xlu0 %733
  %735 = vrot.lane.b32.xlu0 %v414, 96
  %v736 = vpop.permute.xlu0 %735
  %737 = vrot.lane.b32.xlu0 %v415, 96
  %v738 = vpop.permute.xlu0 %737
  %739 = vrot.lane.b32.xlu0 %v416, 96
  %v740 = vpop.permute.xlu0 %739
  %741 = vrot.lane.b32.xlu0 %v417, 96
  %v742 = vpop.permute.xlu0 %741
  %743 = vrot.lane.b32.xlu0 %v418, 96
  %v744 = vpop.permute.xlu0 %743
  %745 = vrot.lane.b32.xlu0 %v419, 96
  %v746 = vpop.permute.xlu0 %745
  %747 = vrot.lane.b32.xlu0 %v420, 96
  %v748 = vpop.permute.xlu0 %747
  %749 = vrot.lane.b32.xlu0 %v421, 96
  %v750 = vpop.permute.xlu0 %749
  %751 = vrot.lane.b32.xlu0 %v422, 96
  %v752 = vpop.permute.xlu0 %751
  %753 = vrot.lane.b32.xlu0 %v423, 96
  %v754 = vpop.permute.xlu0 %753
  %755 = vrot.lane.b32.xlu0 %v424, 96
  %v756 = vpop.permute.xlu0 %755
  %757 = vrot.lane.b32.xlu0 %v425, 96
  %v758 = vpop.permute.xlu0 %757
  %759 = vrot.lane.b32.xlu0 %v426, 96
  %v760 = vpop.permute.xlu0 %759
  %761 = vrot.lane.b32.xlu0 %v427, 96
  %v762 = vpop.permute.xlu0 %761
  %763 = vrot.lane.b32.xlu0 %v428, 96
  %v764 = vpop.permute.xlu0 %763
  %765 = vrot.lane.b32.xlu0 %v429, 96
  %v766 = vpop.permute.xlu0 %765
  %767 = vrot.lane.b32.xlu0 %v430, 96
  %v768 = vpop.permute.xlu0 %767
  %769 = vrot.lane.b32.xlu0 %v431, 96
  %v770 = vpop.permute.xlu0 %769
  %771 = vrot.lane.b32.xlu0 %v432, 96
  %v772 = vpop.permute.xlu0 %771
  %773 = vrot.lane.b32.xlu0 %v433, 96
  %v774 = vpop.permute.xlu0 %773
  %775 = vrot.lane.b32.xlu0 %v434, 96
  %v776 = vpop.permute.xlu0 %775
  %777 = vrot.lane.b32.xlu0 %v435, 96
  %v778 = vpop.permute.xlu0 %777
  %779 = vrot.lane.b32.xlu0 %v436, 96
  %v780 = vpop.permute.xlu0 %779
  %781 = vrot.lane.b32.xlu0 %v437, 96
  %v782 = vpop.permute.xlu0 %781
  %783 = vrot.lane.b32.xlu0 %v438, 96
  %v784 = vpop.permute.xlu0 %783
  %785 = vrot.lane.b32.xlu0 %v439, 96
  %v786 = vpop.permute.xlu0 %785
  %787 = vrot.lane.b32.xlu0 %v440, 96
  %v788 = vpop.permute.xlu0 %787
  %789 = vrot.lane.b32.xlu0 %v441, 96
  %v790 = vpop.permute.xlu0 %789
  %791 = vrot.lane.b32.xlu0 %v442, 96
  %v792 = vpop.permute.xlu0 %791
  %793 = vrot.lane.b32.xlu0 %v443, 96
  %v794 = vpop.permute.xlu0 %793
  %795 = vrot.lane.b32.xlu0 %v444, 96
  %v796 = vpop.permute.xlu0 %795
  %797 = vrot.lane.b32.xlu0 %v445, 96
  %v798 = vpop.permute.xlu0 %797
  %799 = vrot.lane.b32.xlu0 %v446, 96
  %v800 = vpop.permute.xlu0 %799
  %801 = vrot.lane.b32.xlu0 %v455, 96
  %v802 = vpop.permute.xlu0 %801
  %803 = vrot.lane.b32.xlu0 %v456, 96
  %v804 = vpop.permute.xlu0 %803
  %805 = vrot.lane.b32.xlu0 %v577, 96
  %v806 = vpop.permute.xlu0 %805
  %807 = vrot.lane.b32.xlu0 %v578, 96
  %v808 = vpop.permute.xlu0 %807
  %809 = vrot.lane.b32.xlu0 %v699, 96
  %v810 = vpop.permute.xlu0 %809
  %811 = vrot.lane.b32.xlu0 %v700, 96
  %v812 = vpop.permute.xlu0 %811
  %v817 = vunpack.c.l.b16 %v163
  %v818 = vunpack.c.l.b16 %v164
  %v819 = vunpack.c.l.b16 %v165
  %v820 = vunpack.c.l.b16 %v166
  %v821 = vpack.c.b16 %v818, %v817
  %v822 = vpack.c.b16 %v820, %v819
  %vm823 = vcmask 261120
  %v826 = vsel %vm823, %v391, %v458
  %v829 = vsel %vm823, %v392, %v460
  %v832 = vsel %vm823, %v393, %v462
  %v835 = vsel %vm823, %v394, %v464
  %v838 = vsel %vm823, %v395, %v466
  %v841 = vsel %vm823, %v396, %v468
  %v844 = vsel %vm823, %v397, %v470
  %v847 = vsel %vm823, %v398, %v472
  %v850 = vsel %vm823, %v399, %v474
  %v853 = vsel %vm823, %v400, %v476
  %v856 = vsel %vm823, %v401, %v478
  %v859 = vsel %vm823, %v402, %v480
  %v862 = vsel %vm823, %v403, %v482
  %v865 = vsel %vm823, %v404, %v484
  %v868 = vsel %vm823, %v405, %v486
  %v871 = vsel %vm823, %v406, %v488
  %v874 = vsel %vm823, %v407, %v490
  %v877 = vsel %vm823, %v408, %v492
  %v880 = vsel %vm823, %v409, %v494
  %v883 = vsel %vm823, %v410, %v496
  %v886 = vsel %vm823, %v411, %v498
  %v889 = vsel %vm823, %v412, %v500
  %v892 = vsel %vm823, %v413, %v502
  %v895 = vsel %vm823, %v414, %v504
  %v898 = vsel %vm823, %v415, %v506
  %v901 = vsel %vm823, %v416, %v508
  %v904 = vsel %vm823, %v417, %v510
  %v907 = vsel %vm823, %v418, %v512
  %v910 = vsel %vm823, %v419, %v514
  %v913 = vsel %vm823, %v420, %v516
  %v916 = vsel %vm823, %v421, %v518
  %v919 = vsel %vm823, %v422, %v520
  %v922 = vsel %vm823, %v423, %v522
  %v925 = vsel %vm823, %v424, %v524
  %v928 = vsel %vm823, %v425, %v526
  %v931 = vsel %vm823, %v426, %v528
  %v934 = vsel %vm823, %v427, %v530
  %v937 = vsel %vm823, %v428, %v532
  %v940 = vsel %vm823, %v429, %v534
  %v943 = vsel %vm823, %v430, %v536
  %v946 = vsel %vm823, %v431, %v538
  %v949 = vsel %vm823, %v432, %v540
  %v952 = vsel %vm823, %v433, %v542
  %v955 = vsel %vm823, %v434, %v544
  %v958 = vsel %vm823, %v435, %v546
  %v961 = vsel %vm823, %v436, %v548
  %v964 = vsel %vm823, %v437, %v550
  %v967 = vsel %vm823, %v438, %v552
  %v970 = vsel %vm823, %v439, %v554
  %v973 = vsel %vm823, %v440, %v556
  %v976 = vsel %vm823, %v441, %v558
  %v979 = vsel %vm823, %v442, %v560
  %v982 = vsel %vm823, %v443, %v562
  %v985 = vsel %vm823, %v444, %v564
  %v988 = vsel %vm823, %v445, %v566
  %v991 = vsel %vm823, %v446, %v568
  %vm992 = vcmask 523264
  %v994 = vsel %vm992, %v826, %v580
  %v996 = vsel %vm992, %v829, %v582
  %v998 = vsel %vm992, %v832, %v584
  %v1000 = vsel %vm992, %v835, %v586
  %v1002 = vsel %vm992, %v838, %v588
  %v1004 = vsel %vm992, %v841, %v590
  %v1006 = vsel %vm992, %v844, %v592
  %v1008 = vsel %vm992, %v847, %v594
  %v1010 = vsel %vm992, %v850, %v596
  %v1012 = vsel %vm992, %v853, %v598
  %v1014 = vsel %vm992, %v856, %v600
  %v1016 = vsel %vm992, %v859, %v602
  %v1018 = vsel %vm992, %v862, %v604
  %v1020 = vsel %vm992, %v865, %v606
  %v1022 = vsel %vm992, %v868, %v608
  %v1024 = vsel %vm992, %v871, %v610
  %v1026 = vsel %vm992, %v874, %v612
  %v1028 = vsel %vm992, %v877, %v614
  %v1030 = vsel %vm992, %v880, %v616
  %v1032 = vsel %vm992, %v883, %v618
  %v1034 = vsel %vm992, %v886, %v620
  %v1036 = vsel %vm992, %v889, %v622
  %v1038 = vsel %vm992, %v892, %v624
  %v1040 = vsel %vm992, %v895, %v626
  %v1042 = vsel %vm992, %v898, %v628
  %v1044 = vsel %vm992, %v901, %v630
  %v1046 = vsel %vm992, %v904, %v632
  %v1048 = vsel %vm992, %v907, %v634
  %v1050 = vsel %vm992, %v910, %v636
  %v1052 = vsel %vm992, %v913, %v638
  %v1054 = vsel %vm992, %v916, %v640
  %v1056 = vsel %vm992, %v919, %v642
  %v1058 = vsel %vm992, %v922, %v644
  %v1060 = vsel %vm992, %v925, %v646
  %v1062 = vsel %vm992, %v928, %v648
  %v1064 = vsel %vm992, %v931, %v650
  %v1066 = vsel %vm992, %v934, %v652
  %v1068 = vsel %vm992, %v937, %v654
  %v1070 = vsel %vm992, %v940, %v656
  %v1072 = vsel %vm992, %v943, %v658
  %v1074 = vsel %vm992, %v946, %v660
  %v1076 = vsel %vm992, %v949, %v662
  %v1078 = vsel %vm992, %v952, %v664
  %v1080 = vsel %vm992, %v955, %v666
  %v1082 = vsel %vm992, %v958, %v668
  %v1084 = vsel %vm992, %v961, %v670
  %v1086 = vsel %vm992, %v964, %v672
  %v1088 = vsel %vm992, %v967, %v674
  %v1090 = vsel %vm992, %v970, %v676
  %v1092 = vsel %vm992, %v973, %v678
  %v1094 = vsel %vm992, %v976, %v680
  %v1096 = vsel %vm992, %v979, %v682
  %v1098 = vsel %vm992, %v982, %v684
  %v1100 = vsel %vm992, %v985, %v686
  %v1102 = vsel %vm992, %v988, %v688
  %v1104 = vsel %vm992, %v991, %v690
  %vm1105 = vcmask 785408
  %v1107 = vsel %vm1105, %v994, %v702
  %v1110 = vsel %vm1105, %v996, %v704
  %v1113 = vsel %vm1105, %v998, %v706
  %v1116 = vsel %vm1105, %v1000, %v708
  %v1119 = vsel %vm1105, %v1002, %v710
  %v1122 = vsel %vm1105, %v1004, %v712
  %v1125 = vsel %vm1105, %v1006, %v714
  %v1128 = vsel %vm1105, %v1008, %v716
  %v1131 = vsel %vm1105, %v1010, %v718
  %v1134 = vsel %vm1105, %v1012, %v720
  %v1137 = vsel %vm1105, %v1014, %v722
  %v1140 = vsel %vm1105, %v1016, %v724
  %v1143 = vsel %vm1105, %v1018, %v726
  %v1146 = vsel %vm1105, %v1020, %v728
  %v1149 = vsel %vm1105, %v1022, %v730
  %v1152 = vsel %vm1105, %v1024, %v732
  %v1155 = vsel %vm1105, %v1026, %v734
  %v1158 = vsel %vm1105, %v1028, %v736
  %v1161 = vsel %vm1105, %v1030, %v738
  %v1164 = vsel %vm1105, %v1032, %v740
  %v1167 = vsel %vm1105, %v1034, %v742
  %v1170 = vsel %vm1105, %v1036, %v744
  %v1173 = vsel %vm1105, %v1038, %v746
  %v1176 = vsel %vm1105, %v1040, %v748
  %v1179 = vsel %vm1105, %v1042, %v750
  %v1182 = vsel %vm1105, %v1044, %v752
  %v1185 = vsel %vm1105, %v1046, %v754
  %v1188 = vsel %vm1105, %v1048, %v756
  %v1191 = vsel %vm1105, %v1050, %v758
  %v1194 = vsel %vm1105, %v1052, %v760
  %v1197 = vsel %vm1105, %v1054, %v762
  %v1200 = vsel %vm1105, %v1056, %v764
  %v1203 = vsel %vm1105, %v1058, %v766
  %v1206 = vsel %vm1105, %v1060, %v768
  %v1209 = vsel %vm1105, %v1062, %v770
  %v1212 = vsel %vm1105, %v1064, %v772
  %v1215 = vsel %vm1105, %v1066, %v774
  %v1218 = vsel %vm1105, %v1068, %v776
  %v1221 = vsel %vm1105, %v1070, %v778
  %v1224 = vsel %vm1105, %v1072, %v780
  %v1227 = vsel %vm1105, %v1074, %v782
  %v1230 = vsel %vm1105, %v1076, %v784
  %v1233 = vsel %vm1105, %v1078, %v786
  %v1236 = vsel %vm1105, %v1080, %v788
  %v1239 = vsel %vm1105, %v1082, %v790
  %v1242 = vsel %vm1105, %v1084, %v792
  %v1245 = vsel %vm1105, %v1086, %v794
  %v1248 = vsel %vm1105, %v1088, %v796
  %v1251 = vsel %vm1105, %v1090, %v798
  %v1254 = vsel %vm1105, %v1092, %v800
  %v1257 = vsel %vm1105, %v1094, %v802
  %v1260 = vsel %vm1105, %v1096, %v804
  %v1263 = vsel %vm1105, %v1098, %v806
  %v1266 = vsel %vm1105, %v1100, %v808
  %v1269 = vsel %vm1105, %v1102, %v810
  %v1272 = vsel %vm1105, %v1104, %v812
  %v1274 = vld [vmem:[%s1] sm:$0xff]
  %v1275 = vld [vmem:[%s1 + $0x8] sm:$0xff]
  %v1276 = vld [vmem:[%s1 + $0x10] sm:$0xff]
  %v1277 = vld [vmem:[%s1 + $0x18] sm:$0xff]
  %v1278 = vld [vmem:[%s1 + $0x20] sm:$0xff]
  %v1279 = vld [vmem:[%s1 + $0x28] sm:$0xff]
  %v1280 = vld [vmem:[%s1 + $0x30] sm:$0xff]
  %v1281 = vld [vmem:[%s1 + $0x38] sm:$0xff]
  %v1282 = vld [vmem:[%s1 + $0x40] sm:$0xff]
  %v1283 = vld [vmem:[%s1 + $0x48] sm:$0xff]
  %v1284 = vld [vmem:[%s1 + $0x50] sm:$0xff]
  %v1285 = vld [vmem:[%s1 + $0x58] sm:$0xff]
  %v1286 = vld [vmem:[%s1 + $0x60] sm:$0xff]
  %v1287 = vld [vmem:[%s1 + $0x68] sm:$0xff]
  %v1288 = vld [vmem:[%s1 + $0x70] sm:$0xff]
  %v1289 = vld [vmem:[%s1 + $0x78] sm:$0xff]
  %v1290 = vld [vmem:[%s1 + $0x80] sm:$0xff]
  %v1291 = vld [vmem:[%s1 + $0x88] sm:$0xff]
  %v1292 = vld [vmem:[%s1 + $0x90] sm:$0xff]
  %v1293 = vld [vmem:[%s1 + $0x98] sm:$0xff]
  %v1294 = vld [vmem:[%s2] sm:$0x3]
  %v1296 = vlaneseq
  %v1297 = vshrl.u32 %v1296, 7
  %v1298 = vsub.s32 0, %v1297
  %v1299 = vrot.slane %v1294, %v1298
  %v1300 = vlaneseq
  %v1301 = vshrl.u32 %v1300, 7
  %v1302 = vsub.s32 1, %v1301
  %v1303 = vrot.slane %v1294, %v1302
  %v1326 = vunpack.c.l.b16 %v1274
  %v1327 = vunpack.c.h.b16 %v1274
  %v1328 = vunpack.c.l.b16 %v1275
  %v1329 = vunpack.c.h.b16 %v1275
  %v1330 = vunpack.c.l.b16 %v1276
  %v1331 = vunpack.c.h.b16 %v1276
  %v1332 = vunpack.c.l.b16 %v1277
  %v1333 = vunpack.c.h.b16 %v1277
  %v1334 = vunpack.c.l.b16 %v1278
  %v1335 = vunpack.c.h.b16 %v1278
  %v1336 = vunpack.c.l.b16 %v1279
  %v1337 = vunpack.c.h.b16 %v1279
  %v1338 = vunpack.c.l.b16 %v1280
  %v1339 = vunpack.c.h.b16 %v1280
  %v1340 = vunpack.c.l.b16 %v1281
  %v1341 = vunpack.c.h.b16 %v1281
  %v1342 = vunpack.c.l.b16 %v1282
  %v1343 = vunpack.c.h.b16 %v1282
  %v1344 = vunpack.c.l.b16 %v1283
  %v1345 = vunpack.c.h.b16 %v1283
  %v1346 = vunpack.c.l.b16 %v1284
  %v1347 = vunpack.c.h.b16 %v1284
  %v1348 = vunpack.c.l.b16 %v1285
  %v1349 = vunpack.c.h.b16 %v1285
  %v1350 = vunpack.c.l.b16 %v1286
  %v1351 = vunpack.c.h.b16 %v1286
  %v1352 = vunpack.c.l.b16 %v1287
  %v1353 = vunpack.c.h.b16 %v1287
  %v1354 = vunpack.c.l.b16 %v1288
  %v1355 = vunpack.c.h.b16 %v1288
  %v1356 = vunpack.c.l.b16 %v1289
  %v1357 = vunpack.c.h.b16 %v1289
  %v1358 = vunpack.c.l.b16 %v1290
  %v1359 = vunpack.c.h.b16 %v1290
  %v1360 = vunpack.c.l.b16 %v1291
  %v1361 = vunpack.c.h.b16 %v1291
  %v1362 = vunpack.c.l.b16 %v1292
  %v1363 = vunpack.c.h.b16 %v1292
  %v1364 = vunpack.c.l.b16 %v1293
  %v1365 = vunpack.c.h.b16 %v1293
  %v1366 = vpack.c.b16 %v1328, %v1326
  %v1367 = vpack.c.b16 %v1329, %v1327
  %v1368 = vpack.c.b16 %v1332, %v1330
  %v1369 = vpack.c.b16 %v1333, %v1331
  %v1370 = vpack.c.b16 %v1336, %v1334
  %v1371 = vpack.c.b16 %v1337, %v1335
  %v1372 = vpack.c.b16 %v1340, %v1338
  %v1373 = vpack.c.b16 %v1341, %v1339
  %v1374 = vpack.c.b16 %v1344, %v1342
  %v1375 = vpack.c.b16 %v1345, %v1343
  %v1376 = vpack.c.b16 %v1348, %v1346
  %v1377 = vpack.c.b16 %v1349, %v1347
  %v1378 = vpack.c.b16 %v1352, %v1350
  %v1379 = vpack.c.b16 %v1353, %v1351
  %v1380 = vpack.c.b16 %v1356, %v1354
  %v1381 = vpack.c.b16 %v1357, %v1355
  %v1382 = vpack.c.b16 %v1360, %v1358
  %v1383 = vpack.c.b16 %v1361, %v1359
  %v1384 = vpack.c.b16 %v1364, %v1362
  %v1385 = vpack.c.b16 %v1365, %v1363
  %v1406 = vsel %vm823, %v399, 0
  %v1408 = vsel %vm823, %v400, 0
  %v1410 = vsel %vm823, %v401, 0
  %v1412 = vsel %vm823, %v402, 0
  %v1414 = vsel %vm823, %v403, 0
  %v1416 = vsel %vm823, %v404, 0
  %v1418 = vsel %vm823, %v405, 0
  %v1420 = vsel %vm823, %v406, 0
  %v1422 = vsel %vm823, %v407, 0
  %v1424 = vsel %vm823, %v408, 0
  %v1426 = vsel %vm823, %v409, 0
  %v1428 = vsel %vm823, %v410, 0
  %v1430 = vsel %vm823, %v411, 0
  %v1432 = vsel %vm823, %v412, 0
  %v1434 = vsel %vm823, %v413, 0
  %v1436 = vsel %vm823, %v414, 0
  %v1438 = vsel %vm823, %v415, 0
  %v1440 = vsel %vm823, %v416, 0
  %v1442 = vsel %vm823, %v417, 0
  %v1444 = vsel %vm823, %v418, 0
  %v1446 = vsel %vm823, %v419, 0
  %v1448 = vsel %vm823, %v420, 0
  %v1450 = vsel %vm823, %v421, 0
  %v1452 = vsel %vm823, %v422, 0
  %v1454 = vsel %vm823, %v423, 0
  %v1456 = vsel %vm823, %v424, 0
  %v1458 = vsel %vm823, %v425, 0
  %v1460 = vsel %vm823, %v426, 0
  %v1462 = vsel %vm823, %v427, 0
  %v1464 = vsel %vm823, %v428, 0
  %v1466 = vsel %vm823, %v429, 0
  %v1468 = vsel %vm823, %v430, 0
  %v1470 = vsel %vm823, %v431, 0
  %v1472 = vsel %vm823, %v432, 0
  %v1474 = vsel %vm823, %v433, 0
  %v1476 = vsel %vm823, %v434, 0
  %v1478 = vsel %vm823, %v435, 0
  %v1480 = vsel %vm823, %v436, 0
  %v1482 = vsel %vm823, %v437, 0
  %v1484 = vsel %vm823, %v438, 0
  %v1486 = vsel %vm823, %v439, 0
  %v1488 = vsel %vm823, %v440, 0
  %v1490 = vsel %vm823, %v441, 0
  %v1492 = vsel %vm823, %v442, 0
  %v1494 = vsel %vm823, %v443, 0
  %v1496 = vsel %vm823, %v444, 0
  %v1498 = vsel %vm823, %v445, 0
  %v1500 = vsel %vm823, %v446, 0
  %v1503 = vsel %vm823, %v455, 0
  %v1506 = vsel %vm823, %v456, 0
  %v1509 = vsel %vm823, %v577, 0
  %v1512 = vsel %vm823, %v578, 0
  %v1515 = vsel %vm823, %v699, 0
  %v1518 = vsel %vm823, %v700, 0
  %v1521 = vsel %vm823, %v821, 0
  %v1524 = vsel %vm823, %v822, 0
  %1526 = vmatprep.subr.bf16.mxu0 %v1381
  %1527 = vmatpush1.bf16.msra.mxu0 %v1380
  %1528 = vmatprep.subr.bf16.mxu0 %v1379
  %1529 = vmatpush1.bf16.msra.mxu0 %v1378
  %1530 = vmatprep.subr.bf16.mxu0 %v1377
  %1531 = vmatpush1.bf16.msra.mxu0 %v1376
  %1532 = vmatprep.subr.bf16.mxu0 %v1375
  %1533 = vmatpush1.bf16.msra.mxu0 %v1374
  %1534 = vmatprep.subr.bf16.mxu0 %v1373
  %1535 = vmatpush1.bf16.msra.mxu0 %v1372
  %1536 = vmatprep.subr.bf16.mxu0 %v1371
  %1537 = vmatpush1.bf16.msra.mxu0 %v1370
  %1538 = vmatprep.subr.bf16.mxu0 %v1369
  %1539 = vmatpush1.bf16.msra.mxu0 %v1368
  %1540 = vmatprep.subr.bf16.mxu0 %v1367
  %1541 = vmatpush1.bf16.msra.mxu0 %v1366
  %1542 = vmatprep.subr.bf16.mxu0 0
  %1543 = vmatpush2.bf16.msra.mxu0 0
  %1544 = vmatprep.subr.bf16.mxu0 0
  %1545 = vmatpush2.bf16.msra.mxu0 0
  %1546 = vmatprep.subr.bf16.mxu0 0
  %1547 = vmatpush2.bf16.msra.mxu0 0
  %1548 = vmatprep.subr.bf16.mxu0 0
  %1549 = vmatpush2.bf16.msra.mxu0 0
  %1550 = vmatprep.subr.bf16.mxu0 0
  %1551 = vmatpush2.bf16.msra.mxu0 0
  %1552 = vmatprep.subr.bf16.mxu0 0
  %1553 = vmatpush2.bf16.msra.mxu0 0
  %1554 = vmatprep.subr.bf16.mxu0 %v1385
  %1555 = vmatpush2.bf16.msra.mxu0 %v1384
  %1556 = vmatprep.subr.bf16.mxu0 %v1383
  %1557 = vmatpush2.bf16.msra.mxu0 %v1382
  %1558 = vmatprep.mubr.bf16.mxu0 %v1406
  %1559 = vmatmul.mubr.bf16.gmra.mxu0 %v1107
  %v1560 = vpop.f32.mrf.mxu0
  %v1561 = vadd.f32 %v1299, %v1560
  %v1562 = vpop.f32.mrf.mxu0
  %v1563 = vadd.f32 %v1303, %v1562
  %v1564 = vpop.f32.mrf.mxu0
  %v1565 = vadd.f32 %v1299, %v1564
  %v1566 = vpop.f32.mrf.mxu0
  %v1567 = vadd.f32 %v1303, %v1566
  %1568 = vmatprep.mubr.bf16.mxu0 %v1408
  %1569 = vmatmul.mubr.bf16.gmra.mxu0 %v1110
  %v1570 = vpop.f32.mrf.mxu0
  %v1571 = vadd.f32 %v1299, %v1570
  %v1572 = vpop.f32.mrf.mxu0
  %v1573 = vadd.f32 %v1303, %v1572
  %v1574 = vpop.f32.mrf.mxu0
  %v1575 = vadd.f32 %v1299, %v1574
  %v1576 = vpop.f32.mrf.mxu0
  %v1577 = vadd.f32 %v1303, %v1576
  %1578 = vmatprep.mubr.bf16.mxu0 %v1410
  %1579 = vmatmul.mubr.bf16.gmra.mxu0 %v1113
  %v1580 = vpop.f32.mrf.mxu0
  %v1581 = vadd.f32 %v1299, %v1580
  %v1582 = vpop.f32.mrf.mxu0
  %v1583 = vadd.f32 %v1303, %v1582
  %v1584 = vpop.f32.mrf.mxu0
  %v1585 = vadd.f32 %v1299, %v1584
  %v1586 = vpop.f32.mrf.mxu0
  %v1587 = vadd.f32 %v1303, %v1586
  %1588 = vmatprep.mubr.bf16.mxu0 %v1412
  %1589 = vmatmul.mubr.bf16.gmra.mxu0 %v1116
  %v1590 = vpop.f32.mrf.mxu0
  %v1591 = vadd.f32 %v1299, %v1590
  %v1592 = vpop.f32.mrf.mxu0
  %v1593 = vadd.f32 %v1303, %v1592
  %v1594 = vpop.f32.mrf.mxu0
  %v1595 = vadd.f32 %v1299, %v1594
  %v1596 = vpop.f32.mrf.mxu0
  %v1597 = vadd.f32 %v1303, %v1596
  %1598 = vmatprep.mubr.bf16.mxu0 %v1414
  %1599 = vmatmul.mubr.bf16.gmra.mxu0 %v1119
  %v1600 = vpop.f32.mrf.mxu0
  %v1601 = vadd.f32 %v1299, %v1600
  %v1602 = vpop.f32.mrf.mxu0
  %v1603 = vadd.f32 %v1303, %v1602
  %v1604 = vpop.f32.mrf.mxu0
  %v1605 = vadd.f32 %v1299, %v1604
  %v1606 = vpop.f32.mrf.mxu0
  %v1607 = vadd.f32 %v1303, %v1606
  %1608 = vmatprep.mubr.bf16.mxu0 %v1416
  %1609 = vmatmul.mubr.bf16.gmra.mxu0 %v1122
  %v1610 = vpop.f32.mrf.mxu0
  %v1611 = vadd.f32 %v1299, %v1610
  %v1612 = vpop.f32.mrf.mxu0
  %v1613 = vadd.f32 %v1303, %v1612
  %v1614 = vpop.f32.mrf.mxu0
  %v1615 = vadd.f32 %v1299, %v1614
  %v1616 = vpop.f32.mrf.mxu0
  %v1617 = vadd.f32 %v1303, %v1616
  %1618 = vmatprep.mubr.bf16.mxu0 %v1418
  %1619 = vmatmul.mubr.bf16.gmra.mxu0 %v1125
  %v1620 = vpop.f32.mrf.mxu0
  %v1621 = vadd.f32 %v1299, %v1620
  %v1622 = vpop.f32.mrf.mxu0
  %v1623 = vadd.f32 %v1303, %v1622
  %v1624 = vpop.f32.mrf.mxu0
  %v1625 = vadd.f32 %v1299, %v1624
  %v1626 = vpop.f32.mrf.mxu0
  %v1627 = vadd.f32 %v1303, %v1626
  %1628 = vmatprep.mubr.bf16.mxu0 %v1420
  %1629 = vmatmul.mubr.bf16.gmra.mxu0 %v1128
  %v1630 = vpop.f32.mrf.mxu0
  %v1631 = vadd.f32 %v1299, %v1630
  %v1632 = vpop.f32.mrf.mxu0
  %v1633 = vadd.f32 %v1303, %v1632
  %v1634 = vpop.f32.mrf.mxu0
  %v1635 = vadd.f32 %v1299, %v1634
  %v1636 = vpop.f32.mrf.mxu0
  %v1637 = vadd.f32 %v1303, %v1636
  %1638 = vmatprep.mubr.bf16.mxu0 %v1422
  %1639 = vmatmul.mubr.bf16.gmra.mxu0 %v1131
  %v1640 = vpop.f32.mrf.mxu0
  %v1641 = vadd.f32 %v1299, %v1640
  %v1642 = vpop.f32.mrf.mxu0
  %v1643 = vadd.f32 %v1303, %v1642
  %v1644 = vpop.f32.mrf.mxu0
  %v1645 = vadd.f32 %v1299, %v1644
  %v1646 = vpop.f32.mrf.mxu0
  %v1647 = vadd.f32 %v1303, %v1646
  %1648 = vmatprep.mubr.bf16.mxu0 %v1424
  %1649 = vmatmul.mubr.bf16.gmra.mxu0 %v1134
  %v1650 = vpop.f32.mrf.mxu0
  %v1651 = vadd.f32 %v1299, %v1650
  %v1652 = vpop.f32.mrf.mxu0
  %v1653 = vadd.f32 %v1303, %v1652
  %v1654 = vpop.f32.mrf.mxu0
  %v1655 = vadd.f32 %v1299, %v1654
  %v1656 = vpop.f32.mrf.mxu0
  %v1657 = vadd.f32 %v1303, %v1656
  %1658 = vmatprep.mubr.bf16.mxu0 %v1426
  %1659 = vmatmul.mubr.bf16.gmra.mxu0 %v1137
  %v1660 = vpop.f32.mrf.mxu0
  %v1661 = vadd.f32 %v1299, %v1660
  %v1662 = vpop.f32.mrf.mxu0
  %v1663 = vadd.f32 %v1303, %v1662
  %v1664 = vpop.f32.mrf.mxu0
  %v1665 = vadd.f32 %v1299, %v1664
  %v1666 = vpop.f32.mrf.mxu0
  %v1667 = vadd.f32 %v1303, %v1666
  %1668 = vmatprep.mubr.bf16.mxu0 %v1428
  %1669 = vmatmul.mubr.bf16.gmra.mxu0 %v1140
  %v1670 = vpop.f32.mrf.mxu0
  %v1671 = vadd.f32 %v1299, %v1670
  %v1672 = vpop.f32.mrf.mxu0
  %v1673 = vadd.f32 %v1303, %v1672
  %v1674 = vpop.f32.mrf.mxu0
  %v1675 = vadd.f32 %v1299, %v1674
  %v1676 = vpop.f32.mrf.mxu0
  %v1677 = vadd.f32 %v1303, %v1676
  %1678 = vmatprep.mubr.bf16.mxu0 %v1430
  %1679 = vmatmul.mubr.bf16.gmra.mxu0 %v1143
  %v1680 = vpop.f32.mrf.mxu0
  %v1681 = vadd.f32 %v1299, %v1680
  %v1682 = vpop.f32.mrf.mxu0
  %v1683 = vadd.f32 %v1303, %v1682
  %v1684 = vpop.f32.mrf.mxu0
  %v1685 = vadd.f32 %v1299, %v1684
  %v1686 = vpop.f32.mrf.mxu0
  %v1687 = vadd.f32 %v1303, %v1686
  %1688 = vmatprep.mubr.bf16.mxu0 %v1432
  %1689 = vmatmul.mubr.bf16.gmra.mxu0 %v1146
  %v1690 = vpop.f32.mrf.mxu0
  %v1691 = vadd.f32 %v1299, %v1690
  %v1692 = vpop.f32.mrf.mxu0
  %v1693 = vadd.f32 %v1303, %v1692
  %v1694 = vpop.f32.mrf.mxu0
  %v1695 = vadd.f32 %v1299, %v1694
  %v1696 = vpop.f32.mrf.mxu0
  %v1697 = vadd.f32 %v1303, %v1696
  %1698 = vmatprep.mubr.bf16.mxu0 %v1434
  %1699 = vmatmul.mubr.bf16.gmra.mxu0 %v1149
  %v1700 = vpop.f32.mrf.mxu0
  %v1701 = vadd.f32 %v1299, %v1700
  %v1702 = vpop.f32.mrf.mxu0
  %v1703 = vadd.f32 %v1303, %v1702
  %v1704 = vpop.f32.mrf.mxu0
  %v1705 = vadd.f32 %v1299, %v1704
  %v1706 = vpop.f32.mrf.mxu0
  %v1707 = vadd.f32 %v1303, %v1706
  %1708 = vmatprep.mubr.bf16.mxu0 %v1436
  %1709 = vmatmul.mubr.bf16.gmra.mxu0 %v1152
  %v1710 = vpop.f32.mrf.mxu0
  %v1711 = vadd.f32 %v1299, %v1710
  %v1712 = vpop.f32.mrf.mxu0
  %v1713 = vadd.f32 %v1303, %v1712
  %v1714 = vpop.f32.mrf.mxu0
  %v1715 = vadd.f32 %v1299, %v1714
  %v1716 = vpop.f32.mrf.mxu0
  %v1717 = vadd.f32 %v1303, %v1716
  %1718 = vmatprep.mubr.bf16.mxu0 %v1438
  %1719 = vmatmul.mubr.bf16.gmra.mxu0 %v1155
  %v1720 = vpop.f32.mrf.mxu0
  %v1721 = vadd.f32 %v1299, %v1720
  %v1722 = vpop.f32.mrf.mxu0
  %v1723 = vadd.f32 %v1303, %v1722
  %v1724 = vpop.f32.mrf.mxu0
  %v1725 = vadd.f32 %v1299, %v1724
  %v1726 = vpop.f32.mrf.mxu0
  %v1727 = vadd.f32 %v1303, %v1726
  %1728 = vmatprep.mubr.bf16.mxu0 %v1440
  %1729 = vmatmul.mubr.bf16.gmra.mxu0 %v1158
  %v1730 = vpop.f32.mrf.mxu0
  %v1731 = vadd.f32 %v1299, %v1730
  %v1732 = vpop.f32.mrf.mxu0
  %v1733 = vadd.f32 %v1303, %v1732
  %v1734 = vpop.f32.mrf.mxu0
  %v1735 = vadd.f32 %v1299, %v1734
  %v1736 = vpop.f32.mrf.mxu0
  %v1737 = vadd.f32 %v1303, %v1736
  %1738 = vmatprep.mubr.bf16.mxu0 %v1442
  %1739 = vmatmul.mubr.bf16.gmra.mxu0 %v1161
  %v1740 = vpop.f32.mrf.mxu0
  %v1741 = vadd.f32 %v1299, %v1740
  %v1742 = vpop.f32.mrf.mxu0
  %v1743 = vadd.f32 %v1303, %v1742
  %v1744 = vpop.f32.mrf.mxu0
  %v1745 = vadd.f32 %v1299, %v1744
  %v1746 = vpop.f32.mrf.mxu0
  %v1747 = vadd.f32 %v1303, %v1746
  %1748 = vmatprep.mubr.bf16.mxu0 %v1444
  %1749 = vmatmul.mubr.bf16.gmra.mxu0 %v1164
  %v1750 = vpop.f32.mrf.mxu0
  %v1751 = vadd.f32 %v1299, %v1750
  %v1752 = vpop.f32.mrf.mxu0
  %v1753 = vadd.f32 %v1303, %v1752
  %v1754 = vpop.f32.mrf.mxu0
  %v1755 = vadd.f32 %v1299, %v1754
  %v1756 = vpop.f32.mrf.mxu0
  %v1757 = vadd.f32 %v1303, %v1756
  %1758 = vmatprep.mubr.bf16.mxu0 %v1446
  %1759 = vmatmul.mubr.bf16.gmra.mxu0 %v1167
  %v1760 = vpop.f32.mrf.mxu0
  %v1761 = vadd.f32 %v1299, %v1760
  %v1762 = vpop.f32.mrf.mxu0
  %v1763 = vadd.f32 %v1303, %v1762
  %v1764 = vpop.f32.mrf.mxu0
  %v1765 = vadd.f32 %v1299, %v1764
  %v1766 = vpop.f32.mrf.mxu0
  %v1767 = vadd.f32 %v1303, %v1766
  %1768 = vmatprep.mubr.bf16.mxu0 %v1448
  %1769 = vmatmul.mubr.bf16.gmra.mxu0 %v1170
  %v1770 = vpop.f32.mrf.mxu0
  %v1771 = vadd.f32 %v1299, %v1770
  %v1772 = vpop.f32.mrf.mxu0
  %v1773 = vadd.f32 %v1303, %v1772
  %v1774 = vpop.f32.mrf.mxu0
  %v1775 = vadd.f32 %v1299, %v1774
  %v1776 = vpop.f32.mrf.mxu0
  %v1777 = vadd.f32 %v1303, %v1776
  %1778 = vmatprep.mubr.bf16.mxu0 %v1450
  %1779 = vmatmul.mubr.bf16.gmra.mxu0 %v1173
  %v1780 = vpop.f32.mrf.mxu0
  %v1781 = vadd.f32 %v1299, %v1780
  %v1782 = vpop.f32.mrf.mxu0
  %v1783 = vadd.f32 %v1303, %v1782
  %v1784 = vpop.f32.mrf.mxu0
  %v1785 = vadd.f32 %v1299, %v1784
  %v1786 = vpop.f32.mrf.mxu0
  %v1787 = vadd.f32 %v1303, %v1786
  %1788 = vmatprep.mubr.bf16.mxu0 %v1452
  %1789 = vmatmul.mubr.bf16.gmra.mxu0 %v1176
  %v1790 = vpop.f32.mrf.mxu0
  %v1791 = vadd.f32 %v1299, %v1790
  %v1792 = vpop.f32.mrf.mxu0
  %v1793 = vadd.f32 %v1303, %v1792
  %v1794 = vpop.f32.mrf.mxu0
  %v1795 = vadd.f32 %v1299, %v1794
  %v1796 = vpop.f32.mrf.mxu0
  %v1797 = vadd.f32 %v1303, %v1796
  %1798 = vmatprep.mubr.bf16.mxu0 %v1454
  %1799 = vmatmul.mubr.bf16.gmra.mxu0 %v1179
  %v1800 = vpop.f32.mrf.mxu0
  %v1801 = vadd.f32 %v1299, %v1800
  %v1802 = vpop.f32.mrf.mxu0
  %v1803 = vadd.f32 %v1303, %v1802
  %v1804 = vpop.f32.mrf.mxu0
  %v1805 = vadd.f32 %v1299, %v1804
  %v1806 = vpop.f32.mrf.mxu0
  %v1807 = vadd.f32 %v1303, %v1806
  %1808 = vmatprep.mubr.bf16.mxu0 %v1456
  %1809 = vmatmul.mubr.bf16.gmra.mxu0 %v1182
  %v1810 = vpop.f32.mrf.mxu0
  %v1811 = vadd.f32 %v1299, %v1810
  %v1812 = vpop.f32.mrf.mxu0
  %v1813 = vadd.f32 %v1303, %v1812
  %v1814 = vpop.f32.mrf.mxu0
  %v1815 = vadd.f32 %v1299, %v1814
  %v1816 = vpop.f32.mrf.mxu0
  %v1817 = vadd.f32 %v1303, %v1816
  %1818 = vmatprep.mubr.bf16.mxu0 %v1458
  %1819 = vmatmul.mubr.bf16.gmra.mxu0 %v1185
  %v1820 = vpop.f32.mrf.mxu0
  %v1821 = vadd.f32 %v1299, %v1820
  %v1822 = vpop.f32.mrf.mxu0
  %v1823 = vadd.f32 %v1303, %v1822
  %v1824 = vpop.f32.mrf.mxu0
  %v1825 = vadd.f32 %v1299, %v1824
  %v1826 = vpop.f32.mrf.mxu0
  %v1827 = vadd.f32 %v1303, %v1826
  %1828 = vmatprep.mubr.bf16.mxu0 %v1460
  %1829 = vmatmul.mubr.bf16.gmra.mxu0 %v1188
  %v1830 = vpop.f32.mrf.mxu0
  %v1831 = vadd.f32 %v1299, %v1830
  %v1832 = vpop.f32.mrf.mxu0
  %v1833 = vadd.f32 %v1303, %v1832
  %v1834 = vpop.f32.mrf.mxu0
  %v1835 = vadd.f32 %v1299, %v1834
  %v1836 = vpop.f32.mrf.mxu0
  %v1837 = vadd.f32 %v1303, %v1836
  %1838 = vmatprep.mubr.bf16.mxu0 %v1462
  %1839 = vmatmul.mubr.bf16.gmra.mxu0 %v1191
  %v1840 = vpop.f32.mrf.mxu0
  %v1841 = vadd.f32 %v1299, %v1840
  %v1842 = vpop.f32.mrf.mxu0
  %v1843 = vadd.f32 %v1303, %v1842
  %v1844 = vpop.f32.mrf.mxu0
  %v1845 = vadd.f32 %v1299, %v1844
  %v1846 = vpop.f32.mrf.mxu0
  %v1847 = vadd.f32 %v1303, %v1846
  %1848 = vmatprep.mubr.bf16.mxu0 %v1464
  %1849 = vmatmul.mubr.bf16.gmra.mxu0 %v1194
  %v1850 = vpop.f32.mrf.mxu0
  %v1851 = vadd.f32 %v1299, %v1850
  %v1852 = vpop.f32.mrf.mxu0
  %v1853 = vadd.f32 %v1303, %v1852
  %v1854 = vpop.f32.mrf.mxu0
  %v1855 = vadd.f32 %v1299, %v1854
  %v1856 = vpop.f32.mrf.mxu0
  %v1857 = vadd.f32 %v1303, %v1856
  %1858 = vmatprep.mubr.bf16.mxu0 %v1466
  %1859 = vmatmul.mubr.bf16.gmra.mxu0 %v1197
  %v1860 = vpop.f32.mrf.mxu0
  %v1861 = vadd.f32 %v1299, %v1860
  %v1862 = vpop.f32.mrf.mxu0
  %v1863 = vadd.f32 %v1303, %v1862
  %v1864 = vpop.f32.mrf.mxu0
  %v1865 = vadd.f32 %v1299, %v1864
  %v1866 = vpop.f32.mrf.mxu0
  %v1867 = vadd.f32 %v1303, %v1866
  %1868 = vmatprep.mubr.bf16.mxu0 %v1468
  %1869 = vmatmul.mubr.bf16.gmra.mxu0 %v1200
  %v1870 = vpop.f32.mrf.mxu0
  %v1871 = vadd.f32 %v1299, %v1870
  %v1872 = vpop.f32.mrf.mxu0
  %v1873 = vadd.f32 %v1303, %v1872
  %v1874 = vpop.f32.mrf.mxu0
  %v1875 = vadd.f32 %v1299, %v1874
  %v1876 = vpop.f32.mrf.mxu0
  %v1877 = vadd.f32 %v1303, %v1876
  %1878 = vmatprep.mubr.bf16.mxu0 %v1470
  %1879 = vmatmul.mubr.bf16.gmra.mxu0 %v1203
  %v1880 = vpop.f32.mrf.mxu0
  %v1881 = vadd.f32 %v1299, %v1880
  %v1882 = vpop.f32.mrf.mxu0
  %v1883 = vadd.f32 %v1303, %v1882
  %v1884 = vpop.f32.mrf.mxu0
  %v1885 = vadd.f32 %v1299, %v1884
  %v1886 = vpop.f32.mrf.mxu0
  %v1887 = vadd.f32 %v1303, %v1886
  %1888 = vmatprep.mubr.bf16.mxu0 %v1472
  %1889 = vmatmul.mubr.bf16.gmra.mxu0 %v1206
  %v1890 = vpop.f32.mrf.mxu0
  %v1891 = vadd.f32 %v1299, %v1890
  %v1892 = vpop.f32.mrf.mxu0
  %v1893 = vadd.f32 %v1303, %v1892
  %v1894 = vpop.f32.mrf.mxu0
  %v1895 = vadd.f32 %v1299, %v1894
  %v1896 = vpop.f32.mrf.mxu0
  %v1897 = vadd.f32 %v1303, %v1896
  %1898 = vmatprep.mubr.bf16.mxu0 %v1474
  %1899 = vmatmul.mubr.bf16.gmra.mxu0 %v1209
  %v1900 = vpop.f32.mrf.mxu0
  %v1901 = vadd.f32 %v1299, %v1900
  %v1902 = vpop.f32.mrf.mxu0
  %v1903 = vadd.f32 %v1303, %v1902
  %v1904 = vpop.f32.mrf.mxu0
  %v1905 = vadd.f32 %v1299, %v1904
  %v1906 = vpop.f32.mrf.mxu0
  %v1907 = vadd.f32 %v1303, %v1906
  %1908 = vmatprep.mubr.bf16.mxu0 %v1476
  %1909 = vmatmul.mubr.bf16.gmra.mxu0 %v1212
  %v1910 = vpop.f32.mrf.mxu0
  %v1911 = vadd.f32 %v1299, %v1910
  %v1912 = vpop.f32.mrf.mxu0
  %v1913 = vadd.f32 %v1303, %v1912
  %v1914 = vpop.f32.mrf.mxu0
  %v1915 = vadd.f32 %v1299, %v1914
  %v1916 = vpop.f32.mrf.mxu0
  %v1917 = vadd.f32 %v1303, %v1916
  %1918 = vmatprep.mubr.bf16.mxu0 %v1478
  %1919 = vmatmul.mubr.bf16.gmra.mxu0 %v1215
  %v1920 = vpop.f32.mrf.mxu0
  %v1921 = vadd.f32 %v1299, %v1920
  %v1922 = vpop.f32.mrf.mxu0
  %v1923 = vadd.f32 %v1303, %v1922
  %v1924 = vpop.f32.mrf.mxu0
  %v1925 = vadd.f32 %v1299, %v1924
  %v1926 = vpop.f32.mrf.mxu0
  %v1927 = vadd.f32 %v1303, %v1926
  %1928 = vmatprep.mubr.bf16.mxu0 %v1480
  %1929 = vmatmul.mubr.bf16.gmra.mxu0 %v1218
  %v1930 = vpop.f32.mrf.mxu0
  %v1931 = vadd.f32 %v1299, %v1930
  %v1932 = vpop.f32.mrf.mxu0
  %v1933 = vadd.f32 %v1303, %v1932
  %v1934 = vpop.f32.mrf.mxu0
  %v1935 = vadd.f32 %v1299, %v1934
  %v1936 = vpop.f32.mrf.mxu0
  %v1937 = vadd.f32 %v1303, %v1936
  %1938 = vmatprep.mubr.bf16.mxu0 %v1482
  %1939 = vmatmul.mubr.bf16.gmra.mxu0 %v1221
  %v1940 = vpop.f32.mrf.mxu0
  %v1941 = vadd.f32 %v1299, %v1940
  %v1942 = vpop.f32.mrf.mxu0
  %v1943 = vadd.f32 %v1303, %v1942
  %v1944 = vpop.f32.mrf.mxu0
  %v1945 = vadd.f32 %v1299, %v1944
  %v1946 = vpop.f32.mrf.mxu0
  %v1947 = vadd.f32 %v1303, %v1946
  %1948 = vmatprep.mubr.bf16.mxu0 %v1484
  %1949 = vmatmul.mubr.bf16.gmra.mxu0 %v1224
  %v1950 = vpop.f32.mrf.mxu0
  %v1951 = vadd.f32 %v1299, %v1950
  %v1952 = vpop.f32.mrf.mxu0
  %v1953 = vadd.f32 %v1303, %v1952
  %v1954 = vpop.f32.mrf.mxu0
  %v1955 = vadd.f32 %v1299, %v1954
  %v1956 = vpop.f32.mrf.mxu0
  %v1957 = vadd.f32 %v1303, %v1956
  %1958 = vmatprep.mubr.bf16.mxu0 %v1486
  %1959 = vmatmul.mubr.bf16.gmra.mxu0 %v1227
  %v1960 = vpop.f32.mrf.mxu0
  %v1961 = vadd.f32 %v1299, %v1960
  %v1962 = vpop.f32.mrf.mxu0
  %v1963 = vadd.f32 %v1303, %v1962
  %v1964 = vpop.f32.mrf.mxu0
  %v1965 = vadd.f32 %v1299, %v1964
  %v1966 = vpop.f32.mrf.mxu0
  %v1967 = vadd.f32 %v1303, %v1966
  %1968 = vmatprep.mubr.bf16.mxu0 %v1488
  %1969 = vmatmul.mubr.bf16.gmra.mxu0 %v1230
  %v1970 = vpop.f32.mrf.mxu0
  %v1971 = vadd.f32 %v1299, %v1970
  %v1972 = vpop.f32.mrf.mxu0
  %v1973 = vadd.f32 %v1303, %v1972
  %v1974 = vpop.f32.mrf.mxu0
  %v1975 = vadd.f32 %v1299, %v1974
  %v1976 = vpop.f32.mrf.mxu0
  %v1977 = vadd.f32 %v1303, %v1976
  %1978 = vmatprep.mubr.bf16.mxu0 %v1490
  %1979 = vmatmul.mubr.bf16.gmra.mxu0 %v1233
  %v1980 = vpop.f32.mrf.mxu0
  %v1981 = vadd.f32 %v1299, %v1980
  %v1982 = vpop.f32.mrf.mxu0
  %v1983 = vadd.f32 %v1303, %v1982
  %v1984 = vpop.f32.mrf.mxu0
  %v1985 = vadd.f32 %v1299, %v1984
  %v1986 = vpop.f32.mrf.mxu0
  %v1987 = vadd.f32 %v1303, %v1986
  %1988 = vmatprep.mubr.bf16.mxu0 %v1492
  %1989 = vmatmul.mubr.bf16.gmra.mxu0 %v1236
  %v1990 = vpop.f32.mrf.mxu0
  %v1991 = vadd.f32 %v1299, %v1990
  %v1992 = vpop.f32.mrf.mxu0
  %v1993 = vadd.f32 %v1303, %v1992
  %v1994 = vpop.f32.mrf.mxu0
  %v1995 = vadd.f32 %v1299, %v1994
  %v1996 = vpop.f32.mrf.mxu0
  %v1997 = vadd.f32 %v1303, %v1996
  %1998 = vmatprep.mubr.bf16.mxu0 %v1494
  %1999 = vmatmul.mubr.bf16.gmra.mxu0 %v1239
  %v2000 = vpop.f32.mrf.mxu0
  %v2001 = vadd.f32 %v1299, %v2000
  %v2002 = vpop.f32.mrf.mxu0
  %v2003 = vadd.f32 %v1303, %v2002
  %v2004 = vpop.f32.mrf.mxu0
  %v2005 = vadd.f32 %v1299, %v2004
  %v2006 = vpop.f32.mrf.mxu0
  %v2007 = vadd.f32 %v1303, %v2006
  %2008 = vmatprep.mubr.bf16.mxu0 %v1496
  %2009 = vmatmul.mubr.bf16.gmra.mxu0 %v1242
  %v2010 = vpop.f32.mrf.mxu0
  %v2011 = vadd.f32 %v1299, %v2010
  %v2012 = vpop.f32.mrf.mxu0
  %v2013 = vadd.f32 %v1303, %v2012
  %v2014 = vpop.f32.mrf.mxu0
  %v2015 = vadd.f32 %v1299, %v2014
  %v2016 = vpop.f32.mrf.mxu0
  %v2017 = vadd.f32 %v1303, %v2016
  %2018 = vmatprep.mubr.bf16.mxu0 %v1498
  %2019 = vmatmul.mubr.bf16.gmra.mxu0 %v1245
  %v2020 = vpop.f32.mrf.mxu0
  %v2021 = vadd.f32 %v1299, %v2020
  %v2022 = vpop.f32.mrf.mxu0
  %v2023 = vadd.f32 %v1303, %v2022
  %v2024 = vpop.f32.mrf.mxu0
  %v2025 = vadd.f32 %v1299, %v2024
  %v2026 = vpop.f32.mrf.mxu0
  %v2027 = vadd.f32 %v1303, %v2026
  %2028 = vmatprep.mubr.bf16.mxu0 %v1500
  %2029 = vmatmul.mubr.bf16.gmra.mxu0 %v1248
  %v2030 = vpop.f32.mrf.mxu0
  %v2031 = vadd.f32 %v1299, %v2030
  %v2032 = vpop.f32.mrf.mxu0
  %v2033 = vadd.f32 %v1303, %v2032
  %v2034 = vpop.f32.mrf.mxu0
  %v2035 = vadd.f32 %v1299, %v2034
  %v2036 = vpop.f32.mrf.mxu0
  %v2037 = vadd.f32 %v1303, %v2036
  %2038 = vmatprep.mubr.bf16.mxu0 %v1503
  %2039 = vmatmul.mubr.bf16.gmra.mxu0 %v1251
  %v2040 = vpop.f32.mrf.mxu0
  %v2041 = vadd.f32 %v1299, %v2040
  %v2042 = vpop.f32.mrf.mxu0
  %v2043 = vadd.f32 %v1303, %v2042
  %v2044 = vpop.f32.mrf.mxu0
  %v2045 = vadd.f32 %v1299, %v2044
  %v2046 = vpop.f32.mrf.mxu0
  %v2047 = vadd.f32 %v1303, %v2046
  %2048 = vmatprep.mubr.bf16.mxu0 %v1506
  %2049 = vmatmul.mubr.bf16.gmra.mxu0 %v1254
  %v2050 = vpop.f32.mrf.mxu0
  %v2051 = vadd.f32 %v1299, %v2050
  %v2052 = vpop.f32.mrf.mxu0
  %v2053 = vadd.f32 %v1303, %v2052
  %v2054 = vpop.f32.mrf.mxu0
  %v2055 = vadd.f32 %v1299, %v2054
  %v2056 = vpop.f32.mrf.mxu0
  %v2057 = vadd.f32 %v1303, %v2056
  %2058 = vmatprep.mubr.bf16.mxu0 %v1509
  %2059 = vmatmul.mubr.bf16.gmra.mxu0 %v1257
  %v2060 = vpop.f32.mrf.mxu0
  %v2061 = vadd.f32 %v1299, %v2060
  %v2062 = vpop.f32.mrf.mxu0
  %v2063 = vadd.f32 %v1303, %v2062
  %v2064 = vpop.f32.mrf.mxu0
  %v2065 = vadd.f32 %v1299, %v2064
  %v2066 = vpop.f32.mrf.mxu0
  %v2067 = vadd.f32 %v1303, %v2066
  %2068 = vmatprep.mubr.bf16.mxu0 %v1512
  %2069 = vmatmul.mubr.bf16.gmra.mxu0 %v1260
  %v2070 = vpop.f32.mrf.mxu0
  %v2071 = vadd.f32 %v1299, %v2070
  %v2072 = vpop.f32.mrf.mxu0
  %v2073 = vadd.f32 %v1303, %v2072
  %v2074 = vpop.f32.mrf.mxu0
  %v2075 = vadd.f32 %v1299, %v2074
  %v2076 = vpop.f32.mrf.mxu0
  %v2077 = vadd.f32 %v1303, %v2076
  %2078 = vmatprep.mubr.bf16.mxu0 %v1515
  %2079 = vmatmul.mubr.bf16.gmra.mxu0 %v1263
  %v2080 = vpop.f32.mrf.mxu0
  %v2081 = vadd.f32 %v1299, %v2080
  %v2082 = vpop.f32.mrf.mxu0
  %v2083 = vadd.f32 %v1303, %v2082
  %v2084 = vpop.f32.mrf.mxu0
  %v2085 = vadd.f32 %v1299, %v2084
  %v2086 = vpop.f32.mrf.mxu0
  %v2087 = vadd.f32 %v1303, %v2086
  %2088 = vmatprep.mubr.bf16.mxu0 %v1518
  %2089 = vmatmul.mubr.bf16.gmra.mxu0 %v1266
  %v2090 = vpop.f32.mrf.mxu0
  %v2091 = vadd.f32 %v1299, %v2090
  %v2092 = vpop.f32.mrf.mxu0
  %v2093 = vadd.f32 %v1303, %v2092
  %v2094 = vpop.f32.mrf.mxu0
  %v2095 = vadd.f32 %v1299, %v2094
  %v2096 = vpop.f32.mrf.mxu0
  %v2097 = vadd.f32 %v1303, %v2096
  %2098 = vmatprep.mubr.bf16.mxu0 %v1521
  %2099 = vmatmul.mubr.bf16.gmra.mxu0 %v1269
  %v2100 = vpop.f32.mrf.mxu0
  %v2101 = vadd.f32 %v1299, %v2100
  %v2102 = vpop.f32.mrf.mxu0
  %v2103 = vadd.f32 %v1303, %v2102
  %v2104 = vpop.f32.mrf.mxu0
  %v2105 = vadd.f32 %v1299, %v2104
  %v2106 = vpop.f32.mrf.mxu0
  %v2107 = vadd.f32 %v1303, %v2106
  %2108 = vmatprep.mubr.bf16.mxu0 %v1524
  %2109 = vmatmul.mubr.bf16.gmra.mxu0 %v1272
  %v2110 = vpop.f32.mrf.mxu0
  %v2111 = vadd.f32 %v1299, %v2110
  %v2112 = vpop.f32.mrf.mxu0
  %v2113 = vadd.f32 %v1303, %v2112
  %v2114 = vpop.f32.mrf.mxu0
  %v2115 = vadd.f32 %v1299, %v2114
  %v2116 = vpop.f32.mrf.mxu0
  %v2117 = vadd.f32 %v1303, %v2116
  %2118 = vdwg.mxu0
  %v2119 = vmax.f32 %v1561, 0.0
  %v2120 = vmax.f32 %v1563, 0.0
  %v2121 = vmax.f32 %v1565, 0.0
  %v2122 = vmax.f32 %v1567, 0.0
  %v2123 = vmax.f32 %v1571, 0.0
  %v2124 = vmax.f32 %v1573, 0.0
  %v2125 = vmax.f32 %v1575, 0.0
  %v2126 = vmax.f32 %v1577, 0.0
  %v2127 = vmax.f32 %v1581, 0.0
  %v2128 = vmax.f32 %v1583, 0.0
  %v2129 = vmax.f32 %v1585, 0.0
  %v2130 = vmax.f32 %v1587, 0.0
  %v2131 = vmax.f32 %v1591, 0.0
  %v2132 = vmax.f32 %v1593, 0.0
  %v2133 = vmax.f32 %v1595, 0.0
  %v2134 = vmax.f32 %v1597, 0.0
  %v2135 = vmax.f32 %v1601, 0.0
  %v2136 = vmax.f32 %v1603, 0.0
  %v2137 = vmax.f32 %v1605, 0.0
  %v2138 = vmax.f32 %v1607, 0.0
  %v2139 = vmax.f32 %v1611, 0.0
  %v2140 = vmax.f32 %v1613, 0.0
  %v2141 = vmax.f32 %v1615, 0.0
  %v2142 = vmax.f32 %v1617, 0.0
  %v2143 = vmax.f32 %v1621, 0.0
  %v2144 = vmax.f32 %v1623, 0.0
  %v2145 = vmax.f32 %v1625, 0.0
  %v2146 = vmax.f32 %v1627, 0.0
  %v2147 = vmax.f32 %v1631, 0.0
  %v2148 = vmax.f32 %v1633, 0.0
  %v2149 = vmax.f32 %v1635, 0.0
  %v2150 = vmax.f32 %v1637, 0.0
  %v2151 = vmax.f32 %v1641, 0.0
  %v2152 = vmax.f32 %v1643, 0.0
  %v2153 = vmax.f32 %v1645, 0.0
  %v2154 = vmax.f32 %v1647, 0.0
  %v2155 = vmax.f32 %v1651, 0.0
  %v2156 = vmax.f32 %v1653, 0.0
  %v2157 = vmax.f32 %v1655, 0.0
  %v2158 = vmax.f32 %v1657, 0.0
  %v2159 = vmax.f32 %v1661, 0.0
  %v2160 = vmax.f32 %v1663, 0.0
  %v2161 = vmax.f32 %v1665, 0.0
  %v2162 = vmax.f32 %v1667, 0.0
  %v2163 = vmax.f32 %v1671, 0.0
  %v2164 = vmax.f32 %v1673, 0.0
  %v2165 = vmax.f32 %v1675, 0.0
  %v2166 = vmax.f32 %v1677, 0.0
  %v2167 = vmax.f32 %v1681, 0.0
  %v2168 = vmax.f32 %v1683, 0.0
  %v2169 = vmax.f32 %v1685, 0.0
  %v2170 = vmax.f32 %v1687, 0.0
  %v2171 = vmax.f32 %v1691, 0.0
  %v2172 = vmax.f32 %v1693, 0.0
  %v2173 = vmax.f32 %v1695, 0.0
  %v2174 = vmax.f32 %v1697, 0.0
  %v2175 = vmax.f32 %v1701, 0.0
  %v2176 = vmax.f32 %v1703, 0.0
  %v2177 = vmax.f32 %v1705, 0.0
  %v2178 = vmax.f32 %v1707, 0.0
  %v2179 = vmax.f32 %v1711, 0.0
  %v2180 = vmax.f32 %v1713, 0.0
  %v2181 = vmax.f32 %v1715, 0.0
  %v2182 = vmax.f32 %v1717, 0.0
  %v2183 = vmax.f32 %v1721, 0.0
  %v2184 = vmax.f32 %v1723, 0.0
  %v2185 = vmax.f32 %v1725, 0.0
  %v2186 = vmax.f32 %v1727, 0.0
  %v2187 = vmax.f32 %v1731, 0.0
  %v2188 = vmax.f32 %v1733, 0.0
  %v2189 = vmax.f32 %v1735, 0.0
  %v2190 = vmax.f32 %v1737, 0.0
  %v2191 = vmax.f32 %v1741, 0.0
  %v2192 = vmax.f32 %v1743, 0.0
  %v2193 = vmax.f32 %v1745, 0.0
  %v2194 = vmax.f32 %v1747, 0.0
  %v2195 = vmax.f32 %v1751, 0.0
  %v2196 = vmax.f32 %v1753, 0.0
  %v2197 = vmax.f32 %v1755, 0.0
  %v2198 = vmax.f32 %v1757, 0.0
  %v2199 = vmax.f32 %v1761, 0.0
  %v2200 = vmax.f32 %v1763, 0.0
  %v2201 = vmax.f32 %v1765, 0.0
  %v2202 = vmax.f32 %v1767, 0.0
  %v2203 = vmax.f32 %v1771, 0.0
  %v2204 = vmax.f32 %v1773, 0.0
  %v2205 = vmax.f32 %v1775, 0.0
  %v2206 = vmax.f32 %v1777, 0.0
  %v2207 = vmax.f32 %v1781, 0.0
  %v2208 = vmax.f32 %v1783, 0.0
  %v2209 = vmax.f32 %v1785, 0.0
  %v2210 = vmax.f32 %v1787, 0.0
  %v2211 = vmax.f32 %v1791, 0.0
  %v2212 = vmax.f32 %v1793, 0.0
  %v2213 = vmax.f32 %v1795, 0.0
  %v2214 = vmax.f32 %v1797, 0.0
  %v2215 = vmax.f32 %v1801, 0.0
  %v2216 = vmax.f32 %v1803, 0.0
  %v2217 = vmax.f32 %v1805, 0.0
  %v2218 = vmax.f32 %v1807, 0.0
  %v2219 = vmax.f32 %v1811, 0.0
  %v2220 = vmax.f32 %v1813, 0.0
  %v2221 = vmax.f32 %v1815, 0.0
  %v2222 = vmax.f32 %v1817, 0.0
  %v2223 = vmax.f32 %v1821, 0.0
  %v2224 = vmax.f32 %v1823, 0.0
  %v2225 = vmax.f32 %v1825, 0.0
  %v2226 = vmax.f32 %v1827, 0.0
  %v2227 = vmax.f32 %v1831, 0.0
  %v2228 = vmax.f32 %v1833, 0.0
  %v2229 = vmax.f32 %v1835, 0.0
  %v2230 = vmax.f32 %v1837, 0.0
  %v2231 = vmax.f32 %v1841, 0.0
  %v2232 = vmax.f32 %v1843, 0.0
  %v2233 = vmax.f32 %v1845, 0.0
  %v2234 = vmax.f32 %v1847, 0.0
  %v2235 = vmax.f32 %v1851, 0.0
  %v2236 = vmax.f32 %v1853, 0.0
  %v2237 = vmax.f32 %v1855, 0.0
  %v2238 = vmax.f32 %v1857, 0.0
  %v2239 = vmax.f32 %v1861, 0.0
  %v2240 = vmax.f32 %v1863, 0.0
  %v2241 = vmax.f32 %v1865, 0.0
  %v2242 = vmax.f32 %v1867, 0.0
  %v2243 = vmax.f32 %v1871, 0.0
  %v2244 = vmax.f32 %v1873, 0.0
  %v2245 = vmax.f32 %v1875, 0.0
  %v2246 = vmax.f32 %v1877, 0.0
  %v2247 = vmax.f32 %v1881, 0.0
  %v2248 = vmax.f32 %v1883, 0.0
  %v2249 = vmax.f32 %v1885, 0.0
  %v2250 = vmax.f32 %v1887, 0.0
  %v2251 = vmax.f32 %v1891, 0.0
  %v2252 = vmax.f32 %v1893, 0.0
  %v2253 = vmax.f32 %v1895, 0.0
  %v2254 = vmax.f32 %v1897, 0.0
  %v2255 = vmax.f32 %v1901, 0.0
  %v2256 = vmax.f32 %v1903, 0.0
  %v2257 = vmax.f32 %v1905, 0.0
  %v2258 = vmax.f32 %v1907, 0.0
  %v2259 = vmax.f32 %v1911, 0.0
  %v2260 = vmax.f32 %v1913, 0.0
  %v2261 = vmax.f32 %v1915, 0.0
  %v2262 = vmax.f32 %v1917, 0.0
  %v2263 = vmax.f32 %v1921, 0.0
  %v2264 = vmax.f32 %v1923, 0.0
  %v2265 = vmax.f32 %v1925, 0.0
  %v2266 = vmax.f32 %v1927, 0.0
  %v2267 = vmax.f32 %v1931, 0.0
  %v2268 = vmax.f32 %v1933, 0.0
  %v2269 = vmax.f32 %v1935, 0.0
  %v2270 = vmax.f32 %v1937, 0.0
  %v2271 = vmax.f32 %v1941, 0.0
  %v2272 = vmax.f32 %v1943, 0.0
  %v2273 = vmax.f32 %v1945, 0.0
  %v2274 = vmax.f32 %v1947, 0.0
  %v2275 = vmax.f32 %v1951, 0.0
  %v2276 = vmax.f32 %v1953, 0.0
  %v2277 = vmax.f32 %v1955, 0.0
  %v2278 = vmax.f32 %v1957, 0.0
  %v2279 = vmax.f32 %v1961, 0.0
  %v2280 = vmax.f32 %v1963, 0.0
  %v2281 = vmax.f32 %v1965, 0.0
  %v2282 = vmax.f32 %v1967, 0.0
  %v2283 = vmax.f32 %v1971, 0.0
  %v2284 = vmax.f32 %v1973, 0.0
  %v2285 = vmax.f32 %v1975, 0.0
  %v2286 = vmax.f32 %v1977, 0.0
  %v2287 = vmax.f32 %v1981, 0.0
  %v2288 = vmax.f32 %v1983, 0.0
  %v2289 = vmax.f32 %v1985, 0.0
  %v2290 = vmax.f32 %v1987, 0.0
  %v2291 = vmax.f32 %v1991, 0.0
  %v2292 = vmax.f32 %v1993, 0.0
  %v2293 = vmax.f32 %v1995, 0.0
  %v2294 = vmax.f32 %v1997, 0.0
  %v2295 = vmax.f32 %v2001, 0.0
  %v2296 = vmax.f32 %v2003, 0.0
  %v2297 = vmax.f32 %v2005, 0.0
  %v2298 = vmax.f32 %v2007, 0.0
  %v2299 = vmax.f32 %v2011, 0.0
  %v2300 = vmax.f32 %v2013, 0.0
  %v2301 = vmax.f32 %v2015, 0.0
  %v2302 = vmax.f32 %v2017, 0.0
  %v2303 = vmax.f32 %v2021, 0.0
  %v2304 = vmax.f32 %v2023, 0.0
  %v2305 = vmax.f32 %v2025, 0.0
  %v2306 = vmax.f32 %v2027, 0.0
  %v2307 = vmax.f32 %v2031, 0.0
  %v2308 = vmax.f32 %v2033, 0.0
  %v2309 = vmax.f32 %v2035, 0.0
  %v2310 = vmax.f32 %v2037, 0.0
  %v2311 = vmax.f32 %v2041, 0.0
  %v2312 = vmax.f32 %v2043, 0.0
  %v2313 = vmax.f32 %v2045, 0.0
  %v2314 = vmax.f32 %v2047, 0.0
  %v2315 = vmax.f32 %v2051, 0.0
  %v2316 = vmax.f32 %v2053, 0.0
  %v2317 = vmax.f32 %v2055, 0.0
  %v2318 = vmax.f32 %v2057, 0.0
  %v2319 = vmax.f32 %v2061, 0.0
  %v2320 = vmax.f32 %v2063, 0.0
  %v2321 = vmax.f32 %v2065, 0.0
  %v2322 = vmax.f32 %v2067, 0.0
  %v2323 = vmax.f32 %v2071, 0.0
  %v2324 = vmax.f32 %v2073, 0.0
  %v2325 = vmax.f32 %v2075, 0.0
  %v2326 = vmax.f32 %v2077, 0.0
  %v2327 = vmax.f32 %v2081, 0.0
  %v2328 = vmax.f32 %v2083, 0.0
  %v2329 = vmax.f32 %v2085, 0.0
  %v2330 = vmax.f32 %v2087, 0.0
  %v2331 = vmax.f32 %v2091, 0.0
  %v2332 = vmax.f32 %v2093, 0.0
  %v2333 = vmax.f32 %v2095, 0.0
  %v2334 = vmax.f32 %v2097, 0.0
  %v2335 = vmax.f32 %v2101, 0.0
  %v2336 = vmax.f32 %v2103, 0.0
  %v2337 = vmax.f32 %v2105, 0.0
  %v2338 = vmax.f32 %v2107, 0.0
  %v2339 = vmax.f32 %v2111, 0.0
  %v2340 = vmax.f32 %v2113, 0.0
  %v2341 = vmax.f32 %v2115, 0.0
  %v2342 = vmax.f32 %v2117, 0.0
  %v2343 = vmax.f32 %v2119, %v2120
  %v2344 = vmax.f32 %v2121, %v2122
  %v2345 = vmax.f32 %v2123, %v2124
  %v2346 = vmax.f32 %v2125, %v2126
  %v2347 = vmax.f32 %v2127, %v2128
  %v2348 = vmax.f32 %v2129, %v2130
  %v2349 = vmax.f32 %v2131, %v2132
  %v2350 = vmax.f32 %v2133, %v2134
  %v2351 = vmax.f32 %v2135, %v2136
  %v2352 = vmax.f32 %v2137, %v2138
  %v2353 = vmax.f32 %v2139, %v2140
  %v2354 = vmax.f32 %v2141, %v2142
  %v2355 = vmax.f32 %v2143, %v2144
  %v2356 = vmax.f32 %v2145, %v2146
  %v2357 = vmax.f32 %v2147, %v2148
  %v2358 = vmax.f32 %v2149, %v2150
  %v2359 = vmax.f32 %v2151, %v2152
  %v2360 = vmax.f32 %v2153, %v2154
  %v2361 = vmax.f32 %v2155, %v2156
  %v2362 = vmax.f32 %v2157, %v2158
  %v2363 = vmax.f32 %v2159, %v2160
  %v2364 = vmax.f32 %v2161, %v2162
  %v2365 = vmax.f32 %v2163, %v2164
  %v2366 = vmax.f32 %v2165, %v2166
  %v2367 = vmax.f32 %v2167, %v2168
  %v2368 = vmax.f32 %v2169, %v2170
  %v2369 = vmax.f32 %v2171, %v2172
  %v2370 = vmax.f32 %v2173, %v2174
  %v2371 = vmax.f32 %v2175, %v2176
  %v2372 = vmax.f32 %v2177, %v2178
  %v2373 = vmax.f32 %v2179, %v2180
  %v2374 = vmax.f32 %v2181, %v2182
  %v2375 = vmax.f32 %v2183, %v2184
  %v2376 = vmax.f32 %v2185, %v2186
  %v2377 = vmax.f32 %v2187, %v2188
  %v2378 = vmax.f32 %v2189, %v2190
  %v2379 = vmax.f32 %v2191, %v2192
  %v2380 = vmax.f32 %v2193, %v2194
  %v2381 = vmax.f32 %v2195, %v2196
  %v2382 = vmax.f32 %v2197, %v2198
  %v2383 = vmax.f32 %v2199, %v2200
  %v2384 = vmax.f32 %v2201, %v2202
  %v2385 = vmax.f32 %v2203, %v2204
  %v2386 = vmax.f32 %v2205, %v2206
  %v2387 = vmax.f32 %v2207, %v2208
  %v2388 = vmax.f32 %v2209, %v2210
  %v2389 = vmax.f32 %v2211, %v2212
  %v2390 = vmax.f32 %v2213, %v2214
  %v2391 = vmax.f32 %v2215, %v2216
  %v2392 = vmax.f32 %v2217, %v2218
  %v2393 = vmax.f32 %v2219, %v2220
  %v2394 = vmax.f32 %v2221, %v2222
  %v2395 = vmax.f32 %v2223, %v2224
  %v2396 = vmax.f32 %v2225, %v2226
  %v2397 = vmax.f32 %v2227, %v2228
  %v2398 = vmax.f32 %v2229, %v2230
  %v2399 = vmax.f32 %v2231, %v2232
  %v2400 = vmax.f32 %v2233, %v2234
  %v2401 = vmax.f32 %v2235, %v2236
  %v2402 = vmax.f32 %v2237, %v2238
  %v2403 = vmax.f32 %v2239, %v2240
  %v2404 = vmax.f32 %v2241, %v2242
  %v2405 = vmax.f32 %v2243, %v2244
  %v2406 = vmax.f32 %v2245, %v2246
  %v2407 = vmax.f32 %v2247, %v2248
  %v2408 = vmax.f32 %v2249, %v2250
  %v2409 = vmax.f32 %v2251, %v2252
  %v2410 = vmax.f32 %v2253, %v2254
  %v2411 = vmax.f32 %v2255, %v2256
  %v2412 = vmax.f32 %v2257, %v2258
  %v2413 = vmax.f32 %v2259, %v2260
  %v2414 = vmax.f32 %v2261, %v2262
  %v2415 = vmax.f32 %v2263, %v2264
  %v2416 = vmax.f32 %v2265, %v2266
  %v2417 = vmax.f32 %v2267, %v2268
  %v2418 = vmax.f32 %v2269, %v2270
  %v2419 = vmax.f32 %v2271, %v2272
  %v2420 = vmax.f32 %v2273, %v2274
  %v2421 = vmax.f32 %v2275, %v2276
  %v2422 = vmax.f32 %v2277, %v2278
  %v2423 = vmax.f32 %v2279, %v2280
  %v2424 = vmax.f32 %v2281, %v2282
  %v2425 = vmax.f32 %v2283, %v2284
  %v2426 = vmax.f32 %v2285, %v2286
  %v2427 = vmax.f32 %v2287, %v2288
  %v2428 = vmax.f32 %v2289, %v2290
  %v2429 = vmax.f32 %v2291, %v2292
  %v2430 = vmax.f32 %v2293, %v2294
  %v2431 = vmax.f32 %v2295, %v2296
  %v2432 = vmax.f32 %v2297, %v2298
  %v2433 = vmax.f32 %v2299, %v2300
  %v2434 = vmax.f32 %v2301, %v2302
  %v2435 = vmax.f32 %v2303, %v2304
  %v2436 = vmax.f32 %v2305, %v2306
  %v2437 = vmax.f32 %v2307, %v2308
  %v2438 = vmax.f32 %v2309, %v2310
  %v2439 = vmax.f32 %v2311, %v2312
  %v2440 = vmax.f32 %v2313, %v2314
  %v2441 = vmax.f32 %v2315, %v2316
  %v2442 = vmax.f32 %v2317, %v2318
  %v2443 = vmax.f32 %v2319, %v2320
  %v2444 = vmax.f32 %v2321, %v2322
  %v2445 = vmax.f32 %v2323, %v2324
  %v2446 = vmax.f32 %v2325, %v2326
  %v2447 = vmax.f32 %v2327, %v2328
  %v2448 = vmax.f32 %v2329, %v2330
  %v2449 = vmax.f32 %v2331, %v2332
  %v2450 = vmax.f32 %v2333, %v2334
  %v2451 = vmax.f32 %v2335, %v2336
  %v2452 = vmax.f32 %v2337, %v2338
  %v2453 = vmax.f32 %v2339, %v2340
  %v2454 = vmax.f32 %v2341, %v2342
  %v2455 = vmax.f32 %v2343, %v2347
  %v2456 = vmax.f32 %v2344, %v2348
  %v2457 = vmax.f32 %v2345, %v2349
  %v2458 = vmax.f32 %v2346, %v2350
  %v2459 = vmax.f32 %v2351, %v2355
  %v2460 = vmax.f32 %v2352, %v2356
  %v2461 = vmax.f32 %v2353, %v2357
  %v2462 = vmax.f32 %v2354, %v2358
  %v2463 = vmax.f32 %v2359, %v2363
  %v2464 = vmax.f32 %v2360, %v2364
  %v2465 = vmax.f32 %v2361, %v2365
  %v2466 = vmax.f32 %v2362, %v2366
  %v2467 = vmax.f32 %v2367, %v2371
  %v2468 = vmax.f32 %v2368, %v2372
  %v2469 = vmax.f32 %v2369, %v2373
  %v2470 = vmax.f32 %v2370, %v2374
  %v2471 = vmax.f32 %v2375, %v2379
  %v2472 = vmax.f32 %v2376, %v2380
  %v2473 = vmax.f32 %v2377, %v2381
  %v2474 = vmax.f32 %v2378, %v2382
  %v2475 = vmax.f32 %v2383, %v2387
  %v2476 = vmax.f32 %v2384, %v2388
  %v2477 = vmax.f32 %v2385, %v2389
  %v2478 = vmax.f32 %v2386, %v2390
  %v2479 = vmax.f32 %v2391, %v2395
  %v2480 = vmax.f32 %v2392, %v2396
  %v2481 = vmax.f32 %v2393, %v2397
  %v2482 = vmax.f32 %v2394, %v2398
  %v2483 = vmax.f32 %v2399, %v2403
  %v2484 = vmax.f32 %v2400, %v2404
  %v2485 = vmax.f32 %v2401, %v2405
  %v2486 = vmax.f32 %v2402, %v2406
  %v2487 = vmax.f32 %v2407, %v2411
  %v2488 = vmax.f32 %v2408, %v2412
  %v2489 = vmax.f32 %v2409, %v2413
  %v2490 = vmax.f32 %v2410, %v2414
  %v2491 = vmax.f32 %v2415, %v2419
  %v2492 = vmax.f32 %v2416, %v2420
  %v2493 = vmax.f32 %v2417, %v2421
  %v2494 = vmax.f32 %v2418, %v2422
  %v2495 = vmax.f32 %v2423, %v2427
  %v2496 = vmax.f32 %v2424, %v2428
  %v2497 = vmax.f32 %v2425, %v2429
  %v2498 = vmax.f32 %v2426, %v2430
  %v2499 = vmax.f32 %v2431, %v2435
  %v2500 = vmax.f32 %v2432, %v2436
  %v2501 = vmax.f32 %v2433, %v2437
  %v2502 = vmax.f32 %v2434, %v2438
  %v2503 = vmax.f32 %v2439, %v2443
  %v2504 = vmax.f32 %v2440, %v2444
  %v2505 = vmax.f32 %v2441, %v2445
  %v2506 = vmax.f32 %v2442, %v2446
  %v2507 = vmax.f32 %v2447, %v2451
  %v2508 = vmax.f32 %v2448, %v2452
  %v2509 = vmax.f32 %v2449, %v2453
  %v2510 = vmax.f32 %v2450, %v2454
  %v2511 = vpack.c.bf16 %v2456, %v2455
  %v2512 = vpack.c.bf16 %v2458, %v2457
  %v2513 = vpack.c.bf16 %v2460, %v2459
  %v2514 = vpack.c.bf16 %v2462, %v2461
  %v2515 = vpack.c.bf16 %v2464, %v2463
  %v2516 = vpack.c.bf16 %v2466, %v2465
  %v2517 = vpack.c.bf16 %v2468, %v2467
  %v2518 = vpack.c.bf16 %v2470, %v2469
  %v2519 = vpack.c.bf16 %v2472, %v2471
  %v2520 = vpack.c.bf16 %v2474, %v2473
  %v2521 = vpack.c.bf16 %v2476, %v2475
  %v2522 = vpack.c.bf16 %v2478, %v2477
  %v2523 = vpack.c.bf16 %v2480, %v2479
  %v2524 = vpack.c.bf16 %v2482, %v2481
  %v2525 = vpack.c.bf16 %v2484, %v2483
  %v2526 = vpack.c.bf16 %v2486, %v2485
  %v2527 = vpack.c.bf16 %v2488, %v2487
  %v2528 = vpack.c.bf16 %v2490, %v2489
  %v2529 = vpack.c.bf16 %v2492, %v2491
  %v2530 = vpack.c.bf16 %v2494, %v2493
  %v2531 = vpack.c.bf16 %v2496, %v2495
  %v2532 = vpack.c.bf16 %v2498, %v2497
  %v2533 = vpack.c.bf16 %v2500, %v2499
  %v2534 = vpack.c.bf16 %v2502, %v2501
  %v2535 = vpack.c.bf16 %v2504, %v2503
  %v2536 = vpack.c.bf16 %v2506, %v2505
  %v2537 = vpack.c.bf16 %v2508, %v2507
  %v2538 = vpack.c.bf16 %v2510, %v2509
  %v2539 = vld [vmem:[%s3] sm:$0xff]
  %v2540 = vld [vmem:[%s3 + $0x8] sm:$0xff]
  %v2541 = vld [vmem:[%s3 + $0x10] sm:$0xff]
  %v2542 = vld [vmem:[%s3 + $0x18] sm:$0xff]
  %v2543 = vld [vmem:[%s3 + $0x20] sm:$0xff]
  %v2544 = vld [vmem:[%s3 + $0x28] sm:$0xff]
  %v2545 = vld [vmem:[%s3 + $0x30] sm:$0xff]
  %v2546 = vld [vmem:[%s3 + $0x38] sm:$0xff]
  %v2547 = vld [vmem:[%s3 + $0x40] sm:$0xff]
  %v2548 = vld [vmem:[%s3 + $0x48] sm:$0xff]
  %v2549 = vld [vmem:[%s3 + $0x50] sm:$0xff]
  %v2550 = vld [vmem:[%s3 + $0x58] sm:$0xff]
  %v2551 = vld [vmem:[%s3 + $0x60] sm:$0xff]
  %v2552 = vld [vmem:[%s3 + $0x68] sm:$0xff]
  %v2553 = vld [vmem:[%s3 + $0x70] sm:$0xff]
  %v2554 = vld [vmem:[%s3 + $0x78] sm:$0xff]
  %v2555 = vld [vmem:[%s3 + $0x80] sm:$0xff]
  %v2556 = vld [vmem:[%s3 + $0x88] sm:$0xff]
  %v2557 = vld [vmem:[%s3 + $0x90] sm:$0xff]
  %v2558 = vld [vmem:[%s3 + $0x98] sm:$0xff]
  %v2559 = vld [vmem:[%s3 + $0xa0] sm:$0xff]
  %v2560 = vld [vmem:[%s3 + $0xa8] sm:$0xff]
  %v2561 = vld [vmem:[%s3 + $0xb0] sm:$0xff]
  %v2562 = vld [vmem:[%s3 + $0xb8] sm:$0xff]
  %v2563 = vld [vmem:[%s3 + $0xc0] sm:$0xff]
  %v2564 = vld [vmem:[%s3 + $0xc8] sm:$0xff]
  %v2565 = vld [vmem:[%s3 + $0xd0] sm:$0xff]
  %v2566 = vld [vmem:[%s3 + $0xd8] sm:$0xff]
  %v2567 = vld [vmem:[%s3 + $0xe0] sm:$0xff]
  %v2568 = vld [vmem:[%s3 + $0xe8] sm:$0xff]
  %v2569 = vld [vmem:[%s3 + $0xf0] sm:$0xff]
  %v2570 = vld [vmem:[%s3 + $0xf8] sm:$0xff]
  %v2571 = vld [vmem:[%s3 + $0x100] sm:$0xff]
  %v2572 = vld [vmem:[%s3 + $0x108] sm:$0xff]
  %v2573 = vld [vmem:[%s3 + $0x110] sm:$0xff]
  %v2574 = vld [vmem:[%s3 + $0x118] sm:$0xff]
  %v2575 = vld [vmem:[%s3 + $0x120] sm:$0xff]
  %v2576 = vld [vmem:[%s3 + $0x128] sm:$0xff]
  %v2577 = vld [vmem:[%s3 + $0x130] sm:$0xff]
  %v2578 = vld [vmem:[%s3 + $0x138] sm:$0xff]
  %v2579 = vld [vmem:[%s3 + $0x140] sm:$0xff]
  %v2580 = vld [vmem:[%s3 + $0x148] sm:$0xff]
  %v2581 = vld [vmem:[%s3 + $0x150] sm:$0xff]
  %v2582 = vld [vmem:[%s3 + $0x158] sm:$0xff]
  %v2583 = vld [vmem:[%s3 + $0x160] sm:$0xff]
  %v2584 = vld [vmem:[%s3 + $0x168] sm:$0xff]
  %v2585 = vld [vmem:[%s3 + $0x170] sm:$0xff]
  %v2586 = vld [vmem:[%s3 + $0x178] sm:$0xff]
  %v2587 = vld [vmem:[%s3 + $0x180] sm:$0xff]
  %v2588 = vld [vmem:[%s3 + $0x188] sm:$0xff]
  %v2589 = vld [vmem:[%s3 + $0x190] sm:$0xff]
  %v2590 = vld [vmem:[%s3 + $0x198] sm:$0xff]
  %v2591 = vld [vmem:[%s3 + $0x1a0] sm:$0xff]
  %v2592 = vld [vmem:[%s3 + $0x1a8] sm:$0xff]
  %v2593 = vld [vmem:[%s3 + $0x1b0] sm:$0xff]
  %v2594 = vld [vmem:[%s3 + $0x1b8] sm:$0xff]
  %v2595 = vld [vmem:[%s3 + $0x1c0] sm:$0xff]
  %v2596 = vld [vmem:[%s3 + $0x1c8] sm:$0xff]
  %v2597 = vld [vmem:[%s3 + $0x1d0] sm:$0xff]
  %v2598 = vld [vmem:[%s3 + $0x1d8] sm:$0xff]
  %v2599 = vld [vmem:[%s3 + $0x1e0] sm:$0xff]
  %v2600 = vld [vmem:[%s3 + $0x1e8] sm:$0xff]
  %v2601 = vld [vmem:[%s3 + $0x1f0] sm:$0xff]
  %v2602 = vld [vmem:[%s3 + $0x1f8] sm:$0xff]
  %v2603 = vld [vmem:[%s3 + $0x200] sm:$0xff]
  %v2604 = vld [vmem:[%s3 + $0x208] sm:$0xff]
  %v2605 = vld [vmem:[%s3 + $0x210] sm:$0xff]
  %v2606 = vld [vmem:[%s3 + $0x218] sm:$0xff]
  %v2607 = vld [vmem:[%s3 + $0x220] sm:$0xff]
  %v2608 = vld [vmem:[%s3 + $0x228] sm:$0xff]
  %v2609 = vld [vmem:[%s3 + $0x230] sm:$0xff]
  %v2610 = vld [vmem:[%s3 + $0x238] sm:$0xff]
  %v2611 = vld [vmem:[%s3 + $0x240] sm:$0xff]
  %v2612 = vld [vmem:[%s3 + $0x248] sm:$0xff]
  %v2613 = vld [vmem:[%s3 + $0x250] sm:$0xff]
  %v2614 = vld [vmem:[%s3 + $0x258] sm:$0xff]
  %v2615 = vld [vmem:[%s3 + $0x260] sm:$0xff]
  %v2616 = vld [vmem:[%s3 + $0x268] sm:$0xff]
  %v2617 = vld [vmem:[%s3 + $0x270] sm:$0xff]
  %v2618 = vld [vmem:[%s3 + $0x278] sm:$0xff]
  %v2619 = vld [vmem:[%s4] sm:$0x3]
  %v2621 = vlaneseq
  %v2622 = vshrl.u32 %v2621, 7
  %v2623 = vsub.s32 0, %v2622
  %v2624 = vrot.slane %v2619, %v2623
  %v2625 = vlaneseq
  %v2626 = vshrl.u32 %v2625, 7
  %v2627 = vsub.s32 1, %v2626
  %v2628 = vrot.slane %v2619, %v2627
  %v2711 = vunpack.c.l.b16 %v2539
  %v2712 = vunpack.c.h.b16 %v2539
  %v2713 = vunpack.c.l.b16 %v2540
  %v2714 = vunpack.c.h.b16 %v2540
  %v2715 = vunpack.c.l.b16 %v2541
  %v2716 = vunpack.c.h.b16 %v2541
  %v2717 = vunpack.c.l.b16 %v2542
  %v2718 = vunpack.c.h.b16 %v2542
  %v2719 = vunpack.c.l.b16 %v2543
  %v2720 = vunpack.c.h.b16 %v2543
  %v2721 = vunpack.c.l.b16 %v2544
  %v2722 = vunpack.c.h.b16 %v2544
  %v2723 = vunpack.c.l.b16 %v2545
  %v2724 = vunpack.c.h.b16 %v2545
  %v2725 = vunpack.c.l.b16 %v2546
  %v2726 = vunpack.c.h.b16 %v2546
  %v2727 = vunpack.c.l.b16 %v2547
  %v2728 = vunpack.c.h.b16 %v2547
  %v2729 = vunpack.c.l.b16 %v2548
  %v2730 = vunpack.c.h.b16 %v2548
  %v2731 = vunpack.c.l.b16 %v2549
  %v2732 = vunpack.c.h.b16 %v2549
  %v2733 = vunpack.c.l.b16 %v2550
  %v2734 = vunpack.c.h.b16 %v2550
  %v2735 = vunpack.c.l.b16 %v2551
  %v2736 = vunpack.c.h.b16 %v2551
  %v2737 = vunpack.c.l.b16 %v2552
  %v2738 = vunpack.c.h.b16 %v2552
  %v2739 = vunpack.c.l.b16 %v2553
  %v2740 = vunpack.c.h.b16 %v2553
  %v2741 = vunpack.c.l.b16 %v2554
  %v2742 = vunpack.c.h.b16 %v2554
  %v2743 = vunpack.c.l.b16 %v2555
  %v2744 = vunpack.c.h.b16 %v2555
  %v2745 = vunpack.c.l.b16 %v2556
  %v2746 = vunpack.c.h.b16 %v2556
  %v2747 = vunpack.c.l.b16 %v2557
  %v2748 = vunpack.c.h.b16 %v2557
  %v2749 = vunpack.c.l.b16 %v2558
  %v2750 = vunpack.c.h.b16 %v2558
  %v2751 = vunpack.c.l.b16 %v2559
  %v2752 = vunpack.c.h.b16 %v2559
  %v2753 = vunpack.c.l.b16 %v2560
  %v2754 = vunpack.c.h.b16 %v2560
  %v2755 = vunpack.c.l.b16 %v2561
  %v2756 = vunpack.c.h.b16 %v2561
  %v2757 = vunpack.c.l.b16 %v2562
  %v2758 = vunpack.c.h.b16 %v2562
  %v2759 = vunpack.c.l.b16 %v2563
  %v2760 = vunpack.c.h.b16 %v2563
  %v2761 = vunpack.c.l.b16 %v2564
  %v2762 = vunpack.c.h.b16 %v2564
  %v2763 = vunpack.c.l.b16 %v2565
  %v2764 = vunpack.c.h.b16 %v2565
  %v2765 = vunpack.c.l.b16 %v2566
  %v2766 = vunpack.c.h.b16 %v2566
  %v2767 = vunpack.c.l.b16 %v2567
  %v2768 = vunpack.c.h.b16 %v2567
  %v2769 = vunpack.c.l.b16 %v2568
  %v2770 = vunpack.c.h.b16 %v2568
  %v2771 = vunpack.c.l.b16 %v2569
  %v2772 = vunpack.c.h.b16 %v2569
  %v2773 = vunpack.c.l.b16 %v2570
  %v2774 = vunpack.c.h.b16 %v2570
  %v2775 = vunpack.c.l.b16 %v2571
  %v2776 = vunpack.c.h.b16 %v2571
  %v2777 = vunpack.c.l.b16 %v2572
  %v2778 = vunpack.c.h.b16 %v2572
  %v2779 = vunpack.c.l.b16 %v2573
  %v2780 = vunpack.c.h.b16 %v2573
  %v2781 = vunpack.c.l.b16 %v2574
  %v2782 = vunpack.c.h.b16 %v2574
  %v2783 = vunpack.c.l.b16 %v2575
  %v2784 = vunpack.c.h.b16 %v2575
  %v2785 = vunpack.c.l.b16 %v2576
  %v2786 = vunpack.c.h.b16 %v2576
  %v2787 = vunpack.c.l.b16 %v2577
  %v2788 = vunpack.c.h.b16 %v2577
  %v2789 = vunpack.c.l.b16 %v2578
  %v2790 = vunpack.c.h.b16 %v2578
  %v2791 = vunpack.c.l.b16 %v2579
  %v2792 = vunpack.c.h.b16 %v2579
  %v2793 = vunpack.c.l.b16 %v2580
  %v2794 = vunpack.c.h.b16 %v2580
  %v2795 = vunpack.c.l.b16 %v2581
  %v2796 = vunpack.c.h.b16 %v2581
  %v2797 = vunpack.c.l.b16 %v2582
  %v2798 = vunpack.c.h.b16 %v2582
  %v2799 = vunpack.c.l.b16 %v2583
  %v2800 = vunpack.c.h.b16 %v2583
  %v2801 = vunpack.c.l.b16 %v2584
  %v2802 = vunpack.c.h.b16 %v2584
  %v2803 = vunpack.c.l.b16 %v2585
  %v2804 = vunpack.c.h.b16 %v2585
  %v2805 = vunpack.c.l.b16 %v2586
  %v2806 = vunpack.c.h.b16 %v2586
  %v2807 = vunpack.c.l.b16 %v2587
  %v2808 = vunpack.c.h.b16 %v2587
  %v2809 = vunpack.c.l.b16 %v2588
  %v2810 = vunpack.c.h.b16 %v2588
  %v2811 = vunpack.c.l.b16 %v2589
  %v2812 = vunpack.c.h.b16 %v2589
  %v2813 = vunpack.c.l.b16 %v2590
  %v2814 = vunpack.c.h.b16 %v2590
  %v2815 = vunpack.c.l.b16 %v2591
  %v2816 = vunpack.c.h.b16 %v2591
  %v2817 = vunpack.c.l.b16 %v2592
  %v2818 = vunpack.c.h.b16 %v2592
  %v2819 = vunpack.c.l.b16 %v2593
  %v2820 = vunpack.c.h.b16 %v2593
  %v2821 = vunpack.c.l.b16 %v2594
  %v2822 = vunpack.c.h.b16 %v2594
  %v2823 = vunpack.c.l.b16 %v2595
  %v2824 = vunpack.c.h.b16 %v2595
  %v2825 = vunpack.c.l.b16 %v2596
  %v2826 = vunpack.c.h.b16 %v2596
  %v2827 = vunpack.c.l.b16 %v2597
  %v2828 = vunpack.c.h.b16 %v2597
  %v2829 = vunpack.c.l.b16 %v2598
  %v2830 = vunpack.c.h.b16 %v2598
  %v2831 = vunpack.c.l.b16 %v2599
  %v2832 = vunpack.c.h.b16 %v2599
  %v2833 = vunpack.c.l.b16 %v2600
  %v2834 = vunpack.c.h.b16 %v2600
  %v2835 = vunpack.c.l.b16 %v2601
  %v2836 = vunpack.c.h.b16 %v2601
  %v2837 = vunpack.c.l.b16 %v2602
  %v2838 = vunpack.c.h.b16 %v2602
  %v2839 = vunpack.c.l.b16 %v2603
  %v2840 = vunpack.c.h.b16 %v2603
  %v2841 = vunpack.c.l.b16 %v2604
  %v2842 = vunpack.c.h.b16 %v2604
  %v2843 = vunpack.c.l.b16 %v2605
  %v2844 = vunpack.c.h.b16 %v2605
  %v2845 = vunpack.c.l.b16 %v2606
  %v2846 = vunpack.c.h.b16 %v2606
  %v2847 = vunpack.c.l.b16 %v2607
  %v2848 = vunpack.c.h.b16 %v2607
  %v2849 = vunpack.c.l.b16 %v2608
  %v2850 = vunpack.c.h.b16 %v2608
  %v2851 = vunpack.c.l.b16 %v2609
  %v2852 = vunpack.c.h.b16 %v2609
  %v2853 = vunpack.c.l.b16 %v2610
  %v2854 = vunpack.c.h.b16 %v2610
  %v2855 = vunpack.c.l.b16 %v2611
  %v2856 = vunpack.c.h.b16 %v2611
  %v2857 = vunpack.c.l.b16 %v2612
  %v2858 = vunpack.c.h.b16 %v2612
  %v2859 = vunpack.c.l.b16 %v2613
  %v2860 = vunpack.c.h.b16 %v2613
  %v2861 = vunpack.c.l.b16 %v2614
  %v2862 = vunpack.c.h.b16 %v2614
  %v2863 = vunpack.c.l.b16 %v2615
  %v2864 = vunpack.c.h.b16 %v2615
  %v2865 = vunpack.c.l.b16 %v2616
  %v2866 = vunpack.c.h.b16 %v2616
  %v2867 = vunpack.c.l.b16 %v2617
  %v2868 = vunpack.c.h.b16 %v2617
  %v2869 = vunpack.c.l.b16 %v2618
  %v2870 = vunpack.c.h.b16 %v2618
  %v2871 = vpack.c.b16 %v2713, %v2711
  %v2872 = vpack.c.b16 %v2714, %v2712
  %v2873 = vpack.c.b16 %v2717, %v2715
  %v2874 = vpack.c.b16 %v2718, %v2716
  %v2875 = vpack.c.b16 %v2721, %v2719
  %v2876 = vpack.c.b16 %v2722, %v2720
  %v2877 = vpack.c.b16 %v2725, %v2723
  %v2878 = vpack.c.b16 %v2726, %v2724
  %v2879 = vpack.c.b16 %v2729, %v2727
  %v2880 = vpack.c.b16 %v2730, %v2728
  %v2881 = vpack.c.b16 %v2733, %v2731
  %v2882 = vpack.c.b16 %v2734, %v2732
  %v2883 = vpack.c.b16 %v2737, %v2735
  %v2884 = vpack.c.b16 %v2738, %v2736
  %v2885 = vpack.c.b16 %v2741, %v2739
  %v2886 = vpack.c.b16 %v2742, %v2740
  %v2887 = vpack.c.b16 %v2745, %v2743
  %v2888 = vpack.c.b16 %v2746, %v2744
  %v2889 = vpack.c.b16 %v2749, %v2747
  %v2890 = vpack.c.b16 %v2750, %v2748
  %v2891 = vpack.c.b16 %v2753, %v2751
  %v2892 = vpack.c.b16 %v2754, %v2752
  %v2893 = vpack.c.b16 %v2757, %v2755
  %v2894 = vpack.c.b16 %v2758, %v2756
  %v2895 = vpack.c.b16 %v2761, %v2759
  %v2896 = vpack.c.b16 %v2762, %v2760
  %v2897 = vpack.c.b16 %v2765, %v2763
  %v2898 = vpack.c.b16 %v2766, %v2764
  %v2899 = vpack.c.b16 %v2769, %v2767
  %v2900 = vpack.c.b16 %v2770, %v2768
  %v2901 = vpack.c.b16 %v2773, %v2771
  %v2902 = vpack.c.b16 %v2774, %v2772
  %v2903 = vpack.c.b16 %v2777, %v2775
  %v2904 = vpack.c.b16 %v2778, %v2776
  %v2905 = vpack.c.b16 %v2781, %v2779
  %v2906 = vpack.c.b16 %v2782, %v2780
  %v2907 = vpack.c.b16 %v2785, %v2783
  %v2908 = vpack.c.b16 %v2786, %v2784
  %v2909 = vpack.c.b16 %v2789, %v2787
  %v2910 = vpack.c.b16 %v2790, %v2788
  %v2911 = vpack.c.b16 %v2793, %v2791
  %v2912 = vpack.c.b16 %v2794, %v2792
  %v2913 = vpack.c.b16 %v2797, %v2795
  %v2914 = vpack.c.b16 %v2798, %v2796
  %v2915 = vpack.c.b16 %v2801, %v2799
  %v2916 = vpack.c.b16 %v2802, %v2800
  %v2917 = vpack.c.b16 %v2805, %v2803
  %v2918 = vpack.c.b16 %v2806, %v2804
  %v2919 = vpack.c.b16 %v2809, %v2807
  %v2920 = vpack.c.b16 %v2810, %v2808
  %v2921 = vpack.c.b16 %v2813, %v2811
  %v2922 = vpack.c.b16 %v2814, %v2812
  %v2923 = vpack.c.b16 %v2817, %v2815
  %v2924 = vpack.c.b16 %v2818, %v2816
  %v2925 = vpack.c.b16 %v2821, %v2819
  %v2926 = vpack.c.b16 %v2822, %v2820
  %v2927 = vpack.c.b16 %v2825, %v2823
  %v2928 = vpack.c.b16 %v2826, %v2824
  %v2929 = vpack.c.b16 %v2829, %v2827
  %v2930 = vpack.c.b16 %v2830, %v2828
  %v2931 = vpack.c.b16 %v2833, %v2831
  %v2932 = vpack.c.b16 %v2834, %v2832
  %v2933 = vpack.c.b16 %v2837, %v2835
  %v2934 = vpack.c.b16 %v2838, %v2836
  %v2935 = vpack.c.b16 %v2841, %v2839
  %v2936 = vpack.c.b16 %v2842, %v2840
  %v2937 = vpack.c.b16 %v2845, %v2843
  %v2938 = vpack.c.b16 %v2846, %v2844
  %v2939 = vpack.c.b16 %v2849, %v2847
  %v2940 = vpack.c.b16 %v2850, %v2848
  %v2941 = vpack.c.b16 %v2853, %v2851
  %v2942 = vpack.c.b16 %v2854, %v2852
  %v2943 = vpack.c.b16 %v2857, %v2855
  %v2944 = vpack.c.b16 %v2858, %v2856
  %v2945 = vpack.c.b16 %v2861, %v2859
  %v2946 = vpack.c.b16 %v2862, %v2860
  %v2947 = vpack.c.b16 %v2865, %v2863
  %v2948 = vpack.c.b16 %v2866, %v2864
  %v2949 = vpack.c.b16 %v2869, %v2867
  %v2950 = vpack.c.b16 %v2870, %v2868
  %3031 = vmatprep.subr.bf16.mxu0 %v2886
  %3032 = vmatpush1.bf16.msra.mxu0 %v2885
  %3033 = vmatprep.subr.bf16.mxu0 %v2884
  %3034 = vmatpush1.bf16.msra.mxu0 %v2883
  %3035 = vmatprep.subr.bf16.mxu0 %v2882
  %3036 = vmatpush1.bf16.msra.mxu0 %v2881
  %3037 = vmatprep.subr.bf16.mxu0 %v2880
  %3038 = vmatpush1.bf16.msra.mxu0 %v2879
  %3039 = vmatprep.subr.bf16.mxu0 %v2878
  %3040 = vmatpush1.bf16.msra.mxu0 %v2877
  %3041 = vmatprep.subr.bf16.mxu0 %v2876
  %3042 = vmatpush1.bf16.msra.mxu0 %v2875
  %3043 = vmatprep.subr.bf16.mxu0 %v2874
  %3044 = vmatpush1.bf16.msra.mxu0 %v2873
  %3045 = vmatprep.subr.bf16.mxu0 %v2872
  %3046 = vmatpush1.bf16.msra.mxu0 %v2871
  %3047 = vmatprep.subr.bf16.mxu0 %v2902
  %3048 = vmatpush2.bf16.msra.mxu0 %v2901
  %3049 = vmatprep.subr.bf16.mxu0 %v2900
  %3050 = vmatpush2.bf16.msra.mxu0 %v2899
  %3051 = vmatprep.subr.bf16.mxu0 %v2898
  %3052 = vmatpush2.bf16.msra.mxu0 %v2897
  %3053 = vmatprep.subr.bf16.mxu0 %v2896
  %3054 = vmatpush2.bf16.msra.mxu0 %v2895
  %3055 = vmatprep.subr.bf16.mxu0 %v2894
  %3056 = vmatpush2.bf16.msra.mxu0 %v2893
  %3057 = vmatprep.subr.bf16.mxu0 %v2892
  %3058 = vmatpush2.bf16.msra.mxu0 %v2891
  %3059 = vmatprep.subr.bf16.mxu0 %v2890
  %3060 = vmatpush2.bf16.msra.mxu0 %v2889
  %3061 = vmatprep.subr.bf16.mxu0 %v2888
  %3062 = vmatpush2.bf16.msra.mxu0 %v2887
  %3063 = vmatprep.mubr.bf16.mxu0 %v2513
  %3064 = vmatmul.mubr.bf16.gmra.mxu0 %v2511
  %v3065 = vpop.f32.mrf.mxu0
  %v3066 = vadd.f32 %v2624, %v3065
  %v3067 = vpop.f32.mrf.mxu0
  %v3068 = vadd.f32 %v2628, %v3067
  %v3069 = vpop.f32.mrf.mxu0
  %v3070 = vadd.f32 %v2624, %v3069
  %v3071 = vpop.f32.mrf.mxu0
  %v3072 = vadd.f32 %v2628, %v3071
  %3073 = vmatprep.mubr.bf16.mxu0 %v2514
  %3074 = vmatmul.mubr.bf16.gmra.mxu0 %v2512
  %v3075 = vpop.f32.mrf.mxu0
  %v3076 = vadd.f32 %v2624, %v3075
  %v3077 = vpop.f32.mrf.mxu0
  %v3078 = vadd.f32 %v2628, %v3077
  %v3079 = vpop.f32.mrf.mxu0
  %v3080 = vadd.f32 %v2624, %v3079
  %v3081 = vpop.f32.mrf.mxu0
  %v3082 = vadd.f32 %v2628, %v3081
  %3083 = vmatprep.mubr.bf16.mxu0 %v2515
  %3084 = vmatmul.mubr.bf16.gmra.mxu0 %v2513
  %v3085 = vpop.f32.mrf.mxu0
  %v3086 = vadd.f32 %v2624, %v3085
  %v3087 = vpop.f32.mrf.mxu0
  %v3088 = vadd.f32 %v2628, %v3087
  %v3089 = vpop.f32.mrf.mxu0
  %v3090 = vadd.f32 %v2624, %v3089
  %v3091 = vpop.f32.mrf.mxu0
  %v3092 = vadd.f32 %v2628, %v3091
  %3093 = vmatprep.mubr.bf16.mxu0 %v2516
  %3094 = vmatmul.mubr.bf16.gmra.mxu0 %v2514
  %v3095 = vpop.f32.mrf.mxu0
  %v3096 = vadd.f32 %v2624, %v3095
  %v3097 = vpop.f32.mrf.mxu0
  %v3098 = vadd.f32 %v2628, %v3097
  %v3099 = vpop.f32.mrf.mxu0
  %v3100 = vadd.f32 %v2624, %v3099
  %v3101 = vpop.f32.mrf.mxu0
  %v3102 = vadd.f32 %v2628, %v3101
  %3103 = vmatprep.mubr.bf16.mxu0 %v2517
  %3104 = vmatmul.mubr.bf16.gmra.mxu0 %v2515
  %v3105 = vpop.f32.mrf.mxu0
  %v3106 = vadd.f32 %v2624, %v3105
  %v3107 = vpop.f32.mrf.mxu0
  %v3108 = vadd.f32 %v2628, %v3107
  %v3109 = vpop.f32.mrf.mxu0
  %v3110 = vadd.f32 %v2624, %v3109
  %v3111 = vpop.f32.mrf.mxu0
  %v3112 = vadd.f32 %v2628, %v3111
  %3113 = vmatprep.mubr.bf16.mxu0 %v2518
  %3114 = vmatmul.mubr.bf16.gmra.mxu0 %v2516
  %v3115 = vpop.f32.mrf.mxu0
  %v3116 = vadd.f32 %v2624, %v3115
  %v3117 = vpop.f32.mrf.mxu0
  %v3118 = vadd.f32 %v2628, %v3117
  %v3119 = vpop.f32.mrf.mxu0
  %v3120 = vadd.f32 %v2624, %v3119
  %v3121 = vpop.f32.mrf.mxu0
  %v3122 = vadd.f32 %v2628, %v3121
  %3123 = vmatprep.mubr.bf16.mxu0 %v2519
  %3124 = vmatmul.mubr.bf16.gmra.mxu0 %v2517
  %v3125 = vpop.f32.mrf.mxu0
  %v3126 = vadd.f32 %v2624, %v3125
  %v3127 = vpop.f32.mrf.mxu0
  %v3128 = vadd.f32 %v2628, %v3127
  %v3129 = vpop.f32.mrf.mxu0
  %v3130 = vadd.f32 %v2624, %v3129
  %v3131 = vpop.f32.mrf.mxu0
  %v3132 = vadd.f32 %v2628, %v3131
  %3133 = vmatprep.mubr.bf16.mxu0 %v2520
  %3134 = vmatmul.mubr.bf16.gmra.mxu0 %v2518
  %v3135 = vpop.f32.mrf.mxu0
  %v3136 = vadd.f32 %v2624, %v3135
  %v3137 = vpop.f32.mrf.mxu0
  %v3138 = vadd.f32 %v2628, %v3137
  %v3139 = vpop.f32.mrf.mxu0
  %v3140 = vadd.f32 %v2624, %v3139
  %v3141 = vpop.f32.mrf.mxu0
  %v3142 = vadd.f32 %v2628, %v3141
  %3143 = vmatprep.mubr.bf16.mxu0 %v2521
  %3144 = vmatmul.mubr.bf16.gmra.mxu0 %v2519
  %v3145 = vpop.f32.mrf.mxu0
  %v3146 = vadd.f32 %v2624, %v3145
  %v3147 = vpop.f32.mrf.mxu0
  %v3148 = vadd.f32 %v2628, %v3147
  %v3149 = vpop.f32.mrf.mxu0
  %v3150 = vadd.f32 %v2624, %v3149
  %v3151 = vpop.f32.mrf.mxu0
  %v3152 = vadd.f32 %v2628, %v3151
  %3153 = vmatprep.mubr.bf16.mxu0 %v2522
  %3154 = vmatmul.mubr.bf16.gmra.mxu0 %v2520
  %v3155 = vpop.f32.mrf.mxu0
  %v3156 = vadd.f32 %v2624, %v3155
  %v3157 = vpop.f32.mrf.mxu0
  %v3158 = vadd.f32 %v2628, %v3157
  %v3159 = vpop.f32.mrf.mxu0
  %v3160 = vadd.f32 %v2624, %v3159
  %v3161 = vpop.f32.mrf.mxu0
  %v3162 = vadd.f32 %v2628, %v3161
  %3163 = vmatprep.mubr.bf16.mxu0 %v2523
  %3164 = vmatmul.mubr.bf16.gmra.mxu0 %v2521
  %v3165 = vpop.f32.mrf.mxu0
  %v3166 = vadd.f32 %v2624, %v3165
  %v3167 = vpop.f32.mrf.mxu0
  %v3168 = vadd.f32 %v2628, %v3167
  %v3169 = vpop.f32.mrf.mxu0
  %v3170 = vadd.f32 %v2624, %v3169
  %v3171 = vpop.f32.mrf.mxu0
  %v3172 = vadd.f32 %v2628, %v3171
  %3173 = vmatprep.mubr.bf16.mxu0 %v2524
  %3174 = vmatmul.mubr.bf16.gmra.mxu0 %v2522
  %v3175 = vpop.f32.mrf.mxu0
  %v3176 = vadd.f32 %v2624, %v3175
  %v3177 = vpop.f32.mrf.mxu0
  %v3178 = vadd.f32 %v2628, %v3177
  %v3179 = vpop.f32.mrf.mxu0
  %v3180 = vadd.f32 %v2624, %v3179
  %v3181 = vpop.f32.mrf.mxu0
  %v3182 = vadd.f32 %v2628, %v3181
  %3183 = vmatprep.mubr.bf16.mxu0 %v2525
  %3184 = vmatmul.mubr.bf16.gmra.mxu0 %v2523
  %v3185 = vpop.f32.mrf.mxu0
  %v3186 = vadd.f32 %v2624, %v3185
  %v3187 = vpop.f32.mrf.mxu0
  %v3188 = vadd.f32 %v2628, %v3187
  %v3189 = vpop.f32.mrf.mxu0
  %v3190 = vadd.f32 %v2624, %v3189
  %v3191 = vpop.f32.mrf.mxu0
  %v3192 = vadd.f32 %v2628, %v3191
  %3193 = vmatprep.mubr.bf16.mxu0 %v2526
  %3194 = vmatmul.mubr.bf16.gmra.mxu0 %v2524
  %v3195 = vpop.f32.mrf.mxu0
  %v3196 = vadd.f32 %v2624, %v3195
  %v3197 = vpop.f32.mrf.mxu0
  %v3198 = vadd.f32 %v2628, %v3197
  %v3199 = vpop.f32.mrf.mxu0
  %v3200 = vadd.f32 %v2624, %v3199
  %v3201 = vpop.f32.mrf.mxu0
  %v3202 = vadd.f32 %v2628, %v3201
  %3203 = vmatprep.mubr.bf16.mxu0 %v2527
  %3204 = vmatmul.mubr.bf16.gmra.mxu0 %v2525
  %v3205 = vpop.f32.mrf.mxu0
  %v3206 = vadd.f32 %v2624, %v3205
  %v3207 = vpop.f32.mrf.mxu0
  %v3208 = vadd.f32 %v2628, %v3207
  %v3209 = vpop.f32.mrf.mxu0
  %v3210 = vadd.f32 %v2624, %v3209
  %v3211 = vpop.f32.mrf.mxu0
  %v3212 = vadd.f32 %v2628, %v3211
  %3213 = vmatprep.mubr.bf16.mxu0 %v2528
  %3214 = vmatmul.mubr.bf16.gmra.mxu0 %v2526
  %v3215 = vpop.f32.mrf.mxu0
  %v3216 = vadd.f32 %v2624, %v3215
  %v3217 = vpop.f32.mrf.mxu0
  %v3218 = vadd.f32 %v2628, %v3217
  %v3219 = vpop.f32.mrf.mxu0
  %v3220 = vadd.f32 %v2624, %v3219
  %v3221 = vpop.f32.mrf.mxu0
  %v3222 = vadd.f32 %v2628, %v3221
  %3223 = vmatprep.mubr.bf16.mxu0 %v2529
  %3224 = vmatmul.mubr.bf16.gmra.mxu0 %v2527
  %v3225 = vpop.f32.mrf.mxu0
  %v3226 = vadd.f32 %v2624, %v3225
  %v3227 = vpop.f32.mrf.mxu0
  %v3228 = vadd.f32 %v2628, %v3227
  %v3229 = vpop.f32.mrf.mxu0
  %v3230 = vadd.f32 %v2624, %v3229
  %v3231 = vpop.f32.mrf.mxu0
  %v3232 = vadd.f32 %v2628, %v3231
  %3233 = vmatprep.mubr.bf16.mxu0 %v2530
  %3234 = vmatmul.mubr.bf16.gmra.mxu0 %v2528
  %v3235 = vpop.f32.mrf.mxu0
  %v3236 = vadd.f32 %v2624, %v3235
  %v3237 = vpop.f32.mrf.mxu0
  %v3238 = vadd.f32 %v2628, %v3237
  %v3239 = vpop.f32.mrf.mxu0
  %v3240 = vadd.f32 %v2624, %v3239
  %v3241 = vpop.f32.mrf.mxu0
  %v3242 = vadd.f32 %v2628, %v3241
  %3243 = vmatprep.mubr.bf16.mxu0 %v2531
  %3244 = vmatmul.mubr.bf16.gmra.mxu0 %v2529
  %v3245 = vpop.f32.mrf.mxu0
  %v3246 = vadd.f32 %v2624, %v3245
  %v3247 = vpop.f32.mrf.mxu0
  %v3248 = vadd.f32 %v2628, %v3247
  %v3249 = vpop.f32.mrf.mxu0
  %v3250 = vadd.f32 %v2624, %v3249
  %v3251 = vpop.f32.mrf.mxu0
  %v3252 = vadd.f32 %v2628, %v3251
  %3253 = vmatprep.mubr.bf16.mxu0 %v2532
  %3254 = vmatmul.mubr.bf16.gmra.mxu0 %v2530
  %v3255 = vpop.f32.mrf.mxu0
  %v3256 = vadd.f32 %v2624, %v3255
  %v3257 = vpop.f32.mrf.mxu0
  %v3258 = vadd.f32 %v2628, %v3257
  %v3259 = vpop.f32.mrf.mxu0
  %v3260 = vadd.f32 %v2624, %v3259
  %v3261 = vpop.f32.mrf.mxu0
  %v3262 = vadd.f32 %v2628, %v3261
  %3263 = vdwg.mxu0
  %3264 = vmatprep.subr.bf16.mxu0 %v2918
  %3265 = vmatpush1.bf16.msra.mxu0 %v2917
  %3266 = vmatprep.subr.bf16.mxu0 %v2916
  %3267 = vmatpush1.bf16.msra.mxu0 %v2915
  %3268 = vmatprep.subr.bf16.mxu0 %v2914
  %3269 = vmatpush1.bf16.msra.mxu0 %v2913
  %3270 = vmatprep.subr.bf16.mxu0 %v2912
  %3271 = vmatpush1.bf16.msra.mxu0 %v2911
  %3272 = vmatprep.subr.bf16.mxu0 %v2910
  %3273 = vmatpush1.bf16.msra.mxu0 %v2909
  %3274 = vmatprep.subr.bf16.mxu0 %v2908
  %3275 = vmatpush1.bf16.msra.mxu0 %v2907
  %3276 = vmatprep.subr.bf16.mxu0 %v2906
  %3277 = vmatpush1.bf16.msra.mxu0 %v2905
  %3278 = vmatprep.subr.bf16.mxu0 %v2904
  %3279 = vmatpush1.bf16.msra.mxu0 %v2903
  %3280 = vmatprep.subr.bf16.mxu0 %v2934
  %3281 = vmatpush2.bf16.msra.mxu0 %v2933
  %3282 = vmatprep.subr.bf16.mxu0 %v2932
  %3283 = vmatpush2.bf16.msra.mxu0 %v2931
  %3284 = vmatprep.subr.bf16.mxu0 %v2930
  %3285 = vmatpush2.bf16.msra.mxu0 %v2929
  %3286 = vmatprep.subr.bf16.mxu0 %v2928
  %3287 = vmatpush2.bf16.msra.mxu0 %v2927
  %3288 = vmatprep.subr.bf16.mxu0 %v2926
  %3289 = vmatpush2.bf16.msra.mxu0 %v2925
  %3290 = vmatprep.subr.bf16.mxu0 %v2924
  %3291 = vmatpush2.bf16.msra.mxu0 %v2923
  %3292 = vmatprep.subr.bf16.mxu0 %v2922
  %3293 = vmatpush2.bf16.msra.mxu0 %v2921
  %3294 = vmatprep.subr.bf16.mxu0 %v2920
  %3295 = vmatpush2.bf16.msra.mxu0 %v2919
  %3296 = vmatprep.mubr.bf16.mxu0 %v2517
  %3297 = vmatmul.mubr.bf16.gmra.mxu0 %v2515
  %v3298 = vpop.f32.mrf.mxu0
  %v3299 = vadd.f32 %v3066, %v3298
  %v3300 = vpop.f32.mrf.mxu0
  %v3301 = vadd.f32 %v3068, %v3300
  %v3302 = vpop.f32.mrf.mxu0
  %v3303 = vadd.f32 %v3070, %v3302
  %v3304 = vpop.f32.mrf.mxu0
  %v3305 = vadd.f32 %v3072, %v3304
  %3306 = vmatprep.mubr.bf16.mxu0 %v2518
  %3307 = vmatmul.mubr.bf16.gmra.mxu0 %v2516
  %v3308 = vpop.f32.mrf.mxu0
  %v3309 = vadd.f32 %v3076, %v3308
  %v3310 = vpop.f32.mrf.mxu0
  %v3311 = vadd.f32 %v3078, %v3310
  %v3312 = vpop.f32.mrf.mxu0
  %v3313 = vadd.f32 %v3080, %v3312
  %v3314 = vpop.f32.mrf.mxu0
  %v3315 = vadd.f32 %v3082, %v3314
  %3316 = vmatprep.mubr.bf16.mxu0 %v2519
  %3317 = vmatmul.mubr.bf16.gmra.mxu0 %v2517
  %v3318 = vpop.f32.mrf.mxu0
  %v3319 = vadd.f32 %v3086, %v3318
  %v3320 = vpop.f32.mrf.mxu0
  %v3321 = vadd.f32 %v3088, %v3320
  %v3322 = vpop.f32.mrf.mxu0
  %v3323 = vadd.f32 %v3090, %v3322
  %v3324 = vpop.f32.mrf.mxu0
  %v3325 = vadd.f32 %v3092, %v3324
  %3326 = vmatprep.mubr.bf16.mxu0 %v2520
  %3327 = vmatmul.mubr.bf16.gmra.mxu0 %v2518
  %v3328 = vpop.f32.mrf.mxu0
  %v3329 = vadd.f32 %v3096, %v3328
  %v3330 = vpop.f32.mrf.mxu0
  %v3331 = vadd.f32 %v3098, %v3330
  %v3332 = vpop.f32.mrf.mxu0
  %v3333 = vadd.f32 %v3100, %v3332
  %v3334 = vpop.f32.mrf.mxu0
  %v3335 = vadd.f32 %v3102, %v3334
  %3336 = vmatprep.mubr.bf16.mxu0 %v2521
  %3337 = vmatmul.mubr.bf16.gmra.mxu0 %v2519
  %v3338 = vpop.f32.mrf.mxu0
  %v3339 = vadd.f32 %v3106, %v3338
  %v3340 = vpop.f32.mrf.mxu0
  %v3341 = vadd.f32 %v3108, %v3340
  %v3342 = vpop.f32.mrf.mxu0
  %v3343 = vadd.f32 %v3110, %v3342
  %v3344 = vpop.f32.mrf.mxu0
  %v3345 = vadd.f32 %v3112, %v3344
  %3346 = vmatprep.mubr.bf16.mxu0 %v2522
  %3347 = vmatmul.mubr.bf16.gmra.mxu0 %v2520
  %v3348 = vpop.f32.mrf.mxu0
  %v3349 = vadd.f32 %v3116, %v3348
  %v3350 = vpop.f32.mrf.mxu0
  %v3351 = vadd.f32 %v3118, %v3350
  %v3352 = vpop.f32.mrf.mxu0
  %v3353 = vadd.f32 %v3120, %v3352
  %v3354 = vpop.f32.mrf.mxu0
  %v3355 = vadd.f32 %v3122, %v3354
  %3356 = vmatprep.mubr.bf16.mxu0 %v2523
  %3357 = vmatmul.mubr.bf16.gmra.mxu0 %v2521
  %v3358 = vpop.f32.mrf.mxu0
  %v3359 = vadd.f32 %v3126, %v3358
  %v3360 = vpop.f32.mrf.mxu0
  %v3361 = vadd.f32 %v3128, %v3360
  %v3362 = vpop.f32.mrf.mxu0
  %v3363 = vadd.f32 %v3130, %v3362
  %v3364 = vpop.f32.mrf.mxu0
  %v3365 = vadd.f32 %v3132, %v3364
  %3366 = vmatprep.mubr.bf16.mxu0 %v2524
  %3367 = vmatmul.mubr.bf16.gmra.mxu0 %v2522
  %v3368 = vpop.f32.mrf.mxu0
  %v3369 = vadd.f32 %v3136, %v3368
  %v3370 = vpop.f32.mrf.mxu0
  %v3371 = vadd.f32 %v3138, %v3370
  %v3372 = vpop.f32.mrf.mxu0
  %v3373 = vadd.f32 %v3140, %v3372
  %v3374 = vpop.f32.mrf.mxu0
  %v3375 = vadd.f32 %v3142, %v3374
  %3376 = vmatprep.mubr.bf16.mxu0 %v2525
  %3377 = vmatmul.mubr.bf16.gmra.mxu0 %v2523
  %v3378 = vpop.f32.mrf.mxu0
  %v3379 = vadd.f32 %v3146, %v3378
  %v3380 = vpop.f32.mrf.mxu0
  %v3381 = vadd.f32 %v3148, %v3380
  %v3382 = vpop.f32.mrf.mxu0
  %v3383 = vadd.f32 %v3150, %v3382
  %v3384 = vpop.f32.mrf.mxu0
  %v3385 = vadd.f32 %v3152, %v3384
  %3386 = vmatprep.mubr.bf16.mxu0 %v2526
  %3387 = vmatmul.mubr.bf16.gmra.mxu0 %v2524
  %v3388 = vpop.f32.mrf.mxu0
  %v3389 = vadd.f32 %v3156, %v3388
  %v3390 = vpop.f32.mrf.mxu0
  %v3391 = vadd.f32 %v3158, %v3390
  %v3392 = vpop.f32.mrf.mxu0
  %v3393 = vadd.f32 %v3160, %v3392
  %v3394 = vpop.f32.mrf.mxu0
  %v3395 = vadd.f32 %v3162, %v3394
  %3396 = vmatprep.mubr.bf16.mxu0 %v2527
  %3397 = vmatmul.mubr.bf16.gmra.mxu0 %v2525
  %v3398 = vpop.f32.mrf.mxu0
  %v3399 = vadd.f32 %v3166, %v3398
  %v3400 = vpop.f32.mrf.mxu0
  %v3401 = vadd.f32 %v3168, %v3400
  %v3402 = vpop.f32.mrf.mxu0
  %v3403 = vadd.f32 %v3170, %v3402
  %v3404 = vpop.f32.mrf.mxu0
  %v3405 = vadd.f32 %v3172, %v3404
  %3406 = vmatprep.mubr.bf16.mxu0 %v2528
  %3407 = vmatmul.mubr.bf16.gmra.mxu0 %v2526
  %v3408 = vpop.f32.mrf.mxu0
  %v3409 = vadd.f32 %v3176, %v3408
  %v3410 = vpop.f32.mrf.mxu0
  %v3411 = vadd.f32 %v3178, %v3410
  %v3412 = vpop.f32.mrf.mxu0
  %v3413 = vadd.f32 %v3180, %v3412
  %v3414 = vpop.f32.mrf.mxu0
  %v3415 = vadd.f32 %v3182, %v3414
  %3416 = vmatprep.mubr.bf16.mxu0 %v2529
  %3417 = vmatmul.mubr.bf16.gmra.mxu0 %v2527
  %v3418 = vpop.f32.mrf.mxu0
  %v3419 = vadd.f32 %v3186, %v3418
  %v3420 = vpop.f32.mrf.mxu0
  %v3421 = vadd.f32 %v3188, %v3420
  %v3422 = vpop.f32.mrf.mxu0
  %v3423 = vadd.f32 %v3190, %v3422
  %v3424 = vpop.f32.mrf.mxu0
  %v3425 = vadd.f32 %v3192, %v3424
  %3426 = vmatprep.mubr.bf16.mxu0 %v2530
  %3427 = vmatmul.mubr.bf16.gmra.mxu0 %v2528
  %v3428 = vpop.f32.mrf.mxu0
  %v3429 = vadd.f32 %v3196, %v3428
  %v3430 = vpop.f32.mrf.mxu0
  %v3431 = vadd.f32 %v3198, %v3430
  %v3432 = vpop.f32.mrf.mxu0
  %v3433 = vadd.f32 %v3200, %v3432
  %v3434 = vpop.f32.mrf.mxu0
  %v3435 = vadd.f32 %v3202, %v3434
  %3436 = vmatprep.mubr.bf16.mxu0 %v2531
  %3437 = vmatmul.mubr.bf16.gmra.mxu0 %v2529
  %v3438 = vpop.f32.mrf.mxu0
  %v3439 = vadd.f32 %v3206, %v3438
  %v3440 = vpop.f32.mrf.mxu0
  %v3441 = vadd.f32 %v3208, %v3440
  %v3442 = vpop.f32.mrf.mxu0
  %v3443 = vadd.f32 %v3210, %v3442
  %v3444 = vpop.f32.mrf.mxu0
  %v3445 = vadd.f32 %v3212, %v3444
  %3446 = vmatprep.mubr.bf16.mxu0 %v2532
  %3447 = vmatmul.mubr.bf16.gmra.mxu0 %v2530
  %v3448 = vpop.f32.mrf.mxu0
  %v3449 = vadd.f32 %v3216, %v3448
  %v3450 = vpop.f32.mrf.mxu0
  %v3451 = vadd.f32 %v3218, %v3450
  %v3452 = vpop.f32.mrf.mxu0
  %v3453 = vadd.f32 %v3220, %v3452
  %v3454 = vpop.f32.mrf.mxu0
  %v3455 = vadd.f32 %v3222, %v3454
  %3456 = vmatprep.mubr.bf16.mxu0 %v2533
  %3457 = vmatmul.mubr.bf16.gmra.mxu0 %v2531
  %v3458 = vpop.f32.mrf.mxu0
  %v3459 = vadd.f32 %v3226, %v3458
  %v3460 = vpop.f32.mrf.mxu0
  %v3461 = vadd.f32 %v3228, %v3460
  %v3462 = vpop.f32.mrf.mxu0
  %v3463 = vadd.f32 %v3230, %v3462
  %v3464 = vpop.f32.mrf.mxu0
  %v3465 = vadd.f32 %v3232, %v3464
  %3466 = vmatprep.mubr.bf16.mxu0 %v2534
  %3467 = vmatmul.mubr.bf16.gmra.mxu0 %v2532
  %v3468 = vpop.f32.mrf.mxu0
  %v3469 = vadd.f32 %v3236, %v3468
  %v3470 = vpop.f32.mrf.mxu0
  %v3471 = vadd.f32 %v3238, %v3470
  %v3472 = vpop.f32.mrf.mxu0
  %v3473 = vadd.f32 %v3240, %v3472
  %v3474 = vpop.f32.mrf.mxu0
  %v3475 = vadd.f32 %v3242, %v3474
  %3476 = vmatprep.mubr.bf16.mxu0 %v2535
  %3477 = vmatmul.mubr.bf16.gmra.mxu0 %v2533
  %v3478 = vpop.f32.mrf.mxu0
  %v3479 = vadd.f32 %v3246, %v3478
  %v3480 = vpop.f32.mrf.mxu0
  %v3481 = vadd.f32 %v3248, %v3480
  %v3482 = vpop.f32.mrf.mxu0
  %v3483 = vadd.f32 %v3250, %v3482
  %v3484 = vpop.f32.mrf.mxu0
  %v3485 = vadd.f32 %v3252, %v3484
  %3486 = vmatprep.mubr.bf16.mxu0 %v2536
  %3487 = vmatmul.mubr.bf16.gmra.mxu0 %v2534
  %v3488 = vpop.f32.mrf.mxu0
  %v3489 = vadd.f32 %v3256, %v3488
  %v3490 = vpop.f32.mrf.mxu0
  %v3491 = vadd.f32 %v3258, %v3490
  %v3492 = vpop.f32.mrf.mxu0
  %v3493 = vadd.f32 %v3260, %v3492
  %v3494 = vpop.f32.mrf.mxu0
  %v3495 = vadd.f32 %v3262, %v3494
  %3496 = vdwg.mxu0
  %3497 = vmatprep.subr.bf16.mxu0 %v2950
  %3498 = vmatpush1.bf16.msra.mxu0 %v2949
  %3499 = vmatprep.subr.bf16.mxu0 %v2948
  %3500 = vmatpush1.bf16.msra.mxu0 %v2947
  %3501 = vmatprep.subr.bf16.mxu0 %v2946
  %3502 = vmatpush1.bf16.msra.mxu0 %v2945
  %3503 = vmatprep.subr.bf16.mxu0 %v2944
  %3504 = vmatpush1.bf16.msra.mxu0 %v2943
  %3505 = vmatprep.subr.bf16.mxu0 %v2942
  %3506 = vmatpush1.bf16.msra.mxu0 %v2941
  %3507 = vmatprep.subr.bf16.mxu0 %v2940
  %3508 = vmatpush1.bf16.msra.mxu0 %v2939
  %3509 = vmatprep.subr.bf16.mxu0 %v2938
  %3510 = vmatpush1.bf16.msra.mxu0 %v2937
  %3511 = vmatprep.subr.bf16.mxu0 %v2936
  %3512 = vmatpush1.bf16.msra.mxu0 %v2935
  %3513 = vmatprep.subr.bf16.mxu0 0
  %3514 = vmatpush2.bf16.msra.mxu0 0
  %3515 = vmatprep.subr.bf16.mxu0 0
  %3516 = vmatpush2.bf16.msra.mxu0 0
  %3517 = vmatprep.subr.bf16.mxu0 0
  %3518 = vmatpush2.bf16.msra.mxu0 0
  %3519 = vmatprep.subr.bf16.mxu0 0
  %3520 = vmatpush2.bf16.msra.mxu0 0
  %3521 = vmatprep.subr.bf16.mxu0 0
  %3522 = vmatpush2.bf16.msra.mxu0 0
  %3523 = vmatprep.subr.bf16.mxu0 0
  %3524 = vmatpush2.bf16.msra.mxu0 0
  %3525 = vmatprep.subr.bf16.mxu0 0
  %3526 = vmatpush2.bf16.msra.mxu0 0
  %3527 = vmatprep.subr.bf16.mxu0 0
  %3528 = vmatpush2.bf16.msra.mxu0 0
  %3529 = vmatprep.mubr.bf16.mxu0 0
  %3530 = vmatmul.mubr.bf16.gmra.mxu0 %v2519
  %v3531 = vpop.f32.mrf.mxu0
  %v3532 = vadd.f32 %v3299, %v3531
  %v3533 = vpop.f32.mrf.mxu0
  %v3534 = vadd.f32 %v3301, %v3533
  %v3535 = vpop.f32.mrf.mxu0
  %v3536 = vadd.f32 %v3303, %v3535
  %v3537 = vpop.f32.mrf.mxu0
  %v3538 = vadd.f32 %v3305, %v3537
  %3539 = vmatprep.mubr.bf16.mxu0 0
  %3540 = vmatmul.mubr.bf16.gmra.mxu0 %v2520
  %v3541 = vpop.f32.mrf.mxu0
  %v3542 = vadd.f32 %v3309, %v3541
  %v3543 = vpop.f32.mrf.mxu0
  %v3544 = vadd.f32 %v3311, %v3543
  %v3545 = vpop.f32.mrf.mxu0
  %v3546 = vadd.f32 %v3313, %v3545
  %v3547 = vpop.f32.mrf.mxu0
  %v3548 = vadd.f32 %v3315, %v3547
  %3549 = vmatprep.mubr.bf16.mxu0 0
  %3550 = vmatmul.mubr.bf16.gmra.mxu0 %v2521
  %v3551 = vpop.f32.mrf.mxu0
  %v3552 = vadd.f32 %v3319, %v3551
  %v3553 = vpop.f32.mrf.mxu0
  %v3554 = vadd.f32 %v3321, %v3553
  %v3555 = vpop.f32.mrf.mxu0
  %v3556 = vadd.f32 %v3323, %v3555
  %v3557 = vpop.f32.mrf.mxu0
  %v3558 = vadd.f32 %v3325, %v3557
  %3559 = vmatprep.mubr.bf16.mxu0 0
  %3560 = vmatmul.mubr.bf16.gmra.mxu0 %v2522
  %v3561 = vpop.f32.mrf.mxu0
  %v3562 = vadd.f32 %v3329, %v3561
  %v3563 = vpop.f32.mrf.mxu0
  %v3564 = vadd.f32 %v3331, %v3563
  %v3565 = vpop.f32.mrf.mxu0
  %v3566 = vadd.f32 %v3333, %v3565
  %v3567 = vpop.f32.mrf.mxu0
  %v3568 = vadd.f32 %v3335, %v3567
  %3569 = vmatprep.mubr.bf16.mxu0 0
  %3570 = vmatmul.mubr.bf16.gmra.mxu0 %v2523
  %v3571 = vpop.f32.mrf.mxu0
  %v3572 = vadd.f32 %v3339, %v3571
  %v3573 = vpop.f32.mrf.mxu0
  %v3574 = vadd.f32 %v3341, %v3573
  %v3575 = vpop.f32.mrf.mxu0
  %v3576 = vadd.f32 %v3343, %v3575
  %v3577 = vpop.f32.mrf.mxu0
  %v3578 = vadd.f32 %v3345, %v3577
  %3579 = vmatprep.mubr.bf16.mxu0 0
  %3580 = vmatmul.mubr.bf16.gmra.mxu0 %v2524
  %v3581 = vpop.f32.mrf.mxu0
  %v3582 = vadd.f32 %v3349, %v3581
  %v3583 = vpop.f32.mrf.mxu0
  %v3584 = vadd.f32 %v3351, %v3583
  %v3585 = vpop.f32.mrf.mxu0
  %v3586 = vadd.f32 %v3353, %v3585
  %v3587 = vpop.f32.mrf.mxu0
  %v3588 = vadd.f32 %v3355, %v3587
  %3589 = vmatprep.mubr.bf16.mxu0 0
  %3590 = vmatmul.mubr.bf16.gmra.mxu0 %v2525
  %v3591 = vpop.f32.mrf.mxu0
  %v3592 = vadd.f32 %v3359, %v3591
  %v3593 = vpop.f32.mrf.mxu0
  %v3594 = vadd.f32 %v3361, %v3593
  %v3595 = vpop.f32.mrf.mxu0
  %v3596 = vadd.f32 %v3363, %v3595
  %v3597 = vpop.f32.mrf.mxu0
  %v3598 = vadd.f32 %v3365, %v3597
  %3599 = vmatprep.mubr.bf16.mxu0 0
  %3600 = vmatmul.mubr.bf16.gmra.mxu0 %v2526
  %v3601 = vpop.f32.mrf.mxu0
  %v3602 = vadd.f32 %v3369, %v3601
  %v3603 = vpop.f32.mrf.mxu0
  %v3604 = vadd.f32 %v3371, %v3603
  %v3605 = vpop.f32.mrf.mxu0
  %v3606 = vadd.f32 %v3373, %v3605
  %v3607 = vpop.f32.mrf.mxu0
  %v3608 = vadd.f32 %v3375, %v3607
  %3609 = vmatprep.mubr.bf16.mxu0 0
  %3610 = vmatmul.mubr.bf16.gmra.mxu0 %v2527
  %v3611 = vpop.f32.mrf.mxu0
  %v3612 = vadd.f32 %v3379, %v3611
  %v3613 = vpop.f32.mrf.mxu0
  %v3614 = vadd.f32 %v3381, %v3613
  %v3615 = vpop.f32.mrf.mxu0
  %v3616 = vadd.f32 %v3383, %v3615
  %v3617 = vpop.f32.mrf.mxu0
  %v3618 = vadd.f32 %v3385, %v3617
  %3619 = vmatprep.mubr.bf16.mxu0 0
  %3620 = vmatmul.mubr.bf16.gmra.mxu0 %v2528
  %v3621 = vpop.f32.mrf.mxu0
  %v3622 = vadd.f32 %v3389, %v3621
  %v3623 = vpop.f32.mrf.mxu0
  %v3624 = vadd.f32 %v3391, %v3623
  %v3625 = vpop.f32.mrf.mxu0
  %v3626 = vadd.f32 %v3393, %v3625
  %v3627 = vpop.f32.mrf.mxu0
  %v3628 = vadd.f32 %v3395, %v3627
  %3629 = vmatprep.mubr.bf16.mxu0 0
  %3630 = vmatmul.mubr.bf16.gmra.mxu0 %v2529
  %v3631 = vpop.f32.mrf.mxu0
  %v3632 = vadd.f32 %v3399, %v3631
  %v3633 = vpop.f32.mrf.mxu0
  %v3634 = vadd.f32 %v3401, %v3633
  %v3635 = vpop.f32.mrf.mxu0
  %v3636 = vadd.f32 %v3403, %v3635
  %v3637 = vpop.f32.mrf.mxu0
  %v3638 = vadd.f32 %v3405, %v3637
  %3639 = vmatprep.mubr.bf16.mxu0 0
  %3640 = vmatmul.mubr.bf16.gmra.mxu0 %v2530
  %v3641 = vpop.f32.mrf.mxu0
  %v3642 = vadd.f32 %v3409, %v3641
  %v3643 = vpop.f32.mrf.mxu0
  %v3644 = vadd.f32 %v3411, %v3643
  %v3645 = vpop.f32.mrf.mxu0
  %v3646 = vadd.f32 %v3413, %v3645
  %v3647 = vpop.f32.mrf.mxu0
  %v3648 = vadd.f32 %v3415, %v3647
  %3649 = vmatprep.mubr.bf16.mxu0 0
  %3650 = vmatmul.mubr.bf16.gmra.mxu0 %v2531
  %v3651 = vpop.f32.mrf.mxu0
  %v3652 = vadd.f32 %v3419, %v3651
  %v3653 = vpop.f32.mrf.mxu0
  %v3654 = vadd.f32 %v3421, %v3653
  %v3655 = vpop.f32.mrf.mxu0
  %v3656 = vadd.f32 %v3423, %v3655
  %v3657 = vpop.f32.mrf.mxu0
  %v3658 = vadd.f32 %v3425, %v3657
  %3659 = vmatprep.mubr.bf16.mxu0 0
  %3660 = vmatmul.mubr.bf16.gmra.mxu0 %v2532
  %v3661 = vpop.f32.mrf.mxu0
  %v3662 = vadd.f32 %v3429, %v3661
  %v3663 = vpop.f32.mrf.mxu0
  %v3664 = vadd.f32 %v3431, %v3663
  %v3665 = vpop.f32.mrf.mxu0
  %v3666 = vadd.f32 %v3433, %v3665
  %v3667 = vpop.f32.mrf.mxu0
  %v3668 = vadd.f32 %v3435, %v3667
  %3669 = vmatprep.mubr.bf16.mxu0 0
  %3670 = vmatmul.mubr.bf16.gmra.mxu0 %v2533
  %v3671 = vpop.f32.mrf.mxu0
  %v3672 = vadd.f32 %v3439, %v3671
  %v3673 = vpop.f32.mrf.mxu0
  %v3674 = vadd.f32 %v3441, %v3673
  %v3675 = vpop.f32.mrf.mxu0
  %v3676 = vadd.f32 %v3443, %v3675
  %v3677 = vpop.f32.mrf.mxu0
  %v3678 = vadd.f32 %v3445, %v3677
  %3679 = vmatprep.mubr.bf16.mxu0 0
  %3680 = vmatmul.mubr.bf16.gmra.mxu0 %v2534
  %v3681 = vpop.f32.mrf.mxu0
  %v3682 = vadd.f32 %v3449, %v3681
  %v3683 = vpop.f32.mrf.mxu0
  %v3684 = vadd.f32 %v3451, %v3683
  %v3685 = vpop.f32.mrf.mxu0
  %v3686 = vadd.f32 %v3453, %v3685
  %v3687 = vpop.f32.mrf.mxu0
  %v3688 = vadd.f32 %v3455, %v3687
  %3689 = vmatprep.mubr.bf16.mxu0 0
  %3690 = vmatmul.mubr.bf16.gmra.mxu0 %v2535
  %v3691 = vpop.f32.mrf.mxu0
  %v3692 = vadd.f32 %v3459, %v3691
  %v3693 = vpop.f32.mrf.mxu0
  %v3694 = vadd.f32 %v3461, %v3693
  %v3695 = vpop.f32.mrf.mxu0
  %v3696 = vadd.f32 %v3463, %v3695
  %v3697 = vpop.f32.mrf.mxu0
  %v3698 = vadd.f32 %v3465, %v3697
  %3699 = vmatprep.mubr.bf16.mxu0 0
  %3700 = vmatmul.mubr.bf16.gmra.mxu0 %v2536
  %v3701 = vpop.f32.mrf.mxu0
  %v3702 = vadd.f32 %v3469, %v3701
  %v3703 = vpop.f32.mrf.mxu0
  %v3704 = vadd.f32 %v3471, %v3703
  %v3705 = vpop.f32.mrf.mxu0
  %v3706 = vadd.f32 %v3473, %v3705
  %v3707 = vpop.f32.mrf.mxu0
  %v3708 = vadd.f32 %v3475, %v3707
  %3709 = vmatprep.mubr.bf16.mxu0 0
  %3710 = vmatmul.mubr.bf16.gmra.mxu0 %v2537
  %v3711 = vpop.f32.mrf.mxu0
  %v3712 = vadd.f32 %v3479, %v3711
  %v3713 = vpop.f32.mrf.mxu0
  %v3714 = vadd.f32 %v3481, %v3713
  %v3715 = vpop.f32.mrf.mxu0
  %v3716 = vadd.f32 %v3483, %v3715
  %v3717 = vpop.f32.mrf.mxu0
  %v3718 = vadd.f32 %v3485, %v3717
  %3719 = vmatprep.mubr.bf16.mxu0 0
  %3720 = vmatmul.mubr.bf16.gmra.mxu0 %v2538
  %v3721 = vpop.f32.mrf.mxu0
  %v3722 = vadd.f32 %v3489, %v3721
  %v3723 = vpop.f32.mrf.mxu0
  %v3724 = vadd.f32 %v3491, %v3723
  %v3725 = vpop.f32.mrf.mxu0
  %v3726 = vadd.f32 %v3493, %v3725
  %v3727 = vpop.f32.mrf.mxu0
  %v3728 = vadd.f32 %v3495, %v3727
  %3729 = vdwg.mxu0
  %v3730 = vmax.f32 %v3532, 0.0
  %v3731 = vmax.f32 %v3534, 0.0
  %v3732 = vmax.f32 %v3536, 0.0
  %v3733 = vmax.f32 %v3538, 0.0
  %v3734 = vmax.f32 %v3542, 0.0
  %v3735 = vmax.f32 %v3544, 0.0
  %v3736 = vmax.f32 %v3546, 0.0
  %v3737 = vmax.f32 %v3548, 0.0
  %v3738 = vmax.f32 %v3552, 0.0
  %v3739 = vmax.f32 %v3554, 0.0
  %v3740 = vmax.f32 %v3556, 0.0
  %v3741 = vmax.f32 %v3558, 0.0
  %v3742 = vmax.f32 %v3562, 0.0
  %v3743 = vmax.f32 %v3564, 0.0
  %v3744 = vmax.f32 %v3566, 0.0
  %v3745 = vmax.f32 %v3568, 0.0
  %v3746 = vmax.f32 %v3572, 0.0
  %v3747 = vmax.f32 %v3574, 0.0
  %v3748 = vmax.f32 %v3576, 0.0
  %v3749 = vmax.f32 %v3578, 0.0
  %v3750 = vmax.f32 %v3582, 0.0
  %v3751 = vmax.f32 %v3584, 0.0
  %v3752 = vmax.f32 %v3586, 0.0
  %v3753 = vmax.f32 %v3588, 0.0
  %v3754 = vmax.f32 %v3592, 0.0
  %v3755 = vmax.f32 %v3594, 0.0
  %v3756 = vmax.f32 %v3596, 0.0
  %v3757 = vmax.f32 %v3598, 0.0
  %v3758 = vmax.f32 %v3602, 0.0
  %v3759 = vmax.f32 %v3604, 0.0
  %v3760 = vmax.f32 %v3606, 0.0
  %v3761 = vmax.f32 %v3608, 0.0
  %v3762 = vmax.f32 %v3612, 0.0
  %v3763 = vmax.f32 %v3614, 0.0
  %v3764 = vmax.f32 %v3616, 0.0
  %v3765 = vmax.f32 %v3618, 0.0
  %v3766 = vmax.f32 %v3622, 0.0
  %v3767 = vmax.f32 %v3624, 0.0
  %v3768 = vmax.f32 %v3626, 0.0
  %v3769 = vmax.f32 %v3628, 0.0
  %v3770 = vmax.f32 %v3632, 0.0
  %v3771 = vmax.f32 %v3634, 0.0
  %v3772 = vmax.f32 %v3636, 0.0
  %v3773 = vmax.f32 %v3638, 0.0
  %v3774 = vmax.f32 %v3642, 0.0
  %v3775 = vmax.f32 %v3644, 0.0
  %v3776 = vmax.f32 %v3646, 0.0
  %v3777 = vmax.f32 %v3648, 0.0
  %v3778 = vmax.f32 %v3652, 0.0
  %v3779 = vmax.f32 %v3654, 0.0
  %v3780 = vmax.f32 %v3656, 0.0
  %v3781 = vmax.f32 %v3658, 0.0
  %v3782 = vmax.f32 %v3662, 0.0
  %v3783 = vmax.f32 %v3664, 0.0
  %v3784 = vmax.f32 %v3666, 0.0
  %v3785 = vmax.f32 %v3668, 0.0
  %v3786 = vmax.f32 %v3672, 0.0
  %v3787 = vmax.f32 %v3674, 0.0
  %v3788 = vmax.f32 %v3676, 0.0
  %v3789 = vmax.f32 %v3678, 0.0
  %v3790 = vmax.f32 %v3682, 0.0
  %v3791 = vmax.f32 %v3684, 0.0
  %v3792 = vmax.f32 %v3686, 0.0
  %v3793 = vmax.f32 %v3688, 0.0
  %v3794 = vmax.f32 %v3692, 0.0
  %v3795 = vmax.f32 %v3694, 0.0
  %v3796 = vmax.f32 %v3696, 0.0
  %v3797 = vmax.f32 %v3698, 0.0
  %v3798 = vmax.f32 %v3702, 0.0
  %v3799 = vmax.f32 %v3704, 0.0
  %v3800 = vmax.f32 %v3706, 0.0
  %v3801 = vmax.f32 %v3708, 0.0
  %v3802 = vmax.f32 %v3712, 0.0
  %v3803 = vmax.f32 %v3714, 0.0
  %v3804 = vmax.f32 %v3716, 0.0
  %v3805 = vmax.f32 %v3718, 0.0
  %v3806 = vmax.f32 %v3722, 0.0
  %v3807 = vmax.f32 %v3724, 0.0
  %v3808 = vmax.f32 %v3726, 0.0
  %v3809 = vmax.f32 %v3728, 0.0
  %v3810 = vmax.f32 %v3730, %v3731
  %v3811 = vmax.f32 %v3732, %v3733
  %v3812 = vmax.f32 %v3734, %v3735
  %v3813 = vmax.f32 %v3736, %v3737
  %v3814 = vmax.f32 %v3738, %v3739
  %v3815 = vmax.f32 %v3740, %v3741
  %v3816 = vmax.f32 %v3742, %v3743
  %v3817 = vmax.f32 %v3744, %v3745
  %v3818 = vmax.f32 %v3746, %v3747
  %v3819 = vmax.f32 %v3748, %v3749
  %v3820 = vmax.f32 %v3750, %v3751
  %v3821 = vmax.f32 %v3752, %v3753
  %v3822 = vmax.f32 %v3754, %v3755
  %v3823 = vmax.f32 %v3756, %v3757
  %v3824 = vmax.f32 %v3758, %v3759
  %v3825 = vmax.f32 %v3760, %v3761
  %v3826 = vmax.f32 %v3762, %v3763
  %v3827 = vmax.f32 %v3764, %v3765
  %v3828 = vmax.f32 %v3766, %v3767
  %v3829 = vmax.f32 %v3768, %v3769
  %v3830 = vmax.f32 %v3770, %v3771
  %v3831 = vmax.f32 %v3772, %v3773
  %v3832 = vmax.f32 %v3774, %v3775
  %v3833 = vmax.f32 %v3776, %v3777
  %v3834 = vmax.f32 %v3778, %v3779
  %v3835 = vmax.f32 %v3780, %v3781
  %v3836 = vmax.f32 %v3782, %v3783
  %v3837 = vmax.f32 %v3784, %v3785
  %v3838 = vmax.f32 %v3786, %v3787
  %v3839 = vmax.f32 %v3788, %v3789
  %v3840 = vmax.f32 %v3790, %v3791
  %v3841 = vmax.f32 %v3792, %v3793
  %v3842 = vmax.f32 %v3794, %v3795
  %v3843 = vmax.f32 %v3796, %v3797
  %v3844 = vmax.f32 %v3798, %v3799
  %v3845 = vmax.f32 %v3800, %v3801
  %v3846 = vmax.f32 %v3802, %v3803
  %v3847 = vmax.f32 %v3804, %v3805
  %v3848 = vmax.f32 %v3806, %v3807
  %v3849 = vmax.f32 %v3808, %v3809
  %v3850 = vmax.f32 %v3810, %v3814
  %v3851 = vmax.f32 %v3811, %v3815
  %v3852 = vmax.f32 %v3812, %v3816
  %v3853 = vmax.f32 %v3813, %v3817
  %v3854 = vmax.f32 %v3818, %v3822
  %v3855 = vmax.f32 %v3819, %v3823
  %v3856 = vmax.f32 %v3820, %v3824
  %v3857 = vmax.f32 %v3821, %v3825
  %v3858 = vmax.f32 %v3826, %v3830
  %v3859 = vmax.f32 %v3827, %v3831
  %v3860 = vmax.f32 %v3828, %v3832
  %v3861 = vmax.f32 %v3829, %v3833
  %v3862 = vmax.f32 %v3834, %v3838
  %v3863 = vmax.f32 %v3835, %v3839
  %v3864 = vmax.f32 %v3836, %v3840
  %v3865 = vmax.f32 %v3837, %v3841
  %v3866 = vmax.f32 %v3842, %v3846
  %v3867 = vmax.f32 %v3843, %v3847
  %v3868 = vmax.f32 %v3844, %v3848
  %v3869 = vmax.f32 %v3845, %v3849
  %v3870 = vpack.c.bf16 %v3851, %v3850
  %v3871 = vpack.c.bf16 %v3853, %v3852
  %v3872 = vpack.c.bf16 %v3855, %v3854
  %v3873 = vpack.c.bf16 %v3857, %v3856
  %v3874 = vpack.c.bf16 %v3859, %v3858
  %v3875 = vpack.c.bf16 %v3861, %v3860
  %v3876 = vpack.c.bf16 %v3863, %v3862
  %v3877 = vpack.c.bf16 %v3865, %v3864
  %v3878 = vpack.c.bf16 %v3867, %v3866
  %v3879 = vpack.c.bf16 %v3869, %v3868
  %v3880 = vld [vmem:[%s5] sm:$0xf]
  %v3881 = vld [vmem:[%s5 + $0x4] sm:$0xf]
  %v3882 = vld [vmem:[%s5 + $0x8] sm:$0xf]
  %v3883 = vld [vmem:[%s5 + $0xc] sm:$0xf]
  %v3884 = vld [vmem:[%s5 + $0x10] sm:$0xf]
  %v3885 = vld [vmem:[%s5 + $0x14] sm:$0xf]
  %v3886 = vld [vmem:[%s5 + $0x18] sm:$0xf]
  %v3887 = vld [vmem:[%s5 + $0x1c] sm:$0xf]
  %v3888 = vld [vmem:[%s5 + $0x20] sm:$0xf]
  %v3889 = vld [vmem:[%s5 + $0x24] sm:$0xf]
  %v3890 = vld [vmem:[%s5 + $0x28] sm:$0xf]
  %v3891 = vld [vmem:[%s5 + $0x2c] sm:$0xf]
  %v3892 = vld [vmem:[%s5 + $0x30] sm:$0xf]
  %v3893 = vld [vmem:[%s5 + $0x34] sm:$0xf]
  %v3894 = vld [vmem:[%s5 + $0x38] sm:$0xf]
  %v3895 = vld [vmem:[%s5 + $0x3c] sm:$0xf]
  %v3896 = vld [vmem:[%s5 + $0x40] sm:$0xf]
  %v3897 = vld [vmem:[%s5 + $0x44] sm:$0xf]
  %v3898 = vld [vmem:[%s5 + $0x48] sm:$0xf]
  %v3899 = vld [vmem:[%s5 + $0x4c] sm:$0xf]
  %v3900 = vld [vmem:[%s5 + $0x50] sm:$0xf]
  %v3901 = vld [vmem:[%s5 + $0x54] sm:$0xf]
  %v3902 = vld [vmem:[%s5 + $0x58] sm:$0xf]
  %v3903 = vld [vmem:[%s5 + $0x5c] sm:$0xf]
  %v3904 = vld [vmem:[%s5 + $0x60] sm:$0xf]
  %v3905 = vld [vmem:[%s5 + $0x64] sm:$0xf]
  %v3906 = vld [vmem:[%s5 + $0x68] sm:$0xf]
  %v3907 = vld [vmem:[%s5 + $0x6c] sm:$0xf]
  %v3908 = vld [vmem:[%s5 + $0x70] sm:$0xf]
  %v3909 = vld [vmem:[%s5 + $0x74] sm:$0xf]
  %v3910 = vld [vmem:[%s5 + $0x78] sm:$0xf]
  %v3911 = vld [vmem:[%s5 + $0x7c] sm:$0xf]
  %v3912 = vld [vmem:[%s5 + $0x80] sm:$0xf]
  %v3913 = vld [vmem:[%s5 + $0x84] sm:$0xf]
  %v3914 = vld [vmem:[%s5 + $0x88] sm:$0xf]
  %v3915 = vld [vmem:[%s5 + $0x8c] sm:$0xf]
  %v3916 = vld [vmem:[%s5 + $0x90] sm:$0xf]
  %v3917 = vld [vmem:[%s5 + $0x94] sm:$0xf]
  %v3918 = vld [vmem:[%s5 + $0x98] sm:$0xf]
  %v3919 = vld [vmem:[%s5 + $0x9c] sm:$0xf]
  %v3920 = vld [vmem:[%s5 + $0xa0] sm:$0xf]
  %v3921 = vld [vmem:[%s5 + $0xa4] sm:$0xf]
  %v3922 = vld [vmem:[%s5 + $0xa8] sm:$0xf]
  %v3923 = vld [vmem:[%s5 + $0xac] sm:$0xf]
  %v3924 = vld [vmem:[%s5 + $0xb0] sm:$0xf]
  %v3925 = vld [vmem:[%s5 + $0xb4] sm:$0xf]
  %v3926 = vld [vmem:[%s5 + $0xb8] sm:$0xf]
  %v3927 = vld [vmem:[%s5 + $0xbc] sm:$0xf]
  %v3928 = vld [vmem:[%s5 + $0xc0] sm:$0xf]
  %v3929 = vld [vmem:[%s5 + $0xc4] sm:$0xf]
  %v3930 = vld [vmem:[%s5 + $0xc8] sm:$0xf]
  %v3931 = vld [vmem:[%s5 + $0xcc] sm:$0xf]
  %v3932 = vld [vmem:[%s5 + $0xd0] sm:$0xf]
  %v3933 = vld [vmem:[%s5 + $0xd4] sm:$0xf]
  %v3934 = vld [vmem:[%s5 + $0xd8] sm:$0xf]
  %v3935 = vld [vmem:[%s5 + $0xdc] sm:$0xf]
  %v3936 = vld [vmem:[%s5 + $0xe0] sm:$0xf]
  %v3937 = vld [vmem:[%s5 + $0xe4] sm:$0xf]
  %v3938 = vld [vmem:[%s5 + $0xe8] sm:$0xf]
  %v3939 = vld [vmem:[%s5 + $0xec] sm:$0xf]
  %v3940 = vld [vmem:[%s5 + $0xf0] sm:$0xf]
  %v3941 = vld [vmem:[%s5 + $0xf4] sm:$0xf]
  %v3942 = vld [vmem:[%s5 + $0xf8] sm:$0xf]
  %v3943 = vld [vmem:[%s5 + $0xfc] sm:$0xf]
  %v3944 = vld [vmem:[%s5 + $0x100] sm:$0xf]
  %v3945 = vld [vmem:[%s5 + $0x104] sm:$0xf]
  %v3946 = vld [vmem:[%s5 + $0x108] sm:$0xf]
  %v3947 = vld [vmem:[%s5 + $0x10c] sm:$0xf]
  %v3948 = vld [vmem:[%s5 + $0x110] sm:$0xf]
  %v3949 = vld [vmem:[%s5 + $0x114] sm:$0xf]
  %v3950 = vld [vmem:[%s5 + $0x118] sm:$0xf]
  %v3951 = vld [vmem:[%s5 + $0x11c] sm:$0xf]
  %v3952 = vld [vmem:[%s5 + $0x120] sm:$0xf]
  %v3953 = vld [vmem:[%s5 + $0x124] sm:$0xf]
  %v3954 = vld [vmem:[%s5 + $0x128] sm:$0xf]
  %v3955 = vld [vmem:[%s5 + $0x12c] sm:$0xf]
  %v3956 = vld [vmem:[%s5 + $0x130] sm:$0xf]
  %v3957 = vld [vmem:[%s5 + $0x134] sm:$0xf]
  %v3958 = vld [vmem:[%s5 + $0x138] sm:$0xf]
  %v3959 = vld [vmem:[%s5 + $0x13c] sm:$0xf]
  %v3960 = vld [vmem:[%s6] sm:$0x1]
  %v3962 = vlaneseq
  %v3963 = vshrl.u32 %v3962, 7
  %v3964 = vsub.s32 0, %v3963
  %v3965 = vrot.slane %v3960, %v3964
  %v4047 = vunpack.c.l.b16 %v3880
  %v4048 = vunpack.c.l.b16 %v3881
  %v4049 = vunpack.c.l.b16 %v3882
  %v4050 = vunpack.c.l.b16 %v3883
  %v4051 = vunpack.c.l.b16 %v3884
  %v4052 = vunpack.c.l.b16 %v3885
  %v4053 = vunpack.c.l.b16 %v3886
  %v4054 = vunpack.c.l.b16 %v3887
  %v4055 = vunpack.c.l.b16 %v3888
  %v4056 = vunpack.c.l.b16 %v3889
  %v4057 = vunpack.c.l.b16 %v3890
  %v4058 = vunpack.c.l.b16 %v3891
  %v4059 = vunpack.c.l.b16 %v3892
  %v4060 = vunpack.c.l.b16 %v3893
  %v4061 = vunpack.c.l.b16 %v3894
  %v4062 = vunpack.c.l.b16 %v3895
  %v4063 = vunpack.c.l.b16 %v3896
  %v4064 = vunpack.c.l.b16 %v3897
  %v4065 = vunpack.c.l.b16 %v3898
  %v4066 = vunpack.c.l.b16 %v3899
  %v4067 = vunpack.c.l.b16 %v3900
  %v4068 = vunpack.c.l.b16 %v3901
  %v4069 = vunpack.c.l.b16 %v3902
  %v4070 = vunpack.c.l.b16 %v3903
  %v4071 = vunpack.c.l.b16 %v3904
  %v4072 = vunpack.c.l.b16 %v3905
  %v4073 = vunpack.c.l.b16 %v3906
  %v4074 = vunpack.c.l.b16 %v3907
  %v4075 = vunpack.c.l.b16 %v3908
  %v4076 = vunpack.c.l.b16 %v3909
  %v4077 = vunpack.c.l.b16 %v3910
  %v4078 = vunpack.c.l.b16 %v3911
  %v4079 = vunpack.c.l.b16 %v3912
  %v4080 = vunpack.c.l.b16 %v3913
  %v4081 = vunpack.c.l.b16 %v3914
  %v4082 = vunpack.c.l.b16 %v3915
  %v4083 = vunpack.c.l.b16 %v3916
  %v4084 = vunpack.c.l.b16 %v3917
  %v4085 = vunpack.c.l.b16 %v3918
  %v4086 = vunpack.c.l.b16 %v3919
  %v4087 = vunpack.c.l.b16 %v3920
  %v4088 = vunpack.c.l.b16 %v3921
  %v4089 = vunpack.c.l.b16 %v3922
  %v4090 = vunpack.c.l.b16 %v3923
  %v4091 = vunpack.c.l.b16 %v3924
  %v4092 = vunpack.c.l.b16 %v3925
  %v4093 = vunpack.c.l.b16 %v3926
  %v4094 = vunpack.c.l.b16 %v3927
  %v4095 = vunpack.c.l.b16 %v3928
  %v4096 = vunpack.c.l.b16 %v3929
  %v4097 = vunpack.c.l.b16 %v3930
  %v4098 = vunpack.c.l.b16 %v3931
  %v4099 = vunpack.c.l.b16 %v3932
  %v4100 = vunpack.c.l.b16 %v3933
  %v4101 = vunpack.c.l.b16 %v3934
  %v4102 = vunpack.c.l.b16 %v3935
  %v4103 = vunpack.c.l.b16 %v3936
  %v4104 = vunpack.c.l.b16 %v3937
  %v4105 = vunpack.c.l.b16 %v3938
  %v4106 = vunpack.c.l.b16 %v3939
  %v4107 = vunpack.c.l.b16 %v3940
  %v4108 = vunpack.c.l.b16 %v3941
  %v4109 = vunpack.c.l.b16 %v3942
  %v4110 = vunpack.c.l.b16 %v3943
  %v4111 = vunpack.c.l.b16 %v3944
  %v4112 = vunpack.c.l.b16 %v3945
  %v4113 = vunpack.c.l.b16 %v3946
  %v4114 = vunpack.c.l.b16 %v3947
  %v4115 = vunpack.c.l.b16 %v3948
  %v4116 = vunpack.c.l.b16 %v3949
  %v4117 = vunpack.c.l.b16 %v3950
  %v4118 = vunpack.c.l.b16 %v3951
  %v4119 = vunpack.c.l.b16 %v3952
  %v4120 = vunpack.c.l.b16 %v3953
  %v4121 = vunpack.c.l.b16 %v3954
  %v4122 = vunpack.c.l.b16 %v3955
  %v4123 = vunpack.c.l.b16 %v3956
  %v4124 = vunpack.c.l.b16 %v3957
  %v4125 = vunpack.c.l.b16 %v3958
  %v4126 = vunpack.c.l.b16 %v3959
  %v4127 = vpack.c.b16 %v4048, %v4047
  %v4128 = vpack.c.b16 %v4050, %v4049
  %v4129 = vpack.c.b16 %v4052, %v4051
  %v4130 = vpack.c.b16 %v4054, %v4053
  %v4131 = vpack.c.b16 %v4056, %v4055
  %v4132 = vpack.c.b16 %v4058, %v4057
  %v4133 = vpack.c.b16 %v4060, %v4059
  %v4134 = vpack.c.b16 %v4062, %v4061
  %v4135 = vpack.c.b16 %v4064, %v4063
  %v4136 = vpack.c.b16 %v4066, %v4065
  %v4137 = vpack.c.b16 %v4068, %v4067
  %v4138 = vpack.c.b16 %v4070, %v4069
  %v4139 = vpack.c.b16 %v4072, %v4071
  %v4140 = vpack.c.b16 %v4074, %v4073
  %v4141 = vpack.c.b16 %v4076, %v4075
  %v4142 = vpack.c.b16 %v4078, %v4077
  %v4143 = vpack.c.b16 %v4080, %v4079
  %v4144 = vpack.c.b16 %v4082, %v4081
  %v4145 = vpack.c.b16 %v4084, %v4083
  %v4146 = vpack.c.b16 %v4086, %v4085
  %v4147 = vpack.c.b16 %v4088, %v4087
  %v4148 = vpack.c.b16 %v4090, %v4089
  %v4149 = vpack.c.b16 %v4092, %v4091
  %v4150 = vpack.c.b16 %v4094, %v4093
  %v4151 = vpack.c.b16 %v4096, %v4095
  %v4152 = vpack.c.b16 %v4098, %v4097
  %v4153 = vpack.c.b16 %v4100, %v4099
  %v4154 = vpack.c.b16 %v4102, %v4101
  %v4155 = vpack.c.b16 %v4104, %v4103
  %v4156 = vpack.c.b16 %v4106, %v4105
  %v4157 = vpack.c.b16 %v4108, %v4107
  %v4158 = vpack.c.b16 %v4110, %v4109
  %v4159 = vpack.c.b16 %v4112, %v4111
  %v4160 = vpack.c.b16 %v4114, %v4113
  %v4161 = vpack.c.b16 %v4116, %v4115
  %v4162 = vpack.c.b16 %v4118, %v4117
  %v4163 = vpack.c.b16 %v4120, %v4119
  %v4164 = vpack.c.b16 %v4122, %v4121
  %v4165 = vpack.c.b16 %v4124, %v4123
  %v4166 = vpack.c.b16 %v4126, %v4125
  %4207 = vmatprep.subr.bf16.mxu0 0
  %4208 = vmatpush1.bf16.msra.mxu0 %v4134
  %4209 = vmatprep.subr.bf16.mxu0 0
  %4210 = vmatpush1.bf16.msra.mxu0 %v4133
  %4211 = vmatprep.subr.bf16.mxu0 0
  %4212 = vmatpush1.bf16.msra.mxu0 %v4132
  %4213 = vmatprep.subr.bf16.mxu0 0
  %4214 = vmatpush1.bf16.msra.mxu0 %v4131
  %4215 = vmatprep.subr.bf16.mxu0 0
  %4216 = vmatpush1.bf16.msra.mxu0 %v4130
  %4217 = vmatprep.subr.bf16.mxu0 0
  %4218 = vmatpush1.bf16.msra.mxu0 %v4129
  %4219 = vmatprep.subr.bf16.mxu0 0
  %4220 = vmatpush1.bf16.msra.mxu0 %v4128
  %4221 = vmatprep.subr.bf16.mxu0 0
  %4222 = vmatpush1.bf16.msra.mxu0 %v4127
  %4223 = vmatprep.subr.bf16.mxu0 0
  %4224 = vmatpush2.bf16.msra.mxu0 %v4142
  %4225 = vmatprep.subr.bf16.mxu0 0
  %4226 = vmatpush2.bf16.msra.mxu0 %v4141
  %4227 = vmatprep.subr.bf16.mxu0 0
  %4228 = vmatpush2.bf16.msra.mxu0 %v4140
  %4229 = vmatprep.subr.bf16.mxu0 0
  %4230 = vmatpush2.bf16.msra.mxu0 %v4139
  %4231 = vmatprep.subr.bf16.mxu0 0
  %4232 = vmatpush2.bf16.msra.mxu0 %v4138
  %4233 = vmatprep.subr.bf16.mxu0 0
  %4234 = vmatpush2.bf16.msra.mxu0 %v4137
  %4235 = vmatprep.subr.bf16.mxu0 0
  %4236 = vmatpush2.bf16.msra.mxu0 %v4136
  %4237 = vmatprep.subr.bf16.mxu0 0
  %4238 = vmatpush2.bf16.msra.mxu0 %v4135
  %4239 = vmatprep.mubr.bf16.mxu0 %v3872
  %4240 = vmatmul.mubr.bf16.gmra.mxu0 %v3870
  %v4241 = vpop.f32.mrf.mxu0
  %v4242 = vadd.f32 %v3965, %v4241
  %v4243 = vpop.f32.mrf.mxu0
  %v4244 = vpop.f32.mrf.mxu0
  %v4245 = vadd.f32 %v3965, %v4244
  %v4246 = vpop.f32.mrf.mxu0
  %4247 = vmatprep.mubr.bf16.mxu0 %v3873
  %4248 = vmatmul.mubr.bf16.gmra.mxu0 %v3871
  %v4249 = vpop.f32.mrf.mxu0
  %v4250 = vadd.f32 %v3965, %v4249
  %v4251 = vpop.f32.mrf.mxu0
  %v4252 = vpop.f32.mrf.mxu0
  %v4253 = vadd.f32 %v3965, %v4252
  %v4254 = vpop.f32.mrf.mxu0
  %4255 = vdwg.mxu0
  %4256 = vmatprep.subr.bf16.mxu0 0
  %4257 = vmatpush1.bf16.msra.mxu0 %v4150
  %4258 = vmatprep.subr.bf16.mxu0 0
  %4259 = vmatpush1.bf16.msra.mxu0 %v4149
  %4260 = vmatprep.subr.bf16.mxu0 0
  %4261 = vmatpush1.bf16.msra.mxu0 %v4148
  %4262 = vmatprep.subr.bf16.mxu0 0
  %4263 = vmatpush1.bf16.msra.mxu0 %v4147
  %4264 = vmatprep.subr.bf16.mxu0 0
  %4265 = vmatpush1.bf16.msra.mxu0 %v4146
  %4266 = vmatprep.subr.bf16.mxu0 0
  %4267 = vmatpush1.bf16.msra.mxu0 %v4145
  %4268 = vmatprep.subr.bf16.mxu0 0
  %4269 = vmatpush1.bf16.msra.mxu0 %v4144
  %4270 = vmatprep.subr.bf16.mxu0 0
  %4271 = vmatpush1.bf16.msra.mxu0 %v4143
  %4272 = vmatprep.subr.bf16.mxu0 0
  %4273 = vmatpush2.bf16.msra.mxu0 %v4158
  %4274 = vmatprep.subr.bf16.mxu0 0
  %4275 = vmatpush2.bf16.msra.mxu0 %v4157
  %4276 = vmatprep.subr.bf16.mxu0 0
  %4277 = vmatpush2.bf16.msra.mxu0 %v4156
  %4278 = vmatprep.subr.bf16.mxu0 0
  %4279 = vmatpush2.bf16.msra.mxu0 %v4155
  %4280 = vmatprep.subr.bf16.mxu0 0
  %4281 = vmatpush2.bf16.msra.mxu0 %v4154
  %4282 = vmatprep.subr.bf16.mxu0 0
  %4283 = vmatpush2.bf16.msra.mxu0 %v4153
  %4284 = vmatprep.subr.bf16.mxu0 0
  %4285 = vmatpush2.bf16.msra.mxu0 %v4152
  %4286 = vmatprep.subr.bf16.mxu0 0
  %4287 = vmatpush2.bf16.msra.mxu0 %v4151
  %4288 = vmatprep.mubr.bf16.mxu0 %v3876
  %4289 = vmatmul.mubr.bf16.gmra.mxu0 %v3874
  %v4290 = vpop.f32.mrf.mxu0
  %v4291 = vadd.f32 %v4242, %v4290
  %v4292 = vpop.f32.mrf.mxu0
  %v4293 = vpop.f32.mrf.mxu0
  %v4294 = vadd.f32 %v4245, %v4293
  %v4295 = vpop.f32.mrf.mxu0
  %4296 = vmatprep.mubr.bf16.mxu0 %v3877
  %4297 = vmatmul.mubr.bf16.gmra.mxu0 %v3875
  %v4298 = vpop.f32.mrf.mxu0
  %v4299 = vadd.f32 %v4250, %v4298
  %v4300 = vpop.f32.mrf.mxu0
  %v4301 = vpop.f32.mrf.mxu0
  %v4302 = vadd.f32 %v4253, %v4301
  %v4303 = vpop.f32.mrf.mxu0
  %4304 = vdwg.mxu0
  %4305 = vmatprep.subr.bf16.mxu0 0
  %4306 = vmatpush1.bf16.msra.mxu0 %v4166
  %4307 = vmatprep.subr.bf16.mxu0 0
  %4308 = vmatpush1.bf16.msra.mxu0 %v4165
  %4309 = vmatprep.subr.bf16.mxu0 0
  %4310 = vmatpush1.bf16.msra.mxu0 %v4164
  %4311 = vmatprep.subr.bf16.mxu0 0
  %4312 = vmatpush1.bf16.msra.mxu0 %v4163
  %4313 = vmatprep.subr.bf16.mxu0 0
  %4314 = vmatpush1.bf16.msra.mxu0 %v4162
  %4315 = vmatprep.subr.bf16.mxu0 0
  %4316 = vmatpush1.bf16.msra.mxu0 %v4161
  %4317 = vmatprep.subr.bf16.mxu0 0
  %4318 = vmatpush1.bf16.msra.mxu0 %v4160
  %4319 = vmatprep.subr.bf16.mxu0 0
  %4320 = vmatpush1.bf16.msra.mxu0 %v4159
  %4321 = vmatprep.subr.bf16.mxu0 0
  %4322 = vmatpush2.bf16.msra.mxu0 0
  %4323 = vmatprep.subr.bf16.mxu0 0
  %4324 = vmatpush2.bf16.msra.mxu0 0
  %4325 = vmatprep.subr.bf16.mxu0 0
  %4326 = vmatpush2.bf16.msra.mxu0 0
  %4327 = vmatprep.subr.bf16.mxu0 0
  %4328 = vmatpush2.bf16.msra.mxu0 0
  %4329 = vmatprep.subr.bf16.mxu0 0
  %4330 = vmatpush2.bf16.msra.mxu0 0
  %4331 = vmatprep.subr.bf16.mxu0 0
  %4332 = vmatpush2.bf16.msra.mxu0 0
  %4333 = vmatprep.subr.bf16.mxu0 0
  %4334 = vmatpush2.bf16.msra.mxu0 0
  %4335 = vmatprep.subr.bf16.mxu0 0
  %4336 = vmatpush2.bf16.msra.mxu0 0
  %4337 = vmatprep.mubr.bf16.mxu0 0
  %4338 = vmatmul.mubr.bf16.gmra.mxu0 %v3878
  %v4339 = vpop.f32.mrf.mxu0
  %v4340 = vadd.f32 %v4291, %v4339
  %v4341 = vpop.f32.mrf.mxu0
  %v4342 = vpop.f32.mrf.mxu0
  %v4343 = vadd.f32 %v4294, %v4342
  %v4344 = vpop.f32.mrf.mxu0
  %4345 = vmatprep.mubr.bf16.mxu0 0
  %4346 = vmatmul.mubr.bf16.gmra.mxu0 %v3879
  %v4347 = vpop.f32.mrf.mxu0
  %v4348 = vadd.f32 %v4299, %v4347
  %v4349 = vpop.f32.mrf.mxu0
  %v4350 = vpop.f32.mrf.mxu0
  %v4351 = vadd.f32 %v4302, %v4350
  %v4352 = vpop.f32.mrf.mxu0
  %4353 = vdwg.mxu0
  %v4354 = vmax.f32 %v4340, 0.0
  %v4355 = vmax.f32 %v4343, 0.0
  %v4356 = vmax.f32 %v4348, 0.0
  %v4357 = vmax.f32 %v4351, 0.0
  %v4358 = vpack.c.bf16 %v4355, %v4354
  %v4359 = vpack.c.bf16 %v4357, %v4356
  %v4360 = vld [vmem:[%s7] sm:$0xf]
  %v4361 = vld [vmem:[%s7 + $0x4] sm:$0xf]
  %v4362 = vld [vmem:[%s7 + $0x8] sm:$0xf]
  %v4363 = vld [vmem:[%s7 + $0xc] sm:$0xf]
  %v4364 = vld [vmem:[%s7 + $0x10] sm:$0xf]
  %v4365 = vld [vmem:[%s7 + $0x14] sm:$0xf]
  %v4366 = vld [vmem:[%s7 + $0x18] sm:$0xf]
  %v4367 = vld [vmem:[%s7 + $0x1c] sm:$0xf]
  %v4368 = vld [vmem:[%s7 + $0x20] sm:$0xf]
  %v4369 = vld [vmem:[%s7 + $0x24] sm:$0xf]
  %v4370 = vld [vmem:[%s7 + $0x28] sm:$0xf]
  %v4371 = vld [vmem:[%s7 + $0x2c] sm:$0xf]
  %v4372 = vld [vmem:[%s7 + $0x30] sm:$0xf]
  %v4373 = vld [vmem:[%s7 + $0x34] sm:$0xf]
  %v4374 = vld [vmem:[%s7 + $0x38] sm:$0xf]
  %v4375 = vld [vmem:[%s7 + $0x3c] sm:$0xf]
  %v4376 = vld [vmem:[%s8] sm:$0x1]
  %v4378 = vlaneseq
  %v4379 = vshrl.u32 %v4378, 7
  %v4380 = vsub.s32 0, %v4379
  %v4381 = vrot.slane %v4376, %v4380
  %v4399 = vunpack.c.l.b16 %v4360
  %v4400 = vunpack.c.l.b16 %v4361
  %v4401 = vunpack.c.l.b16 %v4362
  %v4402 = vunpack.c.l.b16 %v4363
  %v4403 = vunpack.c.l.b16 %v4364
  %v4404 = vunpack.c.l.b16 %v4365
  %v4405 = vunpack.c.l.b16 %v4366
  %v4406 = vunpack.c.l.b16 %v4367
  %v4407 = vunpack.c.l.b16 %v4368
  %v4408 = vunpack.c.l.b16 %v4369
  %v4409 = vunpack.c.l.b16 %v4370
  %v4410 = vunpack.c.l.b16 %v4371
  %v4411 = vunpack.c.l.b16 %v4372
  %v4412 = vunpack.c.l.b16 %v4373
  %v4413 = vunpack.c.l.b16 %v4374
  %v4414 = vunpack.c.l.b16 %v4375
  %v4415 = vpack.c.b16 %v4400, %v4399
  %v4416 = vpack.c.b16 %v4402, %v4401
  %v4417 = vpack.c.b16 %v4404, %v4403
  %v4418 = vpack.c.b16 %v4406, %v4405
  %v4419 = vpack.c.b16 %v4408, %v4407
  %v4420 = vpack.c.b16 %v4410, %v4409
  %v4421 = vpack.c.b16 %v4412, %v4411
  %v4422 = vpack.c.b16 %v4414, %v4413
  %4431 = vmatprep.subr.bf16.mxu0 0
  %4432 = vmatpush1.bf16.msra.mxu0 %v4422
  %4433 = vmatprep.subr.bf16.mxu0 0
  %4434 = vmatpush1.bf16.msra.mxu0 %v4421
  %4435 = vmatprep.subr.bf16.mxu0 0
  %4436 = vmatpush1.bf16.msra.mxu0 %v4420
  %4437 = vmatprep.subr.bf16.mxu0 0
  %4438 = vmatpush1.bf16.msra.mxu0 %v4419
  %4439 = vmatprep.subr.bf16.mxu0 0
  %4440 = vmatpush1.bf16.msra.mxu0 %v4418
  %4441 = vmatprep.subr.bf16.mxu0 0
  %4442 = vmatpush1.bf16.msra.mxu0 %v4417
  %4443 = vmatprep.subr.bf16.mxu0 0
  %4444 = vmatpush1.bf16.msra.mxu0 %v4416
  %4445 = vmatprep.subr.bf16.mxu0 0
  %4446 = vmatpush1.bf16.msra.mxu0 %v4415
  %4447 = vmatprep.subr.bf16.mxu0 0
  %4448 = vmatpush2.bf16.msra.mxu0 0
  %4449 = vmatprep.subr.bf16.mxu0 0
  %4450 = vmatpush2.bf16.msra.mxu0 0
  %4451 = vmatprep.subr.bf16.mxu0 0
  %4452 = vmatpush2.bf16.msra.mxu0 0
  %4453 = vmatprep.subr.bf16.mxu0 0
  %4454 = vmatpush2.bf16.msra.mxu0 0
  %4455 = vmatprep.subr.bf16.mxu0 0
  %4456 = vmatpush2.bf16.msra.mxu0 0
  %4457 = vmatprep.subr.bf16.mxu0 0
  %4458 = vmatpush2.bf16.msra.mxu0 0
  %4459 = vmatprep.subr.bf16.mxu0 0
  %4460 = vmatpush2.bf16.msra.mxu0 0
  %4461 = vmatprep.subr.bf16.mxu0 0
  %4462 = vmatpush2.bf16.msra.mxu0 0
  %4463 = vmatprep.mubr.bf16.mxu0 0
  %4464 = vmatmul.mubr.bf16.gmra.mxu0 %v4358
  %v4465 = vpop.f32.mrf.mxu0
  %v4466 = vadd.f32 %v4381, %v4465
  %v4467 = vpop.f32.mrf.mxu0
  %v4468 = vpop.f32.mrf.mxu0
  %v4469 = vadd.f32 %v4381, %v4468
  %v4470 = vpop.f32.mrf.mxu0
  %4471 = vmatprep.mubr.bf16.mxu0 0
  %4472 = vmatmul.mubr.bf16.gmra.mxu0 %v4359
  %v4473 = vpop.f32.mrf.mxu0
  %v4474 = vadd.f32 %v4381, %v4473
  %v4475 = vpop.f32.mrf.mxu0
  %v4476 = vpop.f32.mrf.mxu0
  %v4477 = vadd.f32 %v4381, %v4476
  %v4478 = vpop.f32.mrf.mxu0
  %4479 = vdwg.mxu0
  %v4480 = vmax.f32 %v4466, 0.0
  %v4481 = vmax.f32 %v4469, 0.0
  %v4482 = vmax.f32 %v4474, 0.0
  %v4483 = vmax.f32 %v4477, 0.0
  %v4484 = vpack.c.bf16 %v4481, %v4480
  %v4485 = vpack.c.bf16 %v4483, %v4482
  %v4486 = vld [vmem:[%s9] sm:$0xf]
  %v4487 = vld [vmem:[%s9 + $0x4] sm:$0xf]
  %v4488 = vld [vmem:[%s9 + $0x8] sm:$0xf]
  %v4489 = vld [vmem:[%s9 + $0xc] sm:$0xf]
  %v4490 = vld [vmem:[%s9 + $0x10] sm:$0xf]
  %v4491 = vld [vmem:[%s9 + $0x14] sm:$0xf]
  %v4492 = vld [vmem:[%s9 + $0x18] sm:$0xf]
  %v4493 = vld [vmem:[%s9 + $0x1c] sm:$0xf]
  %v4494 = vld [vmem:[%s9 + $0x20] sm:$0xf]
  %v4495 = vld [vmem:[%s9 + $0x24] sm:$0xf]
  %v4496 = vld [vmem:[%s9 + $0x28] sm:$0xf]
  %v4497 = vld [vmem:[%s9 + $0x2c] sm:$0xf]
  %v4498 = vld [vmem:[%s9 + $0x30] sm:$0xf]
  %v4499 = vld [vmem:[%s9 + $0x34] sm:$0xf]
  %v4500 = vld [vmem:[%s9 + $0x38] sm:$0xf]
  %v4501 = vld [vmem:[%s9 + $0x3c] sm:$0xf]
  %v4502 = vld [vmem:[%s10] sm:$0x1]
  %v4504 = vlaneseq
  %v4505 = vshrl.u32 %v4504, 7
  %v4506 = vsub.s32 0, %v4505
  %v4507 = vrot.slane %v4502, %v4506
  %v4525 = vunpack.c.l.b16 %v4486
  %v4526 = vunpack.c.l.b16 %v4487
  %v4527 = vunpack.c.l.b16 %v4488
  %v4528 = vunpack.c.l.b16 %v4489
  %v4529 = vunpack.c.l.b16 %v4490
  %v4530 = vunpack.c.l.b16 %v4491
  %v4531 = vunpack.c.l.b16 %v4492
  %v4532 = vunpack.c.l.b16 %v4493
  %v4533 = vunpack.c.l.b16 %v4494
  %v4534 = vunpack.c.l.b16 %v4495
  %v4535 = vunpack.c.l.b16 %v4496
  %v4536 = vunpack.c.l.b16 %v4497
  %v4537 = vunpack.c.l.b16 %v4498
  %v4538 = vunpack.c.l.b16 %v4499
  %v4539 = vunpack.c.l.b16 %v4500
  %v4540 = vunpack.c.l.b16 %v4501
  %v4541 = vpack.c.b16 %v4526, %v4525
  %v4542 = vpack.c.b16 %v4528, %v4527
  %v4543 = vpack.c.b16 %v4530, %v4529
  %v4544 = vpack.c.b16 %v4532, %v4531
  %v4545 = vpack.c.b16 %v4534, %v4533
  %v4546 = vpack.c.b16 %v4536, %v4535
  %v4547 = vpack.c.b16 %v4538, %v4537
  %v4548 = vpack.c.b16 %v4540, %v4539
  %4557 = vmatprep.subr.bf16.mxu0 0
  %4558 = vmatpush1.bf16.msra.mxu0 %v4548
  %4559 = vmatprep.subr.bf16.mxu0 0
  %4560 = vmatpush1.bf16.msra.mxu0 %v4547
  %4561 = vmatprep.subr.bf16.mxu0 0
  %4562 = vmatpush1.bf16.msra.mxu0 %v4546
  %4563 = vmatprep.subr.bf16.mxu0 0
  %4564 = vmatpush1.bf16.msra.mxu0 %v4545
  %4565 = vmatprep.subr.bf16.mxu0 0
  %4566 = vmatpush1.bf16.msra.mxu0 %v4544
  %4567 = vmatprep.subr.bf16.mxu0 0
  %4568 = vmatpush1.bf16.msra.mxu0 %v4543
  %4569 = vmatprep.subr.bf16.mxu0 0
  %4570 = vmatpush1.bf16.msra.mxu0 %v4542
  %4571 = vmatprep.subr.bf16.mxu0 0
  %4572 = vmatpush1.bf16.msra.mxu0 %v4541
  %4573 = vmatprep.subr.bf16.mxu0 0
  %4574 = vmatpush2.bf16.msra.mxu0 0
  %4575 = vmatprep.subr.bf16.mxu0 0
  %4576 = vmatpush2.bf16.msra.mxu0 0
  %4577 = vmatprep.subr.bf16.mxu0 0
  %4578 = vmatpush2.bf16.msra.mxu0 0
  %4579 = vmatprep.subr.bf16.mxu0 0
  %4580 = vmatpush2.bf16.msra.mxu0 0
  %4581 = vmatprep.subr.bf16.mxu0 0
  %4582 = vmatpush2.bf16.msra.mxu0 0
  %4583 = vmatprep.subr.bf16.mxu0 0
  %4584 = vmatpush2.bf16.msra.mxu0 0
  %4585 = vmatprep.subr.bf16.mxu0 0
  %4586 = vmatpush2.bf16.msra.mxu0 0
  %4587 = vmatprep.subr.bf16.mxu0 0
  %4588 = vmatpush2.bf16.msra.mxu0 0
  %4589 = vmatprep.mubr.bf16.mxu0 0
  %4590 = vmatmul.mubr.bf16.gmra.mxu0 %v4484
  %v4591 = vpop.f32.mrf.mxu0
  %v4592 = vadd.f32 %v4507, %v4591
  %v4593 = vpop.f32.mrf.mxu0
  %v4594 = vpop.f32.mrf.mxu0
  %v4595 = vadd.f32 %v4507, %v4594
  %v4596 = vpop.f32.mrf.mxu0
  %4597 = vmatprep.mubr.bf16.mxu0 0
  %4598 = vmatmul.mubr.bf16.gmra.mxu0 %v4485
  %v4599 = vpop.f32.mrf.mxu0
  %v4600 = vadd.f32 %v4507, %v4599
  %v4601 = vpop.f32.mrf.mxu0
  %v4602 = vpop.f32.mrf.mxu0
  %v4603 = vadd.f32 %v4507, %v4602
  %v4604 = vpop.f32.mrf.mxu0
  %4605 = vdwg.mxu0
  %4606 = vst [vmem:[%s11] sm:$0xff] %v4592
  %4607 = vst [vmem:[%s11 + $0x8] sm:$0xff] %v4595
  %4608 = vst [vmem:[%s11 + $0x10] sm:$0xff] %v4600
  %4609 = vst [vmem:[%s11 + $0x18] sm:$0xff] %v4603
  // Predicated region
  $region46: #{ann_classifier_forward.1} parent=0 // pred_check
    _
  $region47: #{ann_classifier_forward.1} parent=0 // pred_check_branch
    %4611 = sbr.rel (0) target = $region49
  $region48: #{ann_classifier_forward.1} parent=0 // pred_region
    _
  $region49: #{ann_classifier_forward.1} parent=0 // pred_fallthru
    _
  // Predicated region
  $region50: #{ann_classifier_forward.1} parent=0 // pred_check
    _
  $region51: #{ann_classifier_forward.1} parent=0 // pred_check_branch
    %4613 = sbr.rel (0) target = $region53
  $region52: #{ann_classifier_forward.1} parent=0 // pred_region
    _
  $region53: #{ann_classifier_forward.1} parent=0 // pred_fallthru
    _

</llo_original>
